<compile_context>
chip_gen: v6e
topology: v6e:2x2x1
jax: 0.10.0
libtpu: 0.0.40
codegen_flags: <defaults>
</compile_context>

<pallas_src>
import numpy as np
import jax
import jax.numpy as jnp
from jax import lax
from jax.experimental import pallas as pl
from jax.experimental.pallas import tpu as pltpu

# --- hyperparameters from TransformerModel.__init__ ---------------------------
N_EXERCISES = 13523
NINP = 32                  # d_model
NHEAD = 4
HEAD_DIM = NINP // NHEAD   # 8
NHID = 64                  # dim_feedforward
NLAYERS = 2
LN_EPS = 1e-5
DEC_OUT = 2
DEC_PAD = 8                # decoder channel dim padded to a full sublane group

ATTN_TOKENS = 128          # target tokens per block-diagonal attention chunk
BLOCK_TOKENS = 1024        # target tokens per grid step
NEG_INF = np.float32(-1e30)

# rows of the packed 1-D parameter slab, per layer (each row zero-padded to 128 lanes)
#   +0 in_proj_b(96) +1 out_proj_b(32) +2 ln1_w(32) +3 ln1_b(32)
#   +4 lin1_b(64)    +5 lin2_b(32)     +6 ln2_w(32) +7 ln2_b(32)
VEC_ROWS_PER_LAYER = 8


def _layernorm(x, w, b):
    m = jnp.mean(x, axis=-1, keepdims=True)
    v = jnp.mean(jnp.square(x - m), axis=-1, keepdims=True)
    return (x - m) * lax.rsqrt(v + LN_EPS) * w + b


# --- Pallas kernel -------------------------------------------------------------
def _make_kernel(b_tile, seq_len, chunk, n_chunks):
    tokens = b_tile * seq_len
    scale = np.float32(1.0 / np.sqrt(HEAD_DIM))
    sqrt_ninp = np.float32(np.sqrt(NINP))

    def kernel(*refs):
        src_ref = refs[0]
        w_refs = refs[1:1 + 4 * NLAYERS]
        dec_w_ref = refs[1 + 4 * NLAYERS]
        dec_b_ref = refs[2 + 4 * NLAYERS]
        vec_ref = refs[3 + 4 * NLAYERS]
        bias_ref = refs[4 + 4 * NLAYERS]
        o_ref = refs[-1]

        vec = vec_ref[...]                       # (NLAYERS*8, 128) packed 1-D params
        attn_bias = bias_ref[...]                # (chunk, chunk), 0 / -1e30

        # flatten (B_TILE, S, E) -> (tokens, E); src * sqrt(ninp)
        x = src_ref[...].reshape(tokens, NINP) * sqrt_ninp

        for layer in range(NLAYERS):
            w_in = w_refs[4 * layer + 0][...]    # (E, 3E)
            w_out = w_refs[4 * layer + 1][...]   # (E, E)
            w_l1 = w_refs[4 * layer + 2][...]    # (E, NHID)
            w_l2 = w_refs[4 * layer + 3][...]    # (NHID, E)
            r = layer * VEC_ROWS_PER_LAYER
            in_b = vec[r + 0:r + 1, :3 * NINP]
            out_b = vec[r + 1:r + 2, :NINP]
            ln1_w = vec[r + 2:r + 3, :NINP]
            ln1_b = vec[r + 3:r + 4, :NINP]
            l1_b = vec[r + 4:r + 5, :NHID]
            l2_b = vec[r + 5:r + 6, :NINP]
            ln2_w = vec[r + 6:r + 7, :NINP]
            ln2_b = vec[r + 7:r + 8, :NINP]

            # ---- multi-head self-attention (post-LN TransformerEncoderLayer) ----
            qkv = jnp.dot(x, w_in, preferred_element_type=jnp.float32) + in_b  # (T, 3E)
            q = qkv[:, 0 * NINP:1 * NINP] * scale
            k = qkv[:, 1 * NINP:2 * NINP]
            v = qkv[:, 2 * NINP:3 * NINP]

            attn_parts = []
            for c in range(n_chunks):
                lo = c * chunk
                qc = q[lo:lo + chunk, :]
                kc = k[lo:lo + chunk, :]
                vc = v[lo:lo + chunk, :]
                head_outs = []
                for h in range(NHEAD):
                    sl = slice(h * HEAD_DIM, (h + 1) * HEAD_DIM)
                    # dense (chunk, chunk) scores; cross-sequence entries masked off
                    s = lax.dot_general(qc[:, sl], kc[:, sl],
                                        (((1,), (1,)), ((), ())),
                                        preferred_element_type=jnp.float32)
                    s = s + attn_bias
                    s = s - jnp.max(s, axis=-1, keepdims=True)
                    e = jnp.exp(s)
                    denom = jnp.sum(e, axis=-1, keepdims=True)
                    recip = pl.reciprocal(denom, approx=True)
                    recip = recip * (2.0 - denom * recip)   # one Newton step
                    a = e * recip
                    head_outs.append(
                        jnp.dot(a, vc[:, sl], preferred_element_type=jnp.float32))
                attn_parts.append(jnp.concatenate(head_outs, axis=-1))   # (chunk, E)
            attn = attn_parts[0] if n_chunks == 1 else jnp.concatenate(attn_parts, axis=0)
            attn = jnp.dot(attn, w_out, preferred_element_type=jnp.float32) + out_b

            x = _layernorm(x + attn, ln1_w, ln1_b)

            # ---- feed-forward (relu) ----
            ff = jnp.maximum(
                jnp.dot(x, w_l1, preferred_element_type=jnp.float32) + l1_b, 0.0)
            ff = jnp.dot(ff, w_l2, preferred_element_type=jnp.float32) + l2_b
            x = _layernorm(x + ff, ln2_w, ln2_b)

        # ---- decoder, emitted transposed: (DEC_PAD, tokens) -> lane-dense store ----
        out_t = lax.dot_general(dec_w_ref[...], x, (((1,), (1,)), ((), ())),
                                preferred_element_type=jnp.float32)      # (8, T)
        o_ref[...] = out_t + dec_b_ref[...]

    return kernel


# --- wrapper -------------------------------------------------------------------
def _cdiv(a, b):
    return -(-a // b)


def _plan(n_seq, seq_len):
    seq_per_chunk = max(1, min(ATTN_TOKENS // seq_len, n_seq))
    chunk = seq_per_chunk * seq_len
    n_chunks = max(1, min(BLOCK_TOKENS // chunk, _cdiv(n_seq, seq_per_chunk)))
    b_tile = seq_per_chunk * n_chunks
    n_blocks = _cdiv(n_seq, b_tile)
    return seq_per_chunk, chunk, n_chunks, b_tile, n_blocks


def transformer_forward(content_id, part_id, prior_time, emb, layers, dec):
    N, S = content_id.shape
    assert S <= NINP, "pos_embedding only has NINP rows -> requires S <= NINP"

    # Embedding lookups + sum (glue, plain JAX gathers)
    src = (emb["exercise"][content_id]
           + emb["pos"][jnp.arange(S)][None, :, :]
           + emb["part"][part_id]
           + emb["time"][prior_time]).astype(jnp.float32)              # (N, S, E)

    seq_per_chunk, chunk, n_chunks, b_tile, n_blocks = _plan(N, S)
    n_pad = n_blocks * b_tile
    tokens = b_tile * S
    if n_pad != N:
        src = jnp.pad(src, ((0, n_pad - N), (0, 0), (0, 0)))

    # ---- parameter packing / pre-transposition (host-side, one-off) ----
    flat_w, vec_rows = [], []

    def _row(v):
        v = np.asarray(v, np.float32).reshape(-1)
        return np.pad(v, (0, 128 - v.shape[0]))

    for L in layers:
        flat_w += [jnp.asarray(L["in_proj_w"], jnp.float32).T,    # (E, 3E)
                   jnp.asarray(L["out_proj_w"], jnp.float32).T,   # (E, E)
                   jnp.asarray(L["lin1_w"], jnp.float32).T,       # (E, NHID)
                   jnp.asarray(L["lin2_w"], jnp.float32).T]       # (NHID, E)
        vec_rows += [_row(L["in_proj_b"]), _row(L["out_proj_b"]),
                     _row(L["ln1_w"]), _row(L["ln1_b"]),
                     _row(L["lin1_b"]), _row(L["lin2_b"]),
                     _row(L["ln2_w"]), _row(L["ln2_b"])]
    vec_slab = jnp.asarray(np.stack(vec_rows, axis=0))                 # (16, 128)

    dec_w, dec_b = dec
    dec_w_pad = np.zeros((DEC_PAD, NINP), np.float32)
    dec_w_pad[:DEC_OUT] = np.asarray(dec_w, np.float32)
    dec_b_pad = np.zeros((DEC_PAD, 1), np.float32)
    dec_b_pad[:DEC_OUT, 0] = np.asarray(dec_b, np.float32)
    dec_w_pad = jnp.asarray(dec_w_pad)
    dec_b_pad = jnp.asarray(dec_b_pad)

    # block-diagonal (same-sequence) additive attention mask for one chunk
    ids = np.arange(chunk) // S
    attn_bias = jnp.asarray(
        np.where(ids[:, None] == ids[None, :], 0.0, NEG_INF).astype(np.float32))

    # ---- pallas_call ----
    in_specs = [pl.BlockSpec((b_tile, S, NINP), lambda b: (b, 0, 0))]
    for w in flat_w:
        in_specs.append(pl.BlockSpec(w.shape, lambda b: (0, 0)))
    in_specs += [pl.BlockSpec(dec_w_pad.shape, lambda b: (0, 0)),
                 pl.BlockSpec(dec_b_pad.shape, lambda b: (0, 0)),
                 pl.BlockSpec(vec_slab.shape, lambda b: (0, 0)),
                 pl.BlockSpec(attn_bias.shape, lambda b: (0, 0))]

    out_t = pl.pallas_call(
        _make_kernel(b_tile, S, chunk, n_chunks),
        out_shape=jax.ShapeDtypeStruct((n_blocks, DEC_PAD, tokens), jnp.float32),
        grid=(n_blocks,),
        in_specs=in_specs,
        out_specs=pl.BlockSpec((None, DEC_PAD, tokens), lambda b: (b, 0, 0)),
        compiler_params=pltpu.CompilerParams(dimension_semantics=("parallel",)),
    )(src, *flat_w, dec_w_pad, dec_b_pad, vec_slab, attn_bias)

    # (n_blocks, DEC_PAD, tokens) -> (N, S, 2)
    out = out_t.reshape(n_blocks, DEC_PAD, b_tile, S)
    out = jnp.transpose(out, (0, 2, 3, 1)).reshape(n_pad, S, DEC_PAD)
    return out[:N, :, :DEC_OUT]


# --- parameter initialization (deterministic, synthetic) ------------------------
def init_params(key):
    keys = iter(jax.random.split(key, 64))

    def u(shape, scale=0.1):
        return jax.random.uniform(next(keys), shape, jnp.float32, -scale, scale)

    layers = []
    for _ in range(NLAYERS):
        layers.append(dict(
            in_proj_w=u((3 * NINP, NINP)),
            in_proj_b=u((3 * NINP,)),
            out_proj_w=u((NINP, NINP)),
            out_proj_b=u((NINP,)),
            ln1_w=jnp.ones((NINP,), jnp.float32),
            ln1_b=jnp.zeros((NINP,), jnp.float32),
            lin1_w=u((NHID, NINP)),
            lin1_b=u((NHID,)),
            lin2_w=u((NINP, NHID)),
            lin2_b=u((NINP,)),
            ln2_w=jnp.ones((NINP,), jnp.float32),
            ln2_b=jnp.zeros((NINP,), jnp.float32),
        ))
    dec = (u((DEC_OUT, NINP)), jnp.zeros((DEC_OUT,), jnp.float32))
    emb = dict(
        exercise=u((N_EXERCISES, NINP)),
        pos=u((NINP, NINP)),
        part=u((7 + 1, NINP)),
        time=u((301, NINP)),
    )
    return emb, layers, dec


# --- pure-JAX reference (mirrors torch semantics) --------------------------------
def ref_forward(content_id, part_id, prior_time, emb, layers, dec):
    N, S = content_id.shape
    src = (emb["exercise"][content_id]
           + emb["pos"][jnp.arange(S)][None, :, :]
           + emb["part"][part_id]
           + emb["time"][prior_time]).astype(jnp.float32)
    x = src * np.float32(np.sqrt(NINP))
    for L in layers:
        qkv = x @ L["in_proj_w"].T + L["in_proj_b"]
        q, k, v = jnp.split(qkv, 3, axis=-1)

        def heads(t):
            return t.reshape(N, S, NHEAD, HEAD_DIM).transpose(0, 2, 1, 3)

        qh, kh, vh = heads(q), heads(k), heads(v)
        s = jnp.einsum("bhqd,bhkd->bhqk", qh, kh) / np.sqrt(HEAD_DIM)
        a = jax.nn.softmax(s, axis=-1)
        o = jnp.einsum("bhqk,bhkd->bhqd", a, vh).transpose(0, 2, 1, 3).reshape(N, S, NINP)
        o = o @ L["out_proj_w"].T + L["out_proj_b"]
        x = _layernorm(x + o, L["ln1_w"], L["ln1_b"])
        f = jnp.maximum(x @ L["lin1_w"].T + L["lin1_b"], 0.0)
        f = f @ L["lin2_w"].T + L["lin2_b"]
        x = _layernorm(x + f, L["ln2_w"], L["ln2_b"])
    dec_w, dec_b = dec
    return x @ dec_w.T + dec_b                                           # (N, S, 2)


if __name__ == "__main__":
    key = jax.random.PRNGKey(0)
    k_param, k_cid, k_pid, k_t = jax.random.split(key, 4)
    emb, layers, dec = init_params(k_param)

    # Case 1: the small canonical demo shape (batch=2, seq=8).
    N, S = 2, 8
    content_id = jax.random.randint(k_cid, (N, S), 0, N_EXERCISES, dtype=jnp.int32)
    part_id = jax.random.randint(k_pid, (N, S), 0, 8, dtype=jnp.int32)
    prior_time = jax.random.randint(k_t, (N, S), 0, 301, dtype=jnp.int32)

    out = jax.block_until_ready(
        transformer_forward(content_id, part_id, prior_time, emb, layers, dec))
    ref = ref_forward(content_id, part_id, prior_time, emb, layers, dec)
    assert out.shape == (N, S, 2), out.shape
    np.testing.assert_allclose(np.asarray(out), np.asarray(ref), rtol=1e-3, atol=1e-3)

    # Case 2: exercises batch padding + multi-chunk block-diagonal attention.
    N2, S2 = 19, 16
    k_cid2, k_pid2, k_t2 = jax.random.split(jax.random.PRNGKey(1), 3)
    content_id2 = jax.random.randint(k_cid2, (N2, S2), 0, N_EXERCISES, dtype=jnp.int32)
    part_id2 = jax.random.randint(k_pid2, (N2, S2), 0, 8, dtype=jnp.int32)
    prior_time2 = jax.random.randint(k_t2, (N2, S2), 0, 301, dtype=jnp.int32)

    out2 = jax.block_until_ready(
        transformer_forward(content_id2, part_id2, prior_time2, emb, layers, dec))
    ref2 = ref_forward(content_id2, part_id2, prior_time2, emb, layers, dec)
    assert out2.shape == (N2, S2, 2), out2.shape
    np.testing.assert_allclose(np.asarray(out2), np.asarray(ref2), rtol=1e-3, atol=1e-3)

    print("KERNEL_OK")
</pallas_src>

<mosaic_0001>
module attributes {stable_mosaic.version = 11 : i64} {
  func.func @kernel(%arg0: i32, %arg1: memref<2x8x32xf32, #tpu.memory_space<vmem>>, %arg2: memref<32x96xf32, #tpu.memory_space<vmem>>, %arg3: memref<32x32xf32, #tpu.memory_space<vmem>>, %arg4: memref<32x64xf32, #tpu.memory_space<vmem>>, %arg5: memref<64x32xf32, #tpu.memory_space<vmem>>, %arg6: memref<32x96xf32, #tpu.memory_space<vmem>>, %arg7: memref<32x32xf32, #tpu.memory_space<vmem>>, %arg8: memref<32x64xf32, #tpu.memory_space<vmem>>, %arg9: memref<64x32xf32, #tpu.memory_space<vmem>>, %arg10: memref<8x32xf32, #tpu.memory_space<vmem>>, %arg11: memref<8x1xf32, #tpu.memory_space<vmem>>, %arg12: memref<16x128xf32, #tpu.memory_space<vmem>>, %arg13: memref<16x16xf32, #tpu.memory_space<vmem>>, %arg14: memref<1x8x16xf32, #tpu.memory_space<vmem>>) attributes {dimension_semantics = [#tpu.dimension_semantics<parallel>], iteration_bounds = array<i64: 1>, scalar_prefetch = 0 : i64, scratch_operands = 0 : i64, tpu.core_type = #tpu.core_type<tc>, window_params = [{transform_indices = @transform_0, window_bounds = array<i64: 2, 8, 32>}, {pipeline_mode = #tpu.pipeline_mode<synchronous>, transform_indices = @transform_1, window_bounds = array<i64: 32, 96>}, {pipeline_mode = #tpu.pipeline_mode<synchronous>, transform_indices = @transform_2, window_bounds = array<i64: 32, 32>}, {pipeline_mode = #tpu.pipeline_mode<synchronous>, transform_indices = @transform_3, window_bounds = array<i64: 32, 64>}, {pipeline_mode = #tpu.pipeline_mode<synchronous>, transform_indices = @transform_4, window_bounds = array<i64: 64, 32>}, {pipeline_mode = #tpu.pipeline_mode<synchronous>, transform_indices = @transform_5, window_bounds = array<i64: 32, 96>}, {pipeline_mode = #tpu.pipeline_mode<synchronous>, transform_indices = @transform_6, window_bounds = array<i64: 32, 32>}, {pipeline_mode = #tpu.pipeline_mode<synchronous>, transform_indices = @transform_7, window_bounds = array<i64: 32, 64>}, {pipeline_mode = #tpu.pipeline_mode<synchronous>, transform_indices = @transform_8, window_bounds = array<i64: 64, 32>}, {pipeline_mode = #tpu.pipeline_mode<synchronous>, transform_indices = @transform_9, window_bounds = array<i64: 8, 32>}, {pipeline_mode = #tpu.pipeline_mode<synchronous>, transform_indices = @transform_10, window_bounds = array<i64: 8, 1>}, {pipeline_mode = #tpu.pipeline_mode<synchronous>, transform_indices = @transform_11, window_bounds = array<i64: 16, 128>}, {pipeline_mode = #tpu.pipeline_mode<synchronous>, transform_indices = @transform_12, window_bounds = array<i64: 16, 16>}, {transform_indices = @transform_13, window_bounds = array<i64: 1, 8, 16>}]} {
    %c0 = arith.constant 0 : index
    %c0_0 = arith.constant 0 : index
    %0 = vector.load %arg12[%c0, %c0_0] : memref<16x128xf32, #tpu.memory_space<vmem>>, vector<16x128xf32>
    %c0_1 = arith.constant 0 : index
    %c0_2 = arith.constant 0 : index
    %1 = vector.load %arg13[%c0_1, %c0_2] : memref<16x16xf32, #tpu.memory_space<vmem>>, vector<16x16xf32>
    %c0_3 = arith.constant 0 : index
    %c0_4 = arith.constant 0 : index
    %c0_5 = arith.constant 0 : index
    %2 = vector.load %arg1[%c0_3, %c0_4, %c0_5] : memref<2x8x32xf32, #tpu.memory_space<vmem>>, vector<2x8x32xf32>
    %3 = vector.shape_cast %2 : vector<2x8x32xf32> to vector<16x32xf32>
    %cst = arith.constant 5.65685415 : f32
    %4 = vector.broadcast %cst : f32 to vector<16x32xf32>
    %5 = arith.mulf %3, %4 : vector<16x32xf32>
    %c0_6 = arith.constant 0 : index
    %c0_7 = arith.constant 0 : index
    %6 = vector.load %arg2[%c0_6, %c0_7] : memref<32x96xf32, #tpu.memory_space<vmem>>, vector<32x96xf32>
    %c0_8 = arith.constant 0 : index
    %c0_9 = arith.constant 0 : index
    %7 = vector.load %arg3[%c0_8, %c0_9] : memref<32x32xf32, #tpu.memory_space<vmem>>, vector<32x32xf32>
    %c0_10 = arith.constant 0 : index
    %c0_11 = arith.constant 0 : index
    %8 = vector.load %arg4[%c0_10, %c0_11] : memref<32x64xf32, #tpu.memory_space<vmem>>, vector<32x64xf32>
    %c0_12 = arith.constant 0 : index
    %c0_13 = arith.constant 0 : index
    %9 = vector.load %arg5[%c0_12, %c0_13] : memref<64x32xf32, #tpu.memory_space<vmem>>, vector<64x32xf32>
    %10 = vector.extract_strided_slice %0 {offsets = [0, 0], sizes = [1, 96], strides = [1, 1]} : vector<16x128xf32> to vector<1x96xf32>
    %11 = vector.extract_strided_slice %0 {offsets = [1, 0], sizes = [1, 32], strides = [1, 1]} : vector<16x128xf32> to vector<1x32xf32>
    %12 = vector.extract_strided_slice %0 {offsets = [2, 0], sizes = [1, 32], strides = [1, 1]} : vector<16x128xf32> to vector<1x32xf32>
    %13 = vector.extract_strided_slice %0 {offsets = [3, 0], sizes = [1, 32], strides = [1, 1]} : vector<16x128xf32> to vector<1x32xf32>
    %14 = vector.extract_strided_slice %0 {offsets = [4, 0], sizes = [1, 64], strides = [1, 1]} : vector<16x128xf32> to vector<1x64xf32>
    %15 = vector.extract_strided_slice %0 {offsets = [5, 0], sizes = [1, 32], strides = [1, 1]} : vector<16x128xf32> to vector<1x32xf32>
    %16 = vector.extract_strided_slice %0 {offsets = [6, 0], sizes = [1, 32], strides = [1, 1]} : vector<16x128xf32> to vector<1x32xf32>
    %17 = vector.extract_strided_slice %0 {offsets = [7, 0], sizes = [1, 32], strides = [1, 1]} : vector<16x128xf32> to vector<1x32xf32>
    %cst_14 = arith.constant dense<0.000000e+00> : vector<16x96xf32>
    %18 = tpu.matmul %5, %6, %cst_14 {dimension_numbers = #tpu.dot_dimension_numbers<[1], [0], [0], [1], [0, 0, 1, 1], [], []>} : vector<16x32xf32>, vector<32x96xf32>, vector<16x96xf32> -> vector<16x96xf32>
    %19 = vector.broadcast %10 : vector<1x96xf32> to vector<16x96xf32>
    %20 = arith.addf %18, %19 : vector<16x96xf32>
    %21 = vector.extract_strided_slice %20 {offsets = [0, 0], sizes = [16, 32], strides = [1, 1]} : vector<16x96xf32> to vector<16x32xf32>
    %cst_15 = arith.constant 0.353553385 : f32
    %22 = vector.broadcast %cst_15 : f32 to vector<16x32xf32>
    %23 = arith.mulf %21, %22 : vector<16x32xf32>
    %24 = vector.extract_strided_slice %20 {offsets = [0, 32], sizes = [16, 32], strides = [1, 1]} : vector<16x96xf32> to vector<16x32xf32>
    %25 = vector.extract_strided_slice %20 {offsets = [0, 64], sizes = [16, 32], strides = [1, 1]} : vector<16x96xf32> to vector<16x32xf32>
    %26 = vector.extract_strided_slice %23 {offsets = [0, 0], sizes = [16, 8], strides = [1, 1]} : vector<16x32xf32> to vector<16x8xf32>
    %27 = vector.extract_strided_slice %24 {offsets = [0, 0], sizes = [16, 8], strides = [1, 1]} : vector<16x32xf32> to vector<16x8xf32>
    %cst_16 = arith.constant dense<0.000000e+00> : vector<16x16xf32>
    %28 = tpu.matmul %26, %27, %cst_16 {dimension_numbers = #tpu.dot_dimension_numbers<[1], [1], [0], [0], [0, 0, 1, 0], [], []>} : vector<16x8xf32>, vector<16x8xf32>, vector<16x16xf32> -> vector<16x16xf32>
    %29 = arith.addf %28, %1 : vector<16x16xf32>
    %cst_17 = arith.constant dense<0xFF800000> : vector<16xf32>
    %30 = vector.multi_reduction <maximumf>, %29, %cst_17 [1] : vector<16x16xf32> to vector<16xf32>
    %31 = vector.shape_cast %30 : vector<16xf32> to vector<16x1xf32>
    %32 = vector.broadcast %31 : vector<16x1xf32> to vector<16x16xf32>
    %33 = arith.subf %29, %32 : vector<16x16xf32>
    %34 = math.exp %33 : vector<16x16xf32>
    %cst_18 = arith.constant dense<0.000000e+00> : vector<16xf32>
    %35 = vector.multi_reduction <add>, %34, %cst_18 [1] : vector<16x16xf32> to vector<16xf32>
    %36 = vector.shape_cast %35 : vector<16xf32> to vector<16x1xf32>
    %37 = tpu.reciprocal %36 {approx = true} : vector<16x1xf32> -> vector<16x1xf32>
    %38 = arith.mulf %36, %37 : vector<16x1xf32>
    %cst_19 = arith.constant 2.000000e+00 : f32
    %39 = vector.broadcast %cst_19 : f32 to vector<16x1xf32>
    %40 = arith.subf %39, %38 : vector<16x1xf32>
    %41 = arith.mulf %37, %40 : vector<16x1xf32>
    %42 = vector.broadcast %41 : vector<16x1xf32> to vector<16x16xf32>
    %43 = arith.mulf %34, %42 : vector<16x16xf32>
    %44 = vector.extract_strided_slice %25 {offsets = [0, 0], sizes = [16, 8], strides = [1, 1]} : vector<16x32xf32> to vector<16x8xf32>
    %cst_20 = arith.constant dense<0.000000e+00> : vector<16x8xf32>
    %45 = tpu.matmul %43, %44, %cst_20 {dimension_numbers = #tpu.dot_dimension_numbers<[1], [0], [0], [1], [0, 0, 1, 1], [], []>} : vector<16x16xf32>, vector<16x8xf32>, vector<16x8xf32> -> vector<16x8xf32>
    %46 = vector.extract_strided_slice %23 {offsets = [0, 8], sizes = [16, 8], strides = [1, 1]} : vector<16x32xf32> to vector<16x8xf32>
    %47 = vector.extract_strided_slice %24 {offsets = [0, 8], sizes = [16, 8], strides = [1, 1]} : vector<16x32xf32> to vector<16x8xf32>
    %cst_21 = arith.constant dense<0.000000e+00> : vector<16x16xf32>
    %48 = tpu.matmul %46, %47, %cst_21 {dimension_numbers = #tpu.dot_dimension_numbers<[1], [1], [0], [0], [0, 0, 1, 0], [], []>} : vector<16x8xf32>, vector<16x8xf32>, vector<16x16xf32> -> vector<16x16xf32>
    %49 = arith.addf %48, %1 : vector<16x16xf32>
    %cst_22 = arith.constant dense<0xFF800000> : vector<16xf32>
    %50 = vector.multi_reduction <maximumf>, %49, %cst_22 [1] : vector<16x16xf32> to vector<16xf32>
    %51 = vector.shape_cast %50 : vector<16xf32> to vector<16x1xf32>
    %52 = vector.broadcast %51 : vector<16x1xf32> to vector<16x16xf32>
    %53 = arith.subf %49, %52 : vector<16x16xf32>
    %54 = math.exp %53 : vector<16x16xf32>
    %cst_23 = arith.constant dense<0.000000e+00> : vector<16xf32>
    %55 = vector.multi_reduction <add>, %54, %cst_23 [1] : vector<16x16xf32> to vector<16xf32>
    %56 = vector.shape_cast %55 : vector<16xf32> to vector<16x1xf32>
    %57 = tpu.reciprocal %56 {approx = true} : vector<16x1xf32> -> vector<16x1xf32>
    %58 = arith.mulf %56, %57 : vector<16x1xf32>
    %cst_24 = arith.constant 2.000000e+00 : f32
    %59 = vector.broadcast %cst_24 : f32 to vector<16x1xf32>
    %60 = arith.subf %59, %58 : vector<16x1xf32>
    %61 = arith.mulf %57, %60 : vector<16x1xf32>
    %62 = vector.broadcast %61 : vector<16x1xf32> to vector<16x16xf32>
    %63 = arith.mulf %54, %62 : vector<16x16xf32>
    %64 = vector.extract_strided_slice %25 {offsets = [0, 8], sizes = [16, 8], strides = [1, 1]} : vector<16x32xf32> to vector<16x8xf32>
    %cst_25 = arith.constant dense<0.000000e+00> : vector<16x8xf32>
    %65 = tpu.matmul %63, %64, %cst_25 {dimension_numbers = #tpu.dot_dimension_numbers<[1], [0], [0], [1], [0, 0, 1, 1], [], []>} : vector<16x16xf32>, vector<16x8xf32>, vector<16x8xf32> -> vector<16x8xf32>
    %66 = vector.extract_strided_slice %23 {offsets = [0, 16], sizes = [16, 8], strides = [1, 1]} : vector<16x32xf32> to vector<16x8xf32>
    %67 = vector.extract_strided_slice %24 {offsets = [0, 16], sizes = [16, 8], strides = [1, 1]} : vector<16x32xf32> to vector<16x8xf32>
    %cst_26 = arith.constant dense<0.000000e+00> : vector<16x16xf32>
    %68 = tpu.matmul %66, %67, %cst_26 {dimension_numbers = #tpu.dot_dimension_numbers<[1], [1], [0], [0], [0, 0, 1, 0], [], []>} : vector<16x8xf32>, vector<16x8xf32>, vector<16x16xf32> -> vector<16x16xf32>
    %69 = arith.addf %68, %1 : vector<16x16xf32>
    %cst_27 = arith.constant dense<0xFF800000> : vector<16xf32>
    %70 = vector.multi_reduction <maximumf>, %69, %cst_27 [1] : vector<16x16xf32> to vector<16xf32>
    %71 = vector.shape_cast %70 : vector<16xf32> to vector<16x1xf32>
    %72 = vector.broadcast %71 : vector<16x1xf32> to vector<16x16xf32>
    %73 = arith.subf %69, %72 : vector<16x16xf32>
    %74 = math.exp %73 : vector<16x16xf32>
    %cst_28 = arith.constant dense<0.000000e+00> : vector<16xf32>
    %75 = vector.multi_reduction <add>, %74, %cst_28 [1] : vector<16x16xf32> to vector<16xf32>
    %76 = vector.shape_cast %75 : vector<16xf32> to vector<16x1xf32>
    %77 = tpu.reciprocal %76 {approx = true} : vector<16x1xf32> -> vector<16x1xf32>
    %78 = arith.mulf %76, %77 : vector<16x1xf32>
    %cst_29 = arith.constant 2.000000e+00 : f32
    %79 = vector.broadcast %cst_29 : f32 to vector<16x1xf32>
    %80 = arith.subf %79, %78 : vector<16x1xf32>
    %81 = arith.mulf %77, %80 : vector<16x1xf32>
    %82 = vector.broadcast %81 : vector<16x1xf32> to vector<16x16xf32>
    %83 = arith.mulf %74, %82 : vector<16x16xf32>
    %84 = vector.extract_strided_slice %25 {offsets = [0, 16], sizes = [16, 8], strides = [1, 1]} : vector<16x32xf32> to vector<16x8xf32>
    %cst_30 = arith.constant dense<0.000000e+00> : vector<16x8xf32>
    %85 = tpu.matmul %83, %84, %cst_30 {dimension_numbers = #tpu.dot_dimension_numbers<[1], [0], [0], [1], [0, 0, 1, 1], [], []>} : vector<16x16xf32>, vector<16x8xf32>, vector<16x8xf32> -> vector<16x8xf32>
    %86 = vector.extract_strided_slice %23 {offsets = [0, 24], sizes = [16, 8], strides = [1, 1]} : vector<16x32xf32> to vector<16x8xf32>
    %87 = vector.extract_strided_slice %24 {offsets = [0, 24], sizes = [16, 8], strides = [1, 1]} : vector<16x32xf32> to vector<16x8xf32>
    %cst_31 = arith.constant dense<0.000000e+00> : vector<16x16xf32>
    %88 = tpu.matmul %86, %87, %cst_31 {dimension_numbers = #tpu.dot_dimension_numbers<[1], [1], [0], [0], [0, 0, 1, 0], [], []>} : vector<16x8xf32>, vector<16x8xf32>, vector<16x16xf32> -> vector<16x16xf32>
    %89 = arith.addf %88, %1 : vector<16x16xf32>
    %cst_32 = arith.constant dense<0xFF800000> : vector<16xf32>
    %90 = vector.multi_reduction <maximumf>, %89, %cst_32 [1] : vector<16x16xf32> to vector<16xf32>
    %91 = vector.shape_cast %90 : vector<16xf32> to vector<16x1xf32>
    %92 = vector.broadcast %91 : vector<16x1xf32> to vector<16x16xf32>
    %93 = arith.subf %89, %92 : vector<16x16xf32>
    %94 = math.exp %93 : vector<16x16xf32>
    %cst_33 = arith.constant dense<0.000000e+00> : vector<16xf32>
    %95 = vector.multi_reduction <add>, %94, %cst_33 [1] : vector<16x16xf32> to vector<16xf32>
    %96 = vector.shape_cast %95 : vector<16xf32> to vector<16x1xf32>
    %97 = tpu.reciprocal %96 {approx = true} : vector<16x1xf32> -> vector<16x1xf32>
    %98 = arith.mulf %96, %97 : vector<16x1xf32>
    %cst_34 = arith.constant 2.000000e+00 : f32
    %99 = vector.broadcast %cst_34 : f32 to vector<16x1xf32>
    %100 = arith.subf %99, %98 : vector<16x1xf32>
    %101 = arith.mulf %97, %100 : vector<16x1xf32>
    %102 = vector.broadcast %101 : vector<16x1xf32> to vector<16x16xf32>
    %103 = arith.mulf %94, %102 : vector<16x16xf32>
    %104 = vector.extract_strided_slice %25 {offsets = [0, 24], sizes = [16, 8], strides = [1, 1]} : vector<16x32xf32> to vector<16x8xf32>
    %cst_35 = arith.constant dense<0.000000e+00> : vector<16x8xf32>
    %105 = tpu.matmul %103, %104, %cst_35 {dimension_numbers = #tpu.dot_dimension_numbers<[1], [0], [0], [1], [0, 0, 1, 1], [], []>} : vector<16x16xf32>, vector<16x8xf32>, vector<16x8xf32> -> vector<16x8xf32>
    %106 = tpu.concatenate %45, %65, %85, %105 in 1 : vector<16x8xf32>, vector<16x8xf32>, vector<16x8xf32>, vector<16x8xf32> -> vector<16x32xf32>
    %cst_36 = arith.constant dense<0.000000e+00> : vector<16x32xf32>
    %107 = tpu.matmul %106, %7, %cst_36 {dimension_numbers = #tpu.dot_dimension_numbers<[1], [0], [0], [1], [0, 0, 1, 1], [], []>} : vector<16x32xf32>, vector<32x32xf32>, vector<16x32xf32> -> vector<16x32xf32>
    %108 = vector.broadcast %11 : vector<1x32xf32> to vector<16x32xf32>
    %109 = arith.addf %107, %108 : vector<16x32xf32>
    %110 = arith.addf %5, %109 : vector<16x32xf32>
    %cst_37 = arith.constant dense<0.000000e+00> : vector<16xf32>
    %111 = vector.multi_reduction <add>, %110, %cst_37 [1] : vector<16x32xf32> to vector<16xf32>
    %112 = vector.shape_cast %111 : vector<16xf32> to vector<16x1xf32>
    %cst_38 = arith.constant 3.200000e+01 : f32
    %113 = vector.broadcast %cst_38 : f32 to vector<16x1xf32>
    %114 = arith.divf %112, %113 : vector<16x1xf32>
    %115 = vector.broadcast %114 : vector<16x1xf32> to vector<16x32xf32>
    %116 = arith.subf %110, %115 : vector<16x32xf32>
    %117 = arith.mulf %116, %116 : vector<16x32xf32>
    %cst_39 = arith.constant dense<0.000000e+00> : vector<16xf32>
    %118 = vector.multi_reduction <add>, %117, %cst_39 [1] : vector<16x32xf32> to vector<16xf32>
    %119 = vector.shape_cast %118 : vector<16xf32> to vector<16x1xf32>
    %cst_40 = arith.constant 3.200000e+01 : f32
    %120 = vector.broadcast %cst_40 : f32 to vector<16x1xf32>
    %121 = arith.divf %119, %120 : vector<16x1xf32>
    %122 = vector.broadcast %114 : vector<16x1xf32> to vector<16x32xf32>
    %123 = arith.subf %110, %122 : vector<16x32xf32>
    %cst_41 = arith.constant 9.99999974E-6 : f32
    %124 = vector.broadcast %cst_41 : f32 to vector<16x1xf32>
    %125 = arith.addf %121, %124 : vector<16x1xf32>
    %126 = math.rsqrt %125 : vector<16x1xf32>
    %127 = vector.broadcast %126 : vector<16x1xf32> to vector<16x32xf32>
    %128 = arith.mulf %123, %127 : vector<16x32xf32>
    %129 = vector.broadcast %12 : vector<1x32xf32> to vector<16x32xf32>
    %130 = arith.mulf %128, %129 : vector<16x32xf32>
    %131 = vector.broadcast %13 : vector<1x32xf32> to vector<16x32xf32>
    %132 = arith.addf %130, %131 : vector<16x32xf32>
    %cst_42 = arith.constant dense<0.000000e+00> : vector<16x64xf32>
    %133 = tpu.matmul %132, %8, %cst_42 {dimension_numbers = #tpu.dot_dimension_numbers<[1], [0], [0], [1], [0, 0, 1, 1], [], []>} : vector<16x32xf32>, vector<32x64xf32>, vector<16x64xf32> -> vector<16x64xf32>
    %134 = vector.broadcast %14 : vector<1x64xf32> to vector<16x64xf32>
    %135 = arith.addf %133, %134 : vector<16x64xf32>
    %cst_43 = arith.constant 0.000000e+00 : f32
    %136 = vector.broadcast %cst_43 : f32 to vector<16x64xf32>
    %137 = arith.maximumf %135, %136 : vector<16x64xf32>
    %cst_44 = arith.constant dense<0.000000e+00> : vector<16x32xf32>
    %138 = tpu.matmul %137, %9, %cst_44 {dimension_numbers = #tpu.dot_dimension_numbers<[1], [0], [0], [1], [0, 0, 1, 1], [], []>} : vector<16x64xf32>, vector<64x32xf32>, vector<16x32xf32> -> vector<16x32xf32>
    %139 = vector.broadcast %15 : vector<1x32xf32> to vector<16x32xf32>
    %140 = arith.addf %138, %139 : vector<16x32xf32>
    %141 = arith.addf %132, %140 : vector<16x32xf32>
    %cst_45 = arith.constant dense<0.000000e+00> : vector<16xf32>
    %142 = vector.multi_reduction <add>, %141, %cst_45 [1] : vector<16x32xf32> to vector<16xf32>
    %143 = vector.shape_cast %142 : vector<16xf32> to vector<16x1xf32>
    %cst_46 = arith.constant 3.200000e+01 : f32
    %144 = vector.broadcast %cst_46 : f32 to vector<16x1xf32>
    %145 = arith.divf %143, %144 : vector<16x1xf32>
    %146 = vector.broadcast %145 : vector<16x1xf32> to vector<16x32xf32>
    %147 = arith.subf %141, %146 : vector<16x32xf32>
    %148 = arith.mulf %147, %147 : vector<16x32xf32>
    %cst_47 = arith.constant dense<0.000000e+00> : vector<16xf32>
    %149 = vector.multi_reduction <add>, %148, %cst_47 [1] : vector<16x32xf32> to vector<16xf32>
    %150 = vector.shape_cast %149 : vector<16xf32> to vector<16x1xf32>
    %cst_48 = arith.constant 3.200000e+01 : f32
    %151 = vector.broadcast %cst_48 : f32 to vector<16x1xf32>
    %152 = arith.divf %150, %151 : vector<16x1xf32>
    %153 = vector.broadcast %145 : vector<16x1xf32> to vector<16x32xf32>
    %154 = arith.subf %141, %153 : vector<16x32xf32>
    %cst_49 = arith.constant 9.99999974E-6 : f32
    %155 = vector.broadcast %cst_49 : f32 to vector<16x1xf32>
    %156 = arith.addf %152, %155 : vector<16x1xf32>
    %157 = math.rsqrt %156 : vector<16x1xf32>
    %158 = vector.broadcast %157 : vector<16x1xf32> to vector<16x32xf32>
    %159 = arith.mulf %154, %158 : vector<16x32xf32>
    %160 = vector.broadcast %16 : vector<1x32xf32> to vector<16x32xf32>
    %161 = arith.mulf %159, %160 : vector<16x32xf32>
    %162 = vector.broadcast %17 : vector<1x32xf32> to vector<16x32xf32>
    %163 = arith.addf %161, %162 : vector<16x32xf32>
    %c0_50 = arith.constant 0 : index
    %c0_51 = arith.constant 0 : index
    %164 = vector.load %arg6[%c0_50, %c0_51] : memref<32x96xf32, #tpu.memory_space<vmem>>, vector<32x96xf32>
    %c0_52 = arith.constant 0 : index
    %c0_53 = arith.constant 0 : index
    %165 = vector.load %arg7[%c0_52, %c0_53] : memref<32x32xf32, #tpu.memory_space<vmem>>, vector<32x32xf32>
    %c0_54 = arith.constant 0 : index
    %c0_55 = arith.constant 0 : index
    %166 = vector.load %arg8[%c0_54, %c0_55] : memref<32x64xf32, #tpu.memory_space<vmem>>, vector<32x64xf32>
    %c0_56 = arith.constant 0 : index
    %c0_57 = arith.constant 0 : index
    %167 = vector.load %arg9[%c0_56, %c0_57] : memref<64x32xf32, #tpu.memory_space<vmem>>, vector<64x32xf32>
    %168 = vector.extract_strided_slice %0 {offsets = [8, 0], sizes = [1, 96], strides = [1, 1]} : vector<16x128xf32> to vector<1x96xf32>
    %169 = vector.extract_strided_slice %0 {offsets = [9, 0], sizes = [1, 32], strides = [1, 1]} : vector<16x128xf32> to vector<1x32xf32>
    %170 = vector.extract_strided_slice %0 {offsets = [10, 0], sizes = [1, 32], strides = [1, 1]} : vector<16x128xf32> to vector<1x32xf32>
    %171 = vector.extract_strided_slice %0 {offsets = [11, 0], sizes = [1, 32], strides = [1, 1]} : vector<16x128xf32> to vector<1x32xf32>
    %172 = vector.extract_strided_slice %0 {offsets = [12, 0], sizes = [1, 64], strides = [1, 1]} : vector<16x128xf32> to vector<1x64xf32>
    %173 = vector.extract_strided_slice %0 {offsets = [13, 0], sizes = [1, 32], strides = [1, 1]} : vector<16x128xf32> to vector<1x32xf32>
    %174 = vector.extract_strided_slice %0 {offsets = [14, 0], sizes = [1, 32], strides = [1, 1]} : vector<16x128xf32> to vector<1x32xf32>
    %175 = vector.extract_strided_slice %0 {offsets = [15, 0], sizes = [1, 32], strides = [1, 1]} : vector<16x128xf32> to vector<1x32xf32>
    %cst_58 = arith.constant dense<0.000000e+00> : vector<16x96xf32>
    %176 = tpu.matmul %163, %164, %cst_58 {dimension_numbers = #tpu.dot_dimension_numbers<[1], [0], [0], [1], [0, 0, 1, 1], [], []>} : vector<16x32xf32>, vector<32x96xf32>, vector<16x96xf32> -> vector<16x96xf32>
    %177 = vector.broadcast %168 : vector<1x96xf32> to vector<16x96xf32>
    %178 = arith.addf %176, %177 : vector<16x96xf32>
    %179 = vector.extract_strided_slice %178 {offsets = [0, 0], sizes = [16, 32], strides = [1, 1]} : vector<16x96xf32> to vector<16x32xf32>
    %cst_59 = arith.constant 0.353553385 : f32
    %180 = vector.broadcast %cst_59 : f32 to vector<16x32xf32>
    %181 = arith.mulf %179, %180 : vector<16x32xf32>
    %182 = vector.extract_strided_slice %178 {offsets = [0, 32], sizes = [16, 32], strides = [1, 1]} : vector<16x96xf32> to vector<16x32xf32>
    %183 = vector.extract_strided_slice %178 {offsets = [0, 64], sizes = [16, 32], strides = [1, 1]} : vector<16x96xf32> to vector<16x32xf32>
    %184 = vector.extract_strided_slice %181 {offsets = [0, 0], sizes = [16, 8], strides = [1, 1]} : vector<16x32xf32> to vector<16x8xf32>
    %185 = vector.extract_strided_slice %182 {offsets = [0, 0], sizes = [16, 8], strides = [1, 1]} : vector<16x32xf32> to vector<16x8xf32>
    %cst_60 = arith.constant dense<0.000000e+00> : vector<16x16xf32>
    %186 = tpu.matmul %184, %185, %cst_60 {dimension_numbers = #tpu.dot_dimension_numbers<[1], [1], [0], [0], [0, 0, 1, 0], [], []>} : vector<16x8xf32>, vector<16x8xf32>, vector<16x16xf32> -> vector<16x16xf32>
    %187 = arith.addf %186, %1 : vector<16x16xf32>
    %cst_61 = arith.constant dense<0xFF800000> : vector<16xf32>
    %188 = vector.multi_reduction <maximumf>, %187, %cst_61 [1] : vector<16x16xf32> to vector<16xf32>
    %189 = vector.shape_cast %188 : vector<16xf32> to vector<16x1xf32>
    %190 = vector.broadcast %189 : vector<16x1xf32> to vector<16x16xf32>
    %191 = arith.subf %187, %190 : vector<16x16xf32>
    %192 = math.exp %191 : vector<16x16xf32>
    %cst_62 = arith.constant dense<0.000000e+00> : vector<16xf32>
    %193 = vector.multi_reduction <add>, %192, %cst_62 [1] : vector<16x16xf32> to vector<16xf32>
    %194 = vector.shape_cast %193 : vector<16xf32> to vector<16x1xf32>
    %195 = tpu.reciprocal %194 {approx = true} : vector<16x1xf32> -> vector<16x1xf32>
    %196 = arith.mulf %194, %195 : vector<16x1xf32>
    %cst_63 = arith.constant 2.000000e+00 : f32
    %197 = vector.broadcast %cst_63 : f32 to vector<16x1xf32>
    %198 = arith.subf %197, %196 : vector<16x1xf32>
    %199 = arith.mulf %195, %198 : vector<16x1xf32>
    %200 = vector.broadcast %199 : vector<16x1xf32> to vector<16x16xf32>
    %201 = arith.mulf %192, %200 : vector<16x16xf32>
    %202 = vector.extract_strided_slice %183 {offsets = [0, 0], sizes = [16, 8], strides = [1, 1]} : vector<16x32xf32> to vector<16x8xf32>
    %cst_64 = arith.constant dense<0.000000e+00> : vector<16x8xf32>
    %203 = tpu.matmul %201, %202, %cst_64 {dimension_numbers = #tpu.dot_dimension_numbers<[1], [0], [0], [1], [0, 0, 1, 1], [], []>} : vector<16x16xf32>, vector<16x8xf32>, vector<16x8xf32> -> vector<16x8xf32>
    %204 = vector.extract_strided_slice %181 {offsets = [0, 8], sizes = [16, 8], strides = [1, 1]} : vector<16x32xf32> to vector<16x8xf32>
    %205 = vector.extract_strided_slice %182 {offsets = [0, 8], sizes = [16, 8], strides = [1, 1]} : vector<16x32xf32> to vector<16x8xf32>
    %cst_65 = arith.constant dense<0.000000e+00> : vector<16x16xf32>
    %206 = tpu.matmul %204, %205, %cst_65 {dimension_numbers = #tpu.dot_dimension_numbers<[1], [1], [0], [0], [0, 0, 1, 0], [], []>} : vector<16x8xf32>, vector<16x8xf32>, vector<16x16xf32> -> vector<16x16xf32>
    %207 = arith.addf %206, %1 : vector<16x16xf32>
    %cst_66 = arith.constant dense<0xFF800000> : vector<16xf32>
    %208 = vector.multi_reduction <maximumf>, %207, %cst_66 [1] : vector<16x16xf32> to vector<16xf32>
    %209 = vector.shape_cast %208 : vector<16xf32> to vector<16x1xf32>
    %210 = vector.broadcast %209 : vector<16x1xf32> to vector<16x16xf32>
    %211 = arith.subf %207, %210 : vector<16x16xf32>
    %212 = math.exp %211 : vector<16x16xf32>
    %cst_67 = arith.constant dense<0.000000e+00> : vector<16xf32>
    %213 = vector.multi_reduction <add>, %212, %cst_67 [1] : vector<16x16xf32> to vector<16xf32>
    %214 = vector.shape_cast %213 : vector<16xf32> to vector<16x1xf32>
    %215 = tpu.reciprocal %214 {approx = true} : vector<16x1xf32> -> vector<16x1xf32>
    %216 = arith.mulf %214, %215 : vector<16x1xf32>
    %cst_68 = arith.constant 2.000000e+00 : f32
    %217 = vector.broadcast %cst_68 : f32 to vector<16x1xf32>
    %218 = arith.subf %217, %216 : vector<16x1xf32>
    %219 = arith.mulf %215, %218 : vector<16x1xf32>
    %220 = vector.broadcast %219 : vector<16x1xf32> to vector<16x16xf32>
    %221 = arith.mulf %212, %220 : vector<16x16xf32>
    %222 = vector.extract_strided_slice %183 {offsets = [0, 8], sizes = [16, 8], strides = [1, 1]} : vector<16x32xf32> to vector<16x8xf32>
    %cst_69 = arith.constant dense<0.000000e+00> : vector<16x8xf32>
    %223 = tpu.matmul %221, %222, %cst_69 {dimension_numbers = #tpu.dot_dimension_numbers<[1], [0], [0], [1], [0, 0, 1, 1], [], []>} : vector<16x16xf32>, vector<16x8xf32>, vector<16x8xf32> -> vector<16x8xf32>
    %224 = vector.extract_strided_slice %181 {offsets = [0, 16], sizes = [16, 8], strides = [1, 1]} : vector<16x32xf32> to vector<16x8xf32>
    %225 = vector.extract_strided_slice %182 {offsets = [0, 16], sizes = [16, 8], strides = [1, 1]} : vector<16x32xf32> to vector<16x8xf32>
    %cst_70 = arith.constant dense<0.000000e+00> : vector<16x16xf32>
    %226 = tpu.matmul %224, %225, %cst_70 {dimension_numbers = #tpu.dot_dimension_numbers<[1], [1], [0], [0], [0, 0, 1, 0], [], []>} : vector<16x8xf32>, vector<16x8xf32>, vector<16x16xf32> -> vector<16x16xf32>
    %227 = arith.addf %226, %1 : vector<16x16xf32>
    %cst_71 = arith.constant dense<0xFF800000> : vector<16xf32>
    %228 = vector.multi_reduction <maximumf>, %227, %cst_71 [1] : vector<16x16xf32> to vector<16xf32>
    %229 = vector.shape_cast %228 : vector<16xf32> to vector<16x1xf32>
    %230 = vector.broadcast %229 : vector<16x1xf32> to vector<16x16xf32>
    %231 = arith.subf %227, %230 : vector<16x16xf32>
    %232 = math.exp %231 : vector<16x16xf32>
    %cst_72 = arith.constant dense<0.000000e+00> : vector<16xf32>
    %233 = vector.multi_reduction <add>, %232, %cst_72 [1] : vector<16x16xf32> to vector<16xf32>
    %234 = vector.shape_cast %233 : vector<16xf32> to vector<16x1xf32>
    %235 = tpu.reciprocal %234 {approx = true} : vector<16x1xf32> -> vector<16x1xf32>
    %236 = arith.mulf %234, %235 : vector<16x1xf32>
    %cst_73 = arith.constant 2.000000e+00 : f32
    %237 = vector.broadcast %cst_73 : f32 to vector<16x1xf32>
    %238 = arith.subf %237, %236 : vector<16x1xf32>
    %239 = arith.mulf %235, %238 : vector<16x1xf32>
    %240 = vector.broadcast %239 : vector<16x1xf32> to vector<16x16xf32>
    %241 = arith.mulf %232, %240 : vector<16x16xf32>
    %242 = vector.extract_strided_slice %183 {offsets = [0, 16], sizes = [16, 8], strides = [1, 1]} : vector<16x32xf32> to vector<16x8xf32>
    %cst_74 = arith.constant dense<0.000000e+00> : vector<16x8xf32>
    %243 = tpu.matmul %241, %242, %cst_74 {dimension_numbers = #tpu.dot_dimension_numbers<[1], [0], [0], [1], [0, 0, 1, 1], [], []>} : vector<16x16xf32>, vector<16x8xf32>, vector<16x8xf32> -> vector<16x8xf32>
    %244 = vector.extract_strided_slice %181 {offsets = [0, 24], sizes = [16, 8], strides = [1, 1]} : vector<16x32xf32> to vector<16x8xf32>
    %245 = vector.extract_strided_slice %182 {offsets = [0, 24], sizes = [16, 8], strides = [1, 1]} : vector<16x32xf32> to vector<16x8xf32>
    %cst_75 = arith.constant dense<0.000000e+00> : vector<16x16xf32>
    %246 = tpu.matmul %244, %245, %cst_75 {dimension_numbers = #tpu.dot_dimension_numbers<[1], [1], [0], [0], [0, 0, 1, 0], [], []>} : vector<16x8xf32>, vector<16x8xf32>, vector<16x16xf32> -> vector<16x16xf32>
    %247 = arith.addf %246, %1 : vector<16x16xf32>
    %cst_76 = arith.constant dense<0xFF800000> : vector<16xf32>
    %248 = vector.multi_reduction <maximumf>, %247, %cst_76 [1] : vector<16x16xf32> to vector<16xf32>
    %249 = vector.shape_cast %248 : vector<16xf32> to vector<16x1xf32>
    %250 = vector.broadcast %249 : vector<16x1xf32> to vector<16x16xf32>
    %251 = arith.subf %247, %250 : vector<16x16xf32>
    %252 = math.exp %251 : vector<16x16xf32>
    %cst_77 = arith.constant dense<0.000000e+00> : vector<16xf32>
    %253 = vector.multi_reduction <add>, %252, %cst_77 [1] : vector<16x16xf32> to vector<16xf32>
    %254 = vector.shape_cast %253 : vector<16xf32> to vector<16x1xf32>
    %255 = tpu.reciprocal %254 {approx = true} : vector<16x1xf32> -> vector<16x1xf32>
    %256 = arith.mulf %254, %255 : vector<16x1xf32>
    %cst_78 = arith.constant 2.000000e+00 : f32
    %257 = vector.broadcast %cst_78 : f32 to vector<16x1xf32>
    %258 = arith.subf %257, %256 : vector<16x1xf32>
    %259 = arith.mulf %255, %258 : vector<16x1xf32>
    %260 = vector.broadcast %259 : vector<16x1xf32> to vector<16x16xf32>
    %261 = arith.mulf %252, %260 : vector<16x16xf32>
    %262 = vector.extract_strided_slice %183 {offsets = [0, 24], sizes = [16, 8], strides = [1, 1]} : vector<16x32xf32> to vector<16x8xf32>
    %cst_79 = arith.constant dense<0.000000e+00> : vector<16x8xf32>
    %263 = tpu.matmul %261, %262, %cst_79 {dimension_numbers = #tpu.dot_dimension_numbers<[1], [0], [0], [1], [0, 0, 1, 1], [], []>} : vector<16x16xf32>, vector<16x8xf32>, vector<16x8xf32> -> vector<16x8xf32>
    %264 = tpu.concatenate %203, %223, %243, %263 in 1 : vector<16x8xf32>, vector<16x8xf32>, vector<16x8xf32>, vector<16x8xf32> -> vector<16x32xf32>
    %cst_80 = arith.constant dense<0.000000e+00> : vector<16x32xf32>
    %265 = tpu.matmul %264, %165, %cst_80 {dimension_numbers = #tpu.dot_dimension_numbers<[1], [0], [0], [1], [0, 0, 1, 1], [], []>} : vector<16x32xf32>, vector<32x32xf32>, vector<16x32xf32> -> vector<16x32xf32>
    %266 = vector.broadcast %169 : vector<1x32xf32> to vector<16x32xf32>
    %267 = arith.addf %265, %266 : vector<16x32xf32>
    %268 = arith.addf %163, %267 : vector<16x32xf32>
    %cst_81 = arith.constant dense<0.000000e+00> : vector<16xf32>
    %269 = vector.multi_reduction <add>, %268, %cst_81 [1] : vector<16x32xf32> to vector<16xf32>
    %270 = vector.shape_cast %269 : vector<16xf32> to vector<16x1xf32>
    %cst_82 = arith.constant 3.200000e+01 : f32
    %271 = vector.broadcast %cst_82 : f32 to vector<16x1xf32>
    %272 = arith.divf %270, %271 : vector<16x1xf32>
    %273 = vector.broadcast %272 : vector<16x1xf32> to vector<16x32xf32>
    %274 = arith.subf %268, %273 : vector<16x32xf32>
    %275 = arith.mulf %274, %274 : vector<16x32xf32>
    %cst_83 = arith.constant dense<0.000000e+00> : vector<16xf32>
    %276 = vector.multi_reduction <add>, %275, %cst_83 [1] : vector<16x32xf32> to vector<16xf32>
    %277 = vector.shape_cast %276 : vector<16xf32> to vector<16x1xf32>
    %cst_84 = arith.constant 3.200000e+01 : f32
    %278 = vector.broadcast %cst_84 : f32 to vector<16x1xf32>
    %279 = arith.divf %277, %278 : vector<16x1xf32>
    %280 = vector.broadcast %272 : vector<16x1xf32> to vector<16x32xf32>
    %281 = arith.subf %268, %280 : vector<16x32xf32>
    %cst_85 = arith.constant 9.99999974E-6 : f32
    %282 = vector.broadcast %cst_85 : f32 to vector<16x1xf32>
    %283 = arith.addf %279, %282 : vector<16x1xf32>
    %284 = math.rsqrt %283 : vector<16x1xf32>
    %285 = vector.broadcast %284 : vector<16x1xf32> to vector<16x32xf32>
    %286 = arith.mulf %281, %285 : vector<16x32xf32>
    %287 = vector.broadcast %170 : vector<1x32xf32> to vector<16x32xf32>
    %288 = arith.mulf %286, %287 : vector<16x32xf32>
    %289 = vector.broadcast %171 : vector<1x32xf32> to vector<16x32xf32>
    %290 = arith.addf %288, %289 : vector<16x32xf32>
    %cst_86 = arith.constant dense<0.000000e+00> : vector<16x64xf32>
    %291 = tpu.matmul %290, %166, %cst_86 {dimension_numbers = #tpu.dot_dimension_numbers<[1], [0], [0], [1], [0, 0, 1, 1], [], []>} : vector<16x32xf32>, vector<32x64xf32>, vector<16x64xf32> -> vector<16x64xf32>
    %292 = vector.broadcast %172 : vector<1x64xf32> to vector<16x64xf32>
    %293 = arith.addf %291, %292 : vector<16x64xf32>
    %cst_87 = arith.constant 0.000000e+00 : f32
    %294 = vector.broadcast %cst_87 : f32 to vector<16x64xf32>
    %295 = arith.maximumf %293, %294 : vector<16x64xf32>
    %cst_88 = arith.constant dense<0.000000e+00> : vector<16x32xf32>
    %296 = tpu.matmul %295, %167, %cst_88 {dimension_numbers = #tpu.dot_dimension_numbers<[1], [0], [0], [1], [0, 0, 1, 1], [], []>} : vector<16x64xf32>, vector<64x32xf32>, vector<16x32xf32> -> vector<16x32xf32>
    %297 = vector.broadcast %173 : vector<1x32xf32> to vector<16x32xf32>
    %298 = arith.addf %296, %297 : vector<16x32xf32>
    %299 = arith.addf %290, %298 : vector<16x32xf32>
    %cst_89 = arith.constant dense<0.000000e+00> : vector<16xf32>
    %300 = vector.multi_reduction <add>, %299, %cst_89 [1] : vector<16x32xf32> to vector<16xf32>
    %301 = vector.shape_cast %300 : vector<16xf32> to vector<16x1xf32>
    %cst_90 = arith.constant 3.200000e+01 : f32
    %302 = vector.broadcast %cst_90 : f32 to vector<16x1xf32>
    %303 = arith.divf %301, %302 : vector<16x1xf32>
    %304 = vector.broadcast %303 : vector<16x1xf32> to vector<16x32xf32>
    %305 = arith.subf %299, %304 : vector<16x32xf32>
    %306 = arith.mulf %305, %305 : vector<16x32xf32>
    %cst_91 = arith.constant dense<0.000000e+00> : vector<16xf32>
    %307 = vector.multi_reduction <add>, %306, %cst_91 [1] : vector<16x32xf32> to vector<16xf32>
    %308 = vector.shape_cast %307 : vector<16xf32> to vector<16x1xf32>
    %cst_92 = arith.constant 3.200000e+01 : f32
    %309 = vector.broadcast %cst_92 : f32 to vector<16x1xf32>
    %310 = arith.divf %308, %309 : vector<16x1xf32>
    %311 = vector.broadcast %303 : vector<16x1xf32> to vector<16x32xf32>
    %312 = arith.subf %299, %311 : vector<16x32xf32>
    %cst_93 = arith.constant 9.99999974E-6 : f32
    %313 = vector.broadcast %cst_93 : f32 to vector<16x1xf32>
    %314 = arith.addf %310, %313 : vector<16x1xf32>
    %315 = math.rsqrt %314 : vector<16x1xf32>
    %316 = vector.broadcast %315 : vector<16x1xf32> to vector<16x32xf32>
    %317 = arith.mulf %312, %316 : vector<16x32xf32>
    %318 = vector.broadcast %174 : vector<1x32xf32> to vector<16x32xf32>
    %319 = arith.mulf %317, %318 : vector<16x32xf32>
    %320 = vector.broadcast %175 : vector<1x32xf32> to vector<16x32xf32>
    %321 = arith.addf %319, %320 : vector<16x32xf32>
    %c0_94 = arith.constant 0 : index
    %c0_95 = arith.constant 0 : index
    %322 = vector.load %arg10[%c0_94, %c0_95] : memref<8x32xf32, #tpu.memory_space<vmem>>, vector<8x32xf32>
    %cst_96 = arith.constant dense<0.000000e+00> : vector<8x16xf32>
    %323 = tpu.matmul %322, %321, %cst_96 {dimension_numbers = #tpu.dot_dimension_numbers<[1], [1], [0], [0], [0, 0, 1, 0], [], []>} : vector<8x32xf32>, vector<16x32xf32>, vector<8x16xf32> -> vector<8x16xf32>
    %c0_97 = arith.constant 0 : index
    %c0_98 = arith.constant 0 : index
    %324 = vector.load %arg11[%c0_97, %c0_98] : memref<8x1xf32, #tpu.memory_space<vmem>>, vector<8x1xf32>
    %325 = vector.broadcast %324 : vector<8x1xf32> to vector<8x16xf32>
    %326 = arith.addf %323, %325 : vector<8x16xf32>
    %c0_99 = arith.constant 0 : index
    %c0_100 = arith.constant 0 : index
    %c0_101 = arith.constant 0 : index
    %327 = vector.load %arg14[%c0_99, %c0_100, %c0_101] : memref<1x8x16xf32, #tpu.memory_space<vmem>>, vector<1x8x16xf32>
    %328 = vector.shape_cast %327 : vector<1x8x16xf32> to vector<8x16xf32>
    %329 = vector.shape_cast %326 : vector<8x16xf32> to vector<1x8x16xf32>
    tpu.vector_store %arg14[%c0_99, %c0_100, %c0_101], %329 {strides = array<i32>} : memref<1x8x16xf32, #tpu.memory_space<vmem>>, vector<1x8x16xf32>,
    return
  }
  func.func @transform_0(%arg0: i32) -> (i32, i32, i32) {
    %c0_i32 = arith.constant 0 : i32
    %c0_i32_0 = arith.constant 0 : i32
    %c0_i32_1 = arith.constant 0 : i32
    return %arg0, %c0_i32, %c0_i32_0 : i32, i32, i32
  }
  func.func @transform_1(%arg0: i32) -> (i32, i32) {
    %c0_i32 = arith.constant 0 : i32
    %c0_i32_0 = arith.constant 0 : i32
    %c0_i32_1 = arith.constant 0 : i32
    return %c0_i32, %c0_i32_0 : i32, i32
  }
  func.func @transform_2(%arg0: i32) -> (i32, i32) {
    %c0_i32 = arith.constant 0 : i32
    %c0_i32_0 = arith.constant 0 : i32
    %c0_i32_1 = arith.constant 0 : i32
    return %c0_i32, %c0_i32_0 : i32, i32
  }
  func.func @transform_3(%arg0: i32) -> (i32, i32) {
    %c0_i32 = arith.constant 0 : i32
    %c0_i32_0 = arith.constant 0 : i32
    %c0_i32_1 = arith.constant 0 : i32
    return %c0_i32, %c0_i32_0 : i32, i32
  }
  func.func @transform_4(%arg0: i32) -> (i32, i32) {
    %c0_i32 = arith.constant 0 : i32
    %c0_i32_0 = arith.constant 0 : i32
    %c0_i32_1 = arith.constant 0 : i32
    return %c0_i32, %c0_i32_0 : i32, i32
  }
  func.func @transform_5(%arg0: i32) -> (i32, i32) {
    %c0_i32 = arith.constant 0 : i32
    %c0_i32_0 = arith.constant 0 : i32
    %c0_i32_1 = arith.constant 0 : i32
    return %c0_i32, %c0_i32_0 : i32, i32
  }
  func.func @transform_6(%arg0: i32) -> (i32, i32) {
    %c0_i32 = arith.constant 0 : i32
    %c0_i32_0 = arith.constant 0 : i32
    %c0_i32_1 = arith.constant 0 : i32
    return %c0_i32, %c0_i32_0 : i32, i32
  }
  func.func @transform_7(%arg0: i32) -> (i32, i32) {
    %c0_i32 = arith.constant 0 : i32
    %c0_i32_0 = arith.constant 0 : i32
    %c0_i32_1 = arith.constant 0 : i32
    return %c0_i32, %c0_i32_0 : i32, i32
  }
  func.func @transform_8(%arg0: i32) -> (i32, i32) {
    %c0_i32 = arith.constant 0 : i32
    %c0_i32_0 = arith.constant 0 : i32
    %c0_i32_1 = arith.constant 0 : i32
    return %c0_i32, %c0_i32_0 : i32, i32
  }
  func.func @transform_9(%arg0: i32) -> (i32, i32) {
    %c0_i32 = arith.constant 0 : i32
    %c0_i32_0 = arith.constant 0 : i32
    %c0_i32_1 = arith.constant 0 : i32
    return %c0_i32, %c0_i32_0 : i32, i32
  }
  func.func @transform_10(%arg0: i32) -> (i32, i32) {
    %c0_i32 = arith.constant 0 : i32
    %c0_i32_0 = arith.constant 0 : i32
    %c0_i32_1 = arith.constant 0 : i32
    return %c0_i32, %c0_i32_0 : i32, i32
  }
  func.func @transform_11(%arg0: i32) -> (i32, i32) {
    %c0_i32 = arith.constant 0 : i32
    %c0_i32_0 = arith.constant 0 : i32
    %c0_i32_1 = arith.constant 0 : i32
    return %c0_i32, %c0_i32_0 : i32, i32
  }
  func.func @transform_12(%arg0: i32) -> (i32, i32) {
    %c0_i32 = arith.constant 0 : i32
    %c0_i32_0 = arith.constant 0 : i32
    %c0_i32_1 = arith.constant 0 : i32
    return %c0_i32, %c0_i32_0 : i32, i32
  }
  func.func @transform_13(%arg0: i32) -> (i32, i32, i32) {
    %c0_i32 = arith.constant 0 : i32
    %c0_i32_0 = arith.constant 0 : i32
    %c0_i32_1 = arith.constant 0 : i32
    return %arg0, %c0_i32, %c0_i32_0 : i32, i32, i32
  }
}

</mosaic_0001>

<llo_original>
// kernel: tpu_custom_call.1
$region0: #{tpu_custom_call.1}
  #allocation0 [shape = 'u32[]', space=smem, size = 0x4, offset = 0x4, fixed_abs, tag = 'smem constant byte address 0x4 - core index']
  #allocation1 [shape = 'u32[144,128]{1,0:T(1,128)}', space=vmem, size = 0x12000, scoped, tag = 'internal scratch']
  %s0 = inlined_call_operand.hbm [shape: f32[2,8,32], index: 0, kind: input, shape index: {}]
  %s1 = inlined_call_operand.vmem [shape: f32[32,96], index: 1, kind: input, shape index: {}]
  %s2 = inlined_call_operand.vmem [shape: f32[32,32], index: 2, kind: input, shape index: {}]
  %s3 = inlined_call_operand.vmem [shape: f32[32,64], index: 3, kind: input, shape index: {}]
  %s4 = inlined_call_operand.vmem [shape: f32[64,32], index: 4, kind: input, shape index: {}]
  %s5 = inlined_call_operand.vmem [shape: f32[32,96], index: 5, kind: input, shape index: {}]
  %s6 = inlined_call_operand.vmem [shape: f32[32,32], index: 6, kind: input, shape index: {}]
  %s7 = inlined_call_operand.hbm [shape: f32[32,64], index: 7, kind: input, shape index: {}]
  %s8 = inlined_call_operand.vmem [shape: f32[64,32], index: 8, kind: input, shape index: {}]
  %s9 = inlined_call_operand.hbm [shape: f32[8,32], index: 9, kind: input, shape index: {}]
  %s10 = inlined_call_operand.vmem [shape: f32[8,1], index: 10, kind: input, shape index: {}]
  %s11 = inlined_call_operand.vmem [shape: f32[16,128], index: 11, kind: input, shape index: {}]
  %s12 = inlined_call_operand.hbm [shape: f32[16,16], index: 12, kind: input, shape index: {}]
  %s13 = inlined_call_operand.hbm [shape: f32[1,8,16], index: 13, kind: output, shape index: {}]
  %s14 = sld [smem:[#allocation0]]
  $region78: #{tpu_custom_call.1} parent=0
    _
  %s16 = ssub.s32 1, %s14
  %s17 = scalar_select 0, %s16, %s14
  $region1: #{tpu_custom_call.1} parent=0
    #allocation2 [shape = 'u8[8192]{0}', space=vmem, size = 0x2000, scoped, tag = 'input window, operand 0, single buffered']
    #allocation3 [shape = 's32[1]{0}', space=sflag, size = 0x4, scoped, tag = 'scoped memory for tpu_custom_call.1']
    #allocation4 [shape = 's32[1]{0}', space=sflag, size = 0x4, scoped, tag = 'scoped memory for tpu_custom_call.1']
    #allocation5 [shape = 'u8[16384]{0}', space=vmem, size = 0x4000, scoped, tag = 'input window, operand 7, single buffered']
    #allocation6 [shape = 's32[1]{0}', space=sflag, size = 0x4, scoped, tag = 'scoped memory for tpu_custom_call.1']
    #allocation7 [shape = 'u8[4096]{0}', space=vmem, size = 0x1000, scoped, tag = 'input window, operand 9, single buffered']
    #allocation8 [shape = 'u8[8192]{0}', space=vmem, size = 0x2000, scoped, tag = 'input window, operand 12, single buffered']
    #allocation9 [shape = 's32[1]{0}', space=sflag, size = 0x4, scoped, tag = 'scoped memory for tpu_custom_call.1']
    #allocation10 [shape = 'u8[4096]{0}', space=vmem, size = 0x1000, scoped, tag = 'output window, operand 0, single buffered']
    %18 = vsyncpa [#allocation3], 0
    %19 = vsyncpa [#allocation6], 0
    %20 = vsyncpa [#allocation9], 0
    %21 = vsyncpa [#allocation4], 0
    // Predicated region
    $region2: #{tpu_custom_call.1} parent=1 // pred_check
      _
    $region3: #{tpu_custom_call.1} parent=1 // pred_check_branch
      %23 = sbr.rel (0) target = $region5
    $region4: #{tpu_custom_call.1} parent=1 // pred_region
      %s25 = ssub.s32 256, 256
      %26 = vsyncadd [#allocation3], %s25
      %s27 = sshll.u32 [#allocation2], 4
      %s28 = int_to_ptr.vmem [resolvable:$true] %s27
      %33 = dma.hbm_to_vmem [thread:$0]  %s0, 256, %s28, [#allocation3], 128, 128, 8
    $region5: #{tpu_custom_call.1} parent=1 // pred_fallthru
      _
    // Predicated region
    $region6: #{tpu_custom_call.1} parent=1 // pred_check
      _
    $region7: #{tpu_custom_call.1} parent=1 // pred_check_branch
      %35 = sbr.rel (0) target = $region9
    $region8: #{tpu_custom_call.1} parent=1 // pred_region
      _
    $region9: #{tpu_custom_call.1} parent=1 // pred_fallthru
      _
    // Predicated region
    $region10: #{tpu_custom_call.1} parent=1 // pred_check
      _
    $region11: #{tpu_custom_call.1} parent=1 // pred_check_branch
      %37 = sbr.rel (0) target = $region13
    $region12: #{tpu_custom_call.1} parent=1 // pred_region
      _
    $region13: #{tpu_custom_call.1} parent=1 // pred_fallthru
      _
    // Predicated region
    $region14: #{tpu_custom_call.1} parent=1 // pred_check
      _
    $region15: #{tpu_custom_call.1} parent=1 // pred_check_branch
      %39 = sbr.rel (0) target = $region17
    $region16: #{tpu_custom_call.1} parent=1 // pred_region
      _
    $region17: #{tpu_custom_call.1} parent=1 // pred_fallthru
      _
    // Predicated region
    $region18: #{tpu_custom_call.1} parent=1 // pred_check
      _
    $region19: #{tpu_custom_call.1} parent=1 // pred_check_branch
      %41 = sbr.rel (0) target = $region21
    $region20: #{tpu_custom_call.1} parent=1 // pred_region
      _
    $region21: #{tpu_custom_call.1} parent=1 // pred_fallthru
      _
    // Predicated region
    $region22: #{tpu_custom_call.1} parent=1 // pred_check
      _
    $region23: #{tpu_custom_call.1} parent=1 // pred_check_branch
      %43 = sbr.rel (0) target = $region25
    $region24: #{tpu_custom_call.1} parent=1 // pred_region
      _
    $region25: #{tpu_custom_call.1} parent=1 // pred_fallthru
      _
    // Predicated region
    $region26: #{tpu_custom_call.1} parent=1 // pred_check
      _
    $region27: #{tpu_custom_call.1} parent=1 // pred_check_branch
      %45 = sbr.rel (0) target = $region29
    $region28: #{tpu_custom_call.1} parent=1 // pred_region
      _
    $region29: #{tpu_custom_call.1} parent=1 // pred_fallthru
      _
    // Predicated region
    $region30: #{tpu_custom_call.1} parent=1 // pred_check
      _
    $region31: #{tpu_custom_call.1} parent=1 // pred_check_branch
      %47 = sbr.rel (0) target = $region33
    $region32: #{tpu_custom_call.1} parent=1 // pred_region
      %s49 = ssub.s32 512, 512
      %50 = vsyncadd [#allocation6], %s49
      %s51 = sshll.u32 [#allocation5], 4
      %s52 = int_to_ptr.vmem [resolvable:$true] %s51
      %57 = dma.hbm_to_vmem [thread:$0]  %s7, 512, %s52, [#allocation6], 128, 128, 8
    $region33: #{tpu_custom_call.1} parent=1 // pred_fallthru
      _
    // Predicated region
    $region34: #{tpu_custom_call.1} parent=1 // pred_check
      _
    $region35: #{tpu_custom_call.1} parent=1 // pred_check_branch
      %59 = sbr.rel (0) target = $region37
    $region36: #{tpu_custom_call.1} parent=1 // pred_region
      _
    $region37: #{tpu_custom_call.1} parent=1 // pred_fallthru
      _
    // Predicated region
    $region38: #{tpu_custom_call.1} parent=1 // pred_check
      _
    $region39: #{tpu_custom_call.1} parent=1 // pred_check_branch
      %61 = sbr.rel (0) target = $region41
    $region40: #{tpu_custom_call.1} parent=1 // pred_region
      %s63 = ssub.s32 128, 128
      %64 = vsyncadd [#allocation6], %s63
      %s66 = sshll.u32 [#allocation7], 4
      %s67 = int_to_ptr.vmem [resolvable:$true] %s66
      %69 = dma.hbm_to_vmem [thread:$0]  %s9, 128, %s67, [#allocation6]
    $region41: #{tpu_custom_call.1} parent=1 // pred_fallthru
      _
    // Predicated region
    $region42: #{tpu_custom_call.1} parent=1 // pred_check
      _
    $region43: #{tpu_custom_call.1} parent=1 // pred_check_branch
      %71 = sbr.rel (0) target = $region45
    $region44: #{tpu_custom_call.1} parent=1 // pred_region
      _
    $region45: #{tpu_custom_call.1} parent=1 // pred_fallthru
      _
    // Predicated region
    $region46: #{tpu_custom_call.1} parent=1 // pred_check
      _
    $region47: #{tpu_custom_call.1} parent=1 // pred_check_branch
      %73 = sbr.rel (0) target = $region49
    $region48: #{tpu_custom_call.1} parent=1 // pred_region
      _
    $region49: #{tpu_custom_call.1} parent=1 // pred_fallthru
      _
    // Predicated region
    $region50: #{tpu_custom_call.1} parent=1 // pred_check
      _
    $region51: #{tpu_custom_call.1} parent=1 // pred_check_branch
      %75 = sbr.rel (0) target = $region53
    $region52: #{tpu_custom_call.1} parent=1 // pred_region
      %s77 = ssub.s32 256, 256
      %78 = vsyncadd [#allocation9], %s77
      %s79 = sshll.u32 [#allocation8], 4
      %s80 = int_to_ptr.vmem [resolvable:$true] %s79
      %85 = dma.hbm_to_vmem [thread:$0]  %s12, 256, %s80, [#allocation9], 128, 128, 8
    $region53: #{tpu_custom_call.1} parent=1 // pred_fallthru
      _
    // Predicated region
    $region54: #{tpu_custom_call.1} parent=1 // pred_check
      _
    $region55: #{tpu_custom_call.1} parent=1 // pred_check_branch
      %87 = sbr.rel (0) target = $region57
    $region56: #{tpu_custom_call.1} parent=1 // pred_region
      %88 = dma.done [#allocation3], 256
    $region57: #{tpu_custom_call.1} parent=1 // pred_fallthru
      _
    // Predicated region
    $region58: #{tpu_custom_call.1} parent=1 // pred_check
      _
    $region59: #{tpu_custom_call.1} parent=1 // pred_check_branch
      %90 = sbr.rel (0) target = $region61
    $region60: #{tpu_custom_call.1} parent=1 // pred_region
      %91 = dma.done [#allocation6], 512
    $region61: #{tpu_custom_call.1} parent=1 // pred_fallthru
      _
    // Predicated region
    $region62: #{tpu_custom_call.1} parent=1 // pred_check
      _
    $region63: #{tpu_custom_call.1} parent=1 // pred_check_branch
      %93 = sbr.rel (0) target = $region65
    $region64: #{tpu_custom_call.1} parent=1 // pred_region
      %94 = dma.done [#allocation6], 128
    $region65: #{tpu_custom_call.1} parent=1 // pred_fallthru
      _
    // Predicated region
    $region66: #{tpu_custom_call.1} parent=1 // pred_check
      _
    $region67: #{tpu_custom_call.1} parent=1 // pred_check_branch
      %96 = sbr.rel (0) target = $region69
    $region68: #{tpu_custom_call.1} parent=1 // pred_region
      %97 = dma.done [#allocation9], 256
    $region69: #{tpu_custom_call.1} parent=1 // pred_fallthru
      _
    %v98 = vld [vmem:[%s11] sm:$0xff]
    %v99 = vld [vmem:[%s11 + $0x8] sm:$0xff]
    %v100 = vld [vmem:[#allocation8] sm:$0xff]
    %v101 = vld [vmem:[#allocation8 + $0x8] sm:$0xff]
    %v102 = vld [vmem:[#allocation2] sm:$0xff]
    %v103 = vld [vmem:[#allocation2 + $0x8] sm:$0xff]
    %v104 = vmul.f32 %v102, 5.656854
    %v105 = vmul.f32 %v103, 5.656854
    %v106 = vld [vmem:[%s1] sm:$0xff]
    %v107 = vld [vmem:[%s1 + $0x8] sm:$0xff]
    %v108 = vld [vmem:[%s1 + $0x10] sm:$0xff]
    %v109 = vld [vmem:[%s1 + $0x18] sm:$0xff]
    %v110 = vld [vmem:[%s2] sm:$0xff]
    %v111 = vld [vmem:[%s2 + $0x8] sm:$0xff]
    %v112 = vld [vmem:[%s2 + $0x10] sm:$0xff]
    %v113 = vld [vmem:[%s2 + $0x18] sm:$0xff]
    %v114 = vld [vmem:[%s3] sm:$0xff]
    %v115 = vld [vmem:[%s3 + $0x8] sm:$0xff]
    %v116 = vld [vmem:[%s3 + $0x10] sm:$0xff]
    %v117 = vld [vmem:[%s3 + $0x18] sm:$0xff]
    %v118 = vld [vmem:[%s4] sm:$0xff]
    %v119 = vld [vmem:[%s4 + $0x8] sm:$0xff]
    %v120 = vld [vmem:[%s4 + $0x10] sm:$0xff]
    %v121 = vld [vmem:[%s4 + $0x18] sm:$0xff]
    %v122 = vld [vmem:[%s4 + $0x20] sm:$0xff]
    %v123 = vld [vmem:[%s4 + $0x28] sm:$0xff]
    %v124 = vld [vmem:[%s4 + $0x30] sm:$0xff]
    %v125 = vld [vmem:[%s4 + $0x38] sm:$0xff]
    %v126 = vlaneseq
    %v127 = vshrl.u32 %v126, 7
    %v128 = vsub.s32 0, %v127
    %v129 = vrot.slane %v98, %v128
    %vm130 = vcmask 261120
    %v132 = vsel %vm130, %v104, 0
    %v135 = vsel %vm130, %v105, 0
    %137 = vmatprep.subr.mxu0 0.0
    %138 = vmatpush1.msra.mxu0 0.0
    %139 = vmatprep.subr.mxu0 0.0
    %140 = vmatpush1.msra.mxu0 0.0
    %141 = vmatprep.subr.mxu0 0.0
    %142 = vmatpush1.msra.mxu0 0.0
    %143 = vmatprep.subr.mxu0 0.0
    %144 = vmatpush1.msra.mxu0 0.0
    %145 = vmatprep.subr.mxu0 0.0
    %146 = vmatpush1.msra.mxu0 0.0
    %147 = vmatprep.subr.mxu0 0.0
    %148 = vmatpush1.msra.mxu0 0.0
    %149 = vmatprep.subr.mxu0 0.0
    %150 = vmatpush1.msra.mxu0 0.0
    %151 = vmatprep.subr.mxu0 0.0
    %152 = vmatpush1.msra.mxu0 0.0
    %153 = vmatprep.subr.mxu0 0.0
    %154 = vmatpush1.msra.mxu0 0.0
    %155 = vmatprep.subr.mxu0 0.0
    %156 = vmatpush1.msra.mxu0 0.0
    %157 = vmatprep.subr.mxu0 0.0
    %158 = vmatpush1.msra.mxu0 0.0
    %159 = vmatprep.subr.mxu0 0.0
    %160 = vmatpush1.msra.mxu0 0.0
    %161 = vmatprep.subr.mxu0 0.0
    %162 = vmatpush1.msra.mxu0 %v109
    %163 = vmatprep.subr.mxu0 0.0
    %164 = vmatpush1.msra.mxu0 %v108
    %165 = vmatprep.subr.mxu0 0.0
    %166 = vmatpush1.msra.mxu0 %v107
    %167 = vmatprep.subr.mxu0 0.0
    %168 = vmatpush1.msra.mxu0 %v106
    %169 = vmatprep.subr.mxu0 0.0
    %170 = vmatpush2.msra.mxu0 0.0
    %171 = vmatprep.subr.mxu0 0.0
    %172 = vmatpush2.msra.mxu0 0.0
    %173 = vmatprep.subr.mxu0 0.0
    %174 = vmatpush2.msra.mxu0 0.0
    %175 = vmatprep.subr.mxu0 0.0
    %176 = vmatpush2.msra.mxu0 0.0
    %177 = vmatprep.subr.mxu0 0.0
    %178 = vmatpush2.msra.mxu0 0.0
    %179 = vmatprep.subr.mxu0 0.0
    %180 = vmatpush2.msra.mxu0 0.0
    %181 = vmatprep.subr.mxu0 0.0
    %182 = vmatpush2.msra.mxu0 0.0
    %183 = vmatprep.subr.mxu0 0.0
    %184 = vmatpush2.msra.mxu0 0.0
    %185 = vmatprep.subr.mxu0 0.0
    %186 = vmatpush2.msra.mxu0 0.0
    %187 = vmatprep.subr.mxu0 0.0
    %188 = vmatpush2.msra.mxu0 0.0
    %189 = vmatprep.subr.mxu0 0.0
    %190 = vmatpush2.msra.mxu0 0.0
    %191 = vmatprep.subr.mxu0 0.0
    %192 = vmatpush2.msra.mxu0 0.0
    %193 = vmatprep.subr.mxu0 0.0
    %194 = vmatpush2.msra.mxu0 0.0
    %195 = vmatprep.subr.mxu0 0.0
    %196 = vmatpush2.msra.mxu0 0.0
    %197 = vmatprep.subr.mxu0 0.0
    %198 = vmatpush2.msra.mxu0 0.0
    %199 = vmatprep.subr.mxu0 0.0
    %200 = vmatpush2.msra.mxu0 0.0
    %201 = vmatprep.mubr.f32.mxu0 0.0
    %202 = vmatmul.mubr.f32.gmra.mxu0 %v132
    %v203 = vpop.f32.mrf.mxu0
    %v204 = vadd.f32 %v129, %v203
    %v205 = vpop.f32.mrf.mxu0
    %206 = vmatprep.mubr.f32.mxu0 0.0
    %207 = vmatmul.mubr.f32.gmra.mxu0 %v135
    %v208 = vpop.f32.mrf.mxu0
    %v209 = vadd.f32 %v129, %v208
    %v210 = vpop.f32.mrf.mxu0
    %211 = vdwg.mxu0
    %v212 = vmul.f32 %v204, 0.35355338
    %v213 = vmul.f32 %v209, 0.35355338
    %216 = vrot.lane.b32.xlu0 %v204, 96
    %v217 = vpop.permute.xlu0 %216
    %218 = vrot.lane.b32.xlu0 %v209, 96
    %v219 = vpop.permute.xlu0 %218
    %vm220 = vcmask 64512
    %v222 = vsel %vm220, %v212, 0
    %v225 = vsel %vm220, %v213, 0
    %v227 = vsel %vm220, %v217, 0
    %v229 = vsel %vm220, %v219, 0
    %231 = vmatprep.subr.mxu0 0.0
    %232 = vmatpush1.xpose.msra.mxu0 0.0
    %233 = vmatprep.subr.mxu0 0.0
    %234 = vmatpush1.xpose.msra.mxu0 0.0
    %235 = vmatprep.subr.mxu0 0.0
    %236 = vmatpush1.xpose.msra.mxu0 0.0
    %237 = vmatprep.subr.mxu0 0.0
    %238 = vmatpush1.xpose.msra.mxu0 0.0
    %239 = vmatprep.subr.mxu0 0.0
    %240 = vmatpush1.xpose.msra.mxu0 0.0
    %241 = vmatprep.subr.mxu0 0.0
    %242 = vmatpush1.xpose.msra.mxu0 0.0
    %243 = vmatprep.subr.mxu0 0.0
    %244 = vmatpush1.xpose.msra.mxu0 0.0
    %245 = vmatprep.subr.mxu0 0.0
    %246 = vmatpush1.xpose.msra.mxu0 0.0
    %247 = vmatprep.subr.mxu0 0.0
    %248 = vmatpush1.xpose.msra.mxu0 0.0
    %249 = vmatprep.subr.mxu0 0.0
    %250 = vmatpush1.xpose.msra.mxu0 0.0
    %251 = vmatprep.subr.mxu0 0.0
    %252 = vmatpush1.xpose.msra.mxu0 0.0
    %253 = vmatprep.subr.mxu0 0.0
    %254 = vmatpush1.xpose.msra.mxu0 0.0
    %255 = vmatprep.subr.mxu0 0.0
    %256 = vmatpush1.xpose.msra.mxu0 0.0
    %257 = vmatprep.subr.mxu0 0.0
    %258 = vmatpush1.xpose.msra.mxu0 0.0
    %259 = vmatprep.subr.mxu0 0.0
    %260 = vmatpush1.xpose.msra.mxu0 %v229
    %261 = vmatprep.subr.mxu0 0.0
    %262 = vmatpush1.xpose.msra.mxu0 %v227
    %263 = vmatprep.subr.mxu0 0.0
    %264 = vmatpush2.xpose.msra.mxu0 0.0
    %265 = vmatprep.subr.mxu0 0.0
    %266 = vmatpush2.xpose.msra.mxu0 0.0
    %267 = vmatprep.subr.mxu0 0.0
    %268 = vmatpush2.xpose.msra.mxu0 0.0
    %269 = vmatprep.subr.mxu0 0.0
    %270 = vmatpush2.xpose.msra.mxu0 0.0
    %271 = vmatprep.subr.mxu0 0.0
    %272 = vmatpush2.xpose.msra.mxu0 0.0
    %273 = vmatprep.subr.mxu0 0.0
    %274 = vmatpush2.xpose.msra.mxu0 0.0
    %275 = vmatprep.subr.mxu0 0.0
    %276 = vmatpush2.xpose.msra.mxu0 0.0
    %277 = vmatprep.subr.mxu0 0.0
    %278 = vmatpush2.xpose.msra.mxu0 0.0
    %279 = vmatprep.subr.mxu0 0.0
    %280 = vmatpush2.xpose.msra.mxu0 0.0
    %281 = vmatprep.subr.mxu0 0.0
    %282 = vmatpush2.xpose.msra.mxu0 0.0
    %283 = vmatprep.subr.mxu0 0.0
    %284 = vmatpush2.xpose.msra.mxu0 0.0
    %285 = vmatprep.subr.mxu0 0.0
    %286 = vmatpush2.xpose.msra.mxu0 0.0
    %287 = vmatprep.subr.mxu0 0.0
    %288 = vmatpush2.xpose.msra.mxu0 0.0
    %289 = vmatprep.subr.mxu0 0.0
    %290 = vmatpush2.xpose.msra.mxu0 0.0
    %291 = vmatprep.subr.mxu0 0.0
    %292 = vmatpush2.xpose.msra.mxu0 0.0
    %293 = vmatprep.subr.mxu0 0.0
    %294 = vmatpush2.xpose.msra.mxu0 0.0
    %295 = vmatprep.mubr.f32.mxu0 0.0
    %296 = vmatmul.mubr.f32.gmra.mxu0 %v222
    %v297 = vpop.f32.mrf.mxu0
    %v298 = vadd.f32 %v100, %v297
    %v299 = vpop.f32.mrf.mxu0
    %300 = vmatprep.mubr.f32.mxu0 0.0
    %301 = vmatmul.mubr.f32.gmra.mxu0 %v225
    %v302 = vpop.f32.mrf.mxu0
    %v303 = vadd.f32 %v101, %v302
    %v304 = vpop.f32.mrf.mxu0
    %305 = vdwg.mxu0
    %vm306 = vcmask 130048
    %v307 = vsel %vm306, %v298, -inf
    %308 = vmax.xlane.f32.xlu0 %v307
    %v309 = vpop.xlane.xlu0 %308
    %v310 = vsel %vm306, %v303, -inf
    %311 = vmax.xlane.f32.xlu0 %v310
    %v312 = vpop.xlane.xlu0 %311
    %v313 = vsub.f32 %v298, %v309
    %v314 = vsub.f32 %v303, %v312
    %v315 = vmul.f32 %v313, 1.442695
    %v316 = vpow.pop %v315
    %v317 = vmul.f32 %v314, 1.442695
    %v318 = vpow.pop %v317
    %v319 = vsel %vm306, %v316, 0.0
    %320 = vadd.xlane.f32.xlu0 %v319
    %v321 = vpop.xlane.xlu0 %320
    %v322 = vsel %vm306, %v318, 0.0
    %323 = vadd.xlane.f32.xlu0 %v322
    %v324 = vpop.xlane.xlu0 %323
    %v325 = vrcp.pop %v321
    %v326 = vrcp.pop %v324
    %v327 = vmul.f32 %v321, %v325
    %v328 = vmul.f32 %v324, %v326
    %v329 = vsub.f32 2.0, %v327
    %v330 = vsub.f32 2.0, %v328
    %v331 = vmul.f32 %v325, %v329
    %v332 = vmul.f32 %v326, %v330
    %v333 = vmul.f32 %v316, %v331
    %v334 = vmul.f32 %v318, %v332
    %335 = vrot.lane.b32.xlu0 %v204, 64
    %v336 = vpop.permute.xlu0 %335
    %337 = vrot.lane.b32.xlu0 %v209, 64
    %v338 = vpop.permute.xlu0 %337
    %v342 = vsel %vm306, %v333, 0
    %v345 = vsel %vm306, %v334, 0
    %347 = vmatprep.subr.mxu0 0.0
    %348 = vmatpush1.msra.mxu0 0.0
    %349 = vmatprep.subr.mxu0 0.0
    %350 = vmatpush1.msra.mxu0 0.0
    %351 = vmatprep.subr.mxu0 0.0
    %352 = vmatpush1.msra.mxu0 0.0
    %353 = vmatprep.subr.mxu0 0.0
    %354 = vmatpush1.msra.mxu0 0.0
    %355 = vmatprep.subr.mxu0 0.0
    %356 = vmatpush1.msra.mxu0 0.0
    %357 = vmatprep.subr.mxu0 0.0
    %358 = vmatpush1.msra.mxu0 0.0
    %359 = vmatprep.subr.mxu0 0.0
    %360 = vmatpush1.msra.mxu0 0.0
    %361 = vmatprep.subr.mxu0 0.0
    %362 = vmatpush1.msra.mxu0 0.0
    %363 = vmatprep.subr.mxu0 0.0
    %364 = vmatpush1.msra.mxu0 0.0
    %365 = vmatprep.subr.mxu0 0.0
    %366 = vmatpush1.msra.mxu0 0.0
    %367 = vmatprep.subr.mxu0 0.0
    %368 = vmatpush1.msra.mxu0 0.0
    %369 = vmatprep.subr.mxu0 0.0
    %370 = vmatpush1.msra.mxu0 0.0
    %371 = vmatprep.subr.mxu0 0.0
    %372 = vmatpush1.msra.mxu0 0.0
    %373 = vmatprep.subr.mxu0 0.0
    %374 = vmatpush1.msra.mxu0 0.0
    %375 = vmatprep.subr.mxu0 0.0
    %376 = vmatpush1.msra.mxu0 %v338
    %377 = vmatprep.subr.mxu0 0.0
    %378 = vmatpush1.msra.mxu0 %v336
    %379 = vmatprep.subr.mxu0 0.0
    %380 = vmatpush2.msra.mxu0 0.0
    %381 = vmatprep.subr.mxu0 0.0
    %382 = vmatpush2.msra.mxu0 0.0
    %383 = vmatprep.subr.mxu0 0.0
    %384 = vmatpush2.msra.mxu0 0.0
    %385 = vmatprep.subr.mxu0 0.0
    %386 = vmatpush2.msra.mxu0 0.0
    %387 = vmatprep.subr.mxu0 0.0
    %388 = vmatpush2.msra.mxu0 0.0
    %389 = vmatprep.subr.mxu0 0.0
    %390 = vmatpush2.msra.mxu0 0.0
    %391 = vmatprep.subr.mxu0 0.0
    %392 = vmatpush2.msra.mxu0 0.0
    %393 = vmatprep.subr.mxu0 0.0
    %394 = vmatpush2.msra.mxu0 0.0
    %395 = vmatprep.subr.mxu0 0.0
    %396 = vmatpush2.msra.mxu0 0.0
    %397 = vmatprep.subr.mxu0 0.0
    %398 = vmatpush2.msra.mxu0 0.0
    %399 = vmatprep.subr.mxu0 0.0
    %400 = vmatpush2.msra.mxu0 0.0
    %401 = vmatprep.subr.mxu0 0.0
    %402 = vmatpush2.msra.mxu0 0.0
    %403 = vmatprep.subr.mxu0 0.0
    %404 = vmatpush2.msra.mxu0 0.0
    %405 = vmatprep.subr.mxu0 0.0
    %406 = vmatpush2.msra.mxu0 0.0
    %407 = vmatprep.subr.mxu0 0.0
    %408 = vmatpush2.msra.mxu0 0.0
    %409 = vmatprep.subr.mxu0 0.0
    %410 = vmatpush2.msra.mxu0 0.0
    %411 = vmatprep.mubr.f32.mxu0 0.0
    %412 = vmatmul.mubr.f32.gmra.mxu0 %v342
    %v413 = vpop.f32.mrf.mxu0
    %v414 = vadd.f32 0.0, %v413
    %v415 = vpop.f32.mrf.mxu0
    %416 = vmatprep.mubr.f32.mxu0 0.0
    %417 = vmatmul.mubr.f32.gmra.mxu0 %v345
    %v418 = vpop.f32.mrf.mxu0
    %v419 = vadd.f32 0.0, %v418
    %v420 = vpop.f32.mrf.mxu0
    %421 = vdwg.mxu0
    %422 = vrot.lane.b32.xlu0 %v212, 120
    %v423 = vpop.permute.xlu0 %422
    %424 = vrot.lane.b32.xlu0 %v213, 120
    %v425 = vpop.permute.xlu0 %424
    %426 = vrot.lane.b32.xlu0 %v204, 88
    %v427 = vpop.permute.xlu0 %426
    %428 = vrot.lane.b32.xlu0 %v209, 88
    %v429 = vpop.permute.xlu0 %428
    %v430 = vsel %vm220, %v423, 0
    %v432 = vsel %vm220, %v425, 0
    %v434 = vsel %vm220, %v427, 0
    %v436 = vsel %vm220, %v429, 0
    %438 = vmatprep.subr.mxu0 0.0
    %439 = vmatpush1.xpose.msra.mxu0 0.0
    %440 = vmatprep.subr.mxu0 0.0
    %441 = vmatpush1.xpose.msra.mxu0 0.0
    %442 = vmatprep.subr.mxu0 0.0
    %443 = vmatpush1.xpose.msra.mxu0 0.0
    %444 = vmatprep.subr.mxu0 0.0
    %445 = vmatpush1.xpose.msra.mxu0 0.0
    %446 = vmatprep.subr.mxu0 0.0
    %447 = vmatpush1.xpose.msra.mxu0 0.0
    %448 = vmatprep.subr.mxu0 0.0
    %449 = vmatpush1.xpose.msra.mxu0 0.0
    %450 = vmatprep.subr.mxu0 0.0
    %451 = vmatpush1.xpose.msra.mxu0 0.0
    %452 = vmatprep.subr.mxu0 0.0
    %453 = vmatpush1.xpose.msra.mxu0 0.0
    %454 = vmatprep.subr.mxu0 0.0
    %455 = vmatpush1.xpose.msra.mxu0 0.0
    %456 = vmatprep.subr.mxu0 0.0
    %457 = vmatpush1.xpose.msra.mxu0 0.0
    %458 = vmatprep.subr.mxu0 0.0
    %459 = vmatpush1.xpose.msra.mxu0 0.0
    %460 = vmatprep.subr.mxu0 0.0
    %461 = vmatpush1.xpose.msra.mxu0 0.0
    %462 = vmatprep.subr.mxu0 0.0
    %463 = vmatpush1.xpose.msra.mxu0 0.0
    %464 = vmatprep.subr.mxu0 0.0
    %465 = vmatpush1.xpose.msra.mxu0 0.0
    %466 = vmatprep.subr.mxu0 0.0
    %467 = vmatpush1.xpose.msra.mxu0 %v436
    %468 = vmatprep.subr.mxu0 0.0
    %469 = vmatpush1.xpose.msra.mxu0 %v434
    %470 = vmatprep.subr.mxu0 0.0
    %471 = vmatpush2.xpose.msra.mxu0 0.0
    %472 = vmatprep.subr.mxu0 0.0
    %473 = vmatpush2.xpose.msra.mxu0 0.0
    %474 = vmatprep.subr.mxu0 0.0
    %475 = vmatpush2.xpose.msra.mxu0 0.0
    %476 = vmatprep.subr.mxu0 0.0
    %477 = vmatpush2.xpose.msra.mxu0 0.0
    %478 = vmatprep.subr.mxu0 0.0
    %479 = vmatpush2.xpose.msra.mxu0 0.0
    %480 = vmatprep.subr.mxu0 0.0
    %481 = vmatpush2.xpose.msra.mxu0 0.0
    %482 = vmatprep.subr.mxu0 0.0
    %483 = vmatpush2.xpose.msra.mxu0 0.0
    %484 = vmatprep.subr.mxu0 0.0
    %485 = vmatpush2.xpose.msra.mxu0 0.0
    %486 = vmatprep.subr.mxu0 0.0
    %487 = vmatpush2.xpose.msra.mxu0 0.0
    %488 = vmatprep.subr.mxu0 0.0
    %489 = vmatpush2.xpose.msra.mxu0 0.0
    %490 = vmatprep.subr.mxu0 0.0
    %491 = vmatpush2.xpose.msra.mxu0 0.0
    %492 = vmatprep.subr.mxu0 0.0
    %493 = vmatpush2.xpose.msra.mxu0 0.0
    %494 = vmatprep.subr.mxu0 0.0
    %495 = vmatpush2.xpose.msra.mxu0 0.0
    %496 = vmatprep.subr.mxu0 0.0
    %497 = vmatpush2.xpose.msra.mxu0 0.0
    %498 = vmatprep.subr.mxu0 0.0
    %499 = vmatpush2.xpose.msra.mxu0 0.0
    %500 = vmatprep.subr.mxu0 0.0
    %501 = vmatpush2.xpose.msra.mxu0 0.0
    %502 = vmatprep.mubr.f32.mxu0 0.0
    %503 = vmatmul.mubr.f32.gmra.mxu0 %v430
    %v504 = vpop.f32.mrf.mxu0
    %v505 = vadd.f32 %v100, %v504
    %v506 = vpop.f32.mrf.mxu0
    %507 = vmatprep.mubr.f32.mxu0 0.0
    %508 = vmatmul.mubr.f32.gmra.mxu0 %v432
    %v509 = vpop.f32.mrf.mxu0
    %v510 = vadd.f32 %v101, %v509
    %v511 = vpop.f32.mrf.mxu0
    %512 = vdwg.mxu0
    %v513 = vsel %vm306, %v505, -inf
    %514 = vmax.xlane.f32.xlu0 %v513
    %v515 = vpop.xlane.xlu0 %514
    %v516 = vsel %vm306, %v510, -inf
    %517 = vmax.xlane.f32.xlu0 %v516
    %v518 = vpop.xlane.xlu0 %517
    %v519 = vsub.f32 %v505, %v515
    %v520 = vsub.f32 %v510, %v518
    %v521 = vmul.f32 %v519, 1.442695
    %v522 = vpow.pop %v521
    %v523 = vmul.f32 %v520, 1.442695
    %v524 = vpow.pop %v523
    %v525 = vsel %vm306, %v522, 0.0
    %526 = vadd.xlane.f32.xlu0 %v525
    %v527 = vpop.xlane.xlu0 %526
    %v528 = vsel %vm306, %v524, 0.0
    %529 = vadd.xlane.f32.xlu0 %v528
    %v530 = vpop.xlane.xlu0 %529
    %v531 = vrcp.pop %v527
    %v532 = vrcp.pop %v530
    %v533 = vmul.f32 %v527, %v531
    %v534 = vmul.f32 %v530, %v532
    %v535 = vsub.f32 2.0, %v533
    %v536 = vsub.f32 2.0, %v534
    %v537 = vmul.f32 %v531, %v535
    %v538 = vmul.f32 %v532, %v536
    %v539 = vmul.f32 %v522, %v537
    %v540 = vmul.f32 %v524, %v538
    %541 = vrot.lane.b32.xlu0 %v204, 56
    %v542 = vpop.permute.xlu0 %541
    %543 = vrot.lane.b32.xlu0 %v209, 56
    %v544 = vpop.permute.xlu0 %543
    %v548 = vsel %vm306, %v539, 0
    %v551 = vsel %vm306, %v540, 0
    %553 = vmatprep.subr.mxu0 0.0
    %554 = vmatpush1.msra.mxu0 0.0
    %555 = vmatprep.subr.mxu0 0.0
    %556 = vmatpush1.msra.mxu0 0.0
    %557 = vmatprep.subr.mxu0 0.0
    %558 = vmatpush1.msra.mxu0 0.0
    %559 = vmatprep.subr.mxu0 0.0
    %560 = vmatpush1.msra.mxu0 0.0
    %561 = vmatprep.subr.mxu0 0.0
    %562 = vmatpush1.msra.mxu0 0.0
    %563 = vmatprep.subr.mxu0 0.0
    %564 = vmatpush1.msra.mxu0 0.0
    %565 = vmatprep.subr.mxu0 0.0
    %566 = vmatpush1.msra.mxu0 0.0
    %567 = vmatprep.subr.mxu0 0.0
    %568 = vmatpush1.msra.mxu0 0.0
    %569 = vmatprep.subr.mxu0 0.0
    %570 = vmatpush1.msra.mxu0 0.0
    %571 = vmatprep.subr.mxu0 0.0
    %572 = vmatpush1.msra.mxu0 0.0
    %573 = vmatprep.subr.mxu0 0.0
    %574 = vmatpush1.msra.mxu0 0.0
    %575 = vmatprep.subr.mxu0 0.0
    %576 = vmatpush1.msra.mxu0 0.0
    %577 = vmatprep.subr.mxu0 0.0
    %578 = vmatpush1.msra.mxu0 0.0
    %579 = vmatprep.subr.mxu0 0.0
    %580 = vmatpush1.msra.mxu0 0.0
    %581 = vmatprep.subr.mxu0 0.0
    %582 = vmatpush1.msra.mxu0 %v544
    %583 = vmatprep.subr.mxu0 0.0
    %584 = vmatpush1.msra.mxu0 %v542
    %585 = vmatprep.subr.mxu0 0.0
    %586 = vmatpush2.msra.mxu0 0.0
    %587 = vmatprep.subr.mxu0 0.0
    %588 = vmatpush2.msra.mxu0 0.0
    %589 = vmatprep.subr.mxu0 0.0
    %590 = vmatpush2.msra.mxu0 0.0
    %591 = vmatprep.subr.mxu0 0.0
    %592 = vmatpush2.msra.mxu0 0.0
    %593 = vmatprep.subr.mxu0 0.0
    %594 = vmatpush2.msra.mxu0 0.0
    %595 = vmatprep.subr.mxu0 0.0
    %596 = vmatpush2.msra.mxu0 0.0
    %597 = vmatprep.subr.mxu0 0.0
    %598 = vmatpush2.msra.mxu0 0.0
    %599 = vmatprep.subr.mxu0 0.0
    %600 = vmatpush2.msra.mxu0 0.0
    %601 = vmatprep.subr.mxu0 0.0
    %602 = vmatpush2.msra.mxu0 0.0
    %603 = vmatprep.subr.mxu0 0.0
    %604 = vmatpush2.msra.mxu0 0.0
    %605 = vmatprep.subr.mxu0 0.0
    %606 = vmatpush2.msra.mxu0 0.0
    %607 = vmatprep.subr.mxu0 0.0
    %608 = vmatpush2.msra.mxu0 0.0
    %609 = vmatprep.subr.mxu0 0.0
    %610 = vmatpush2.msra.mxu0 0.0
    %611 = vmatprep.subr.mxu0 0.0
    %612 = vmatpush2.msra.mxu0 0.0
    %613 = vmatprep.subr.mxu0 0.0
    %614 = vmatpush2.msra.mxu0 0.0
    %615 = vmatprep.subr.mxu0 0.0
    %616 = vmatpush2.msra.mxu0 0.0
    %617 = vmatprep.mubr.f32.mxu0 0.0
    %618 = vmatmul.mubr.f32.gmra.mxu0 %v548
    %v619 = vpop.f32.mrf.mxu0
    %v620 = vadd.f32 0.0, %v619
    %v621 = vpop.f32.mrf.mxu0
    %622 = vmatprep.mubr.f32.mxu0 0.0
    %623 = vmatmul.mubr.f32.gmra.mxu0 %v551
    %v624 = vpop.f32.mrf.mxu0
    %v625 = vadd.f32 0.0, %v624
    %v626 = vpop.f32.mrf.mxu0
    %627 = vdwg.mxu0
    %628 = vrot.lane.b32.xlu0 %v212, 112
    %v629 = vpop.permute.xlu0 %628
    %630 = vrot.lane.b32.xlu0 %v213, 112
    %v631 = vpop.permute.xlu0 %630
    %632 = vrot.lane.b32.xlu0 %v204, 80
    %v633 = vpop.permute.xlu0 %632
    %634 = vrot.lane.b32.xlu0 %v209, 80
    %v635 = vpop.permute.xlu0 %634
    %v636 = vsel %vm220, %v629, 0
    %v638 = vsel %vm220, %v631, 0
    %v640 = vsel %vm220, %v633, 0
    %v642 = vsel %vm220, %v635, 0
    %644 = vmatprep.subr.mxu0 0.0
    %645 = vmatpush1.xpose.msra.mxu0 0.0
    %646 = vmatprep.subr.mxu0 0.0
    %647 = vmatpush1.xpose.msra.mxu0 0.0
    %648 = vmatprep.subr.mxu0 0.0
    %649 = vmatpush1.xpose.msra.mxu0 0.0
    %650 = vmatprep.subr.mxu0 0.0
    %651 = vmatpush1.xpose.msra.mxu0 0.0
    %652 = vmatprep.subr.mxu0 0.0
    %653 = vmatpush1.xpose.msra.mxu0 0.0
    %654 = vmatprep.subr.mxu0 0.0
    %655 = vmatpush1.xpose.msra.mxu0 0.0
    %656 = vmatprep.subr.mxu0 0.0
    %657 = vmatpush1.xpose.msra.mxu0 0.0
    %658 = vmatprep.subr.mxu0 0.0
    %659 = vmatpush1.xpose.msra.mxu0 0.0
    %660 = vmatprep.subr.mxu0 0.0
    %661 = vmatpush1.xpose.msra.mxu0 0.0
    %662 = vmatprep.subr.mxu0 0.0
    %663 = vmatpush1.xpose.msra.mxu0 0.0
    %664 = vmatprep.subr.mxu0 0.0
    %665 = vmatpush1.xpose.msra.mxu0 0.0
    %666 = vmatprep.subr.mxu0 0.0
    %667 = vmatpush1.xpose.msra.mxu0 0.0
    %668 = vmatprep.subr.mxu0 0.0
    %669 = vmatpush1.xpose.msra.mxu0 0.0
    %670 = vmatprep.subr.mxu0 0.0
    %671 = vmatpush1.xpose.msra.mxu0 0.0
    %672 = vmatprep.subr.mxu0 0.0
    %673 = vmatpush1.xpose.msra.mxu0 %v642
    %674 = vmatprep.subr.mxu0 0.0
    %675 = vmatpush1.xpose.msra.mxu0 %v640
    %676 = vmatprep.subr.mxu0 0.0
    %677 = vmatpush2.xpose.msra.mxu0 0.0
    %678 = vmatprep.subr.mxu0 0.0
    %679 = vmatpush2.xpose.msra.mxu0 0.0
    %680 = vmatprep.subr.mxu0 0.0
    %681 = vmatpush2.xpose.msra.mxu0 0.0
    %682 = vmatprep.subr.mxu0 0.0
    %683 = vmatpush2.xpose.msra.mxu0 0.0
    %684 = vmatprep.subr.mxu0 0.0
    %685 = vmatpush2.xpose.msra.mxu0 0.0
    %686 = vmatprep.subr.mxu0 0.0
    %687 = vmatpush2.xpose.msra.mxu0 0.0
    %688 = vmatprep.subr.mxu0 0.0
    %689 = vmatpush2.xpose.msra.mxu0 0.0
    %690 = vmatprep.subr.mxu0 0.0
    %691 = vmatpush2.xpose.msra.mxu0 0.0
    %692 = vmatprep.subr.mxu0 0.0
    %693 = vmatpush2.xpose.msra.mxu0 0.0
    %694 = vmatprep.subr.mxu0 0.0
    %695 = vmatpush2.xpose.msra.mxu0 0.0
    %696 = vmatprep.subr.mxu0 0.0
    %697 = vmatpush2.xpose.msra.mxu0 0.0
    %698 = vmatprep.subr.mxu0 0.0
    %699 = vmatpush2.xpose.msra.mxu0 0.0
    %700 = vmatprep.subr.mxu0 0.0
    %701 = vmatpush2.xpose.msra.mxu0 0.0
    %702 = vmatprep.subr.mxu0 0.0
    %703 = vmatpush2.xpose.msra.mxu0 0.0
    %704 = vmatprep.subr.mxu0 0.0
    %705 = vmatpush2.xpose.msra.mxu0 0.0
    %706 = vmatprep.subr.mxu0 0.0
    %707 = vmatpush2.xpose.msra.mxu0 0.0
    %708 = vmatprep.mubr.f32.mxu0 0.0
    %709 = vmatmul.mubr.f32.gmra.mxu0 %v636
    %v710 = vpop.f32.mrf.mxu0
    %v711 = vadd.f32 %v100, %v710
    %v712 = vpop.f32.mrf.mxu0
    %713 = vmatprep.mubr.f32.mxu0 0.0
    %714 = vmatmul.mubr.f32.gmra.mxu0 %v638
    %v715 = vpop.f32.mrf.mxu0
    %v716 = vadd.f32 %v101, %v715
    %v717 = vpop.f32.mrf.mxu0
    %718 = vdwg.mxu0
    %v719 = vsel %vm306, %v711, -inf
    %720 = vmax.xlane.f32.xlu0 %v719
    %v721 = vpop.xlane.xlu0 %720
    %v722 = vsel %vm306, %v716, -inf
    %723 = vmax.xlane.f32.xlu0 %v722
    %v724 = vpop.xlane.xlu0 %723
    %v725 = vsub.f32 %v711, %v721
    %v726 = vsub.f32 %v716, %v724
    %v727 = vmul.f32 %v725, 1.442695
    %v728 = vpow.pop %v727
    %v729 = vmul.f32 %v726, 1.442695
    %v730 = vpow.pop %v729
    %v731 = vsel %vm306, %v728, 0.0
    %732 = vadd.xlane.f32.xlu0 %v731
    %v733 = vpop.xlane.xlu0 %732
    %v734 = vsel %vm306, %v730, 0.0
    %735 = vadd.xlane.f32.xlu0 %v734
    %v736 = vpop.xlane.xlu0 %735
    %v737 = vrcp.pop %v733
    %v738 = vrcp.pop %v736
    %v739 = vmul.f32 %v733, %v737
    %v740 = vmul.f32 %v736, %v738
    %v741 = vsub.f32 2.0, %v739
    %v742 = vsub.f32 2.0, %v740
    %v743 = vmul.f32 %v737, %v741
    %v744 = vmul.f32 %v738, %v742
    %v745 = vmul.f32 %v728, %v743
    %v746 = vmul.f32 %v730, %v744
    %747 = vrot.lane.b32.xlu0 %v204, 48
    %v748 = vpop.permute.xlu0 %747
    %749 = vrot.lane.b32.xlu0 %v209, 48
    %v750 = vpop.permute.xlu0 %749
    %v754 = vsel %vm306, %v745, 0
    %v757 = vsel %vm306, %v746, 0
    %759 = vmatprep.subr.mxu0 0.0
    %760 = vmatpush1.msra.mxu0 0.0
    %761 = vmatprep.subr.mxu0 0.0
    %762 = vmatpush1.msra.mxu0 0.0
    %763 = vmatprep.subr.mxu0 0.0
    %764 = vmatpush1.msra.mxu0 0.0
    %765 = vmatprep.subr.mxu0 0.0
    %766 = vmatpush1.msra.mxu0 0.0
    %767 = vmatprep.subr.mxu0 0.0
    %768 = vmatpush1.msra.mxu0 0.0
    %769 = vmatprep.subr.mxu0 0.0
    %770 = vmatpush1.msra.mxu0 0.0
    %771 = vmatprep.subr.mxu0 0.0
    %772 = vmatpush1.msra.mxu0 0.0
    %773 = vmatprep.subr.mxu0 0.0
    %774 = vmatpush1.msra.mxu0 0.0
    %775 = vmatprep.subr.mxu0 0.0
    %776 = vmatpush1.msra.mxu0 0.0
    %777 = vmatprep.subr.mxu0 0.0
    %778 = vmatpush1.msra.mxu0 0.0
    %779 = vmatprep.subr.mxu0 0.0
    %780 = vmatpush1.msra.mxu0 0.0
    %781 = vmatprep.subr.mxu0 0.0
    %782 = vmatpush1.msra.mxu0 0.0
    %783 = vmatprep.subr.mxu0 0.0
    %784 = vmatpush1.msra.mxu0 0.0
    %785 = vmatprep.subr.mxu0 0.0
    %786 = vmatpush1.msra.mxu0 0.0
    %787 = vmatprep.subr.mxu0 0.0
    %788 = vmatpush1.msra.mxu0 %v750
    %789 = vmatprep.subr.mxu0 0.0
    %790 = vmatpush1.msra.mxu0 %v748
    %791 = vmatprep.subr.mxu0 0.0
    %792 = vmatpush2.msra.mxu0 0.0
    %793 = vmatprep.subr.mxu0 0.0
    %794 = vmatpush2.msra.mxu0 0.0
    %795 = vmatprep.subr.mxu0 0.0
    %796 = vmatpush2.msra.mxu0 0.0
    %797 = vmatprep.subr.mxu0 0.0
    %798 = vmatpush2.msra.mxu0 0.0
    %799 = vmatprep.subr.mxu0 0.0
    %800 = vmatpush2.msra.mxu0 0.0
    %801 = vmatprep.subr.mxu0 0.0
    %802 = vmatpush2.msra.mxu0 0.0
    %803 = vmatprep.subr.mxu0 0.0
    %804 = vmatpush2.msra.mxu0 0.0
    %805 = vmatprep.subr.mxu0 0.0
    %806 = vmatpush2.msra.mxu0 0.0
    %807 = vmatprep.subr.mxu0 0.0
    %808 = vmatpush2.msra.mxu0 0.0
    %809 = vmatprep.subr.mxu0 0.0
    %810 = vmatpush2.msra.mxu0 0.0
    %811 = vmatprep.subr.mxu0 0.0
    %812 = vmatpush2.msra.mxu0 0.0
    %813 = vmatprep.subr.mxu0 0.0
    %814 = vmatpush2.msra.mxu0 0.0
    %815 = vmatprep.subr.mxu0 0.0
    %816 = vmatpush2.msra.mxu0 0.0
    %817 = vmatprep.subr.mxu0 0.0
    %818 = vmatpush2.msra.mxu0 0.0
    %819 = vmatprep.subr.mxu0 0.0
    %820 = vmatpush2.msra.mxu0 0.0
    %821 = vmatprep.subr.mxu0 0.0
    %822 = vmatpush2.msra.mxu0 0.0
    %823 = vmatprep.mubr.f32.mxu0 0.0
    %824 = vmatmul.mubr.f32.gmra.mxu0 %v754
    %v825 = vpop.f32.mrf.mxu0
    %v826 = vadd.f32 0.0, %v825
    %v827 = vpop.f32.mrf.mxu0
    %828 = vmatprep.mubr.f32.mxu0 0.0
    %829 = vmatmul.mubr.f32.gmra.mxu0 %v757
    %v830 = vpop.f32.mrf.mxu0
    %v831 = vadd.f32 0.0, %v830
    %v832 = vpop.f32.mrf.mxu0
    %833 = vdwg.mxu0
    %834 = vrot.lane.b32.xlu0 %v212, 104
    %v835 = vpop.permute.xlu0 %834
    %836 = vrot.lane.b32.xlu0 %v213, 104
    %v837 = vpop.permute.xlu0 %836
    %838 = vrot.lane.b32.xlu0 %v204, 72
    %v839 = vpop.permute.xlu0 %838
    %840 = vrot.lane.b32.xlu0 %v209, 72
    %v841 = vpop.permute.xlu0 %840
    %v842 = vsel %vm220, %v835, 0
    %v844 = vsel %vm220, %v837, 0
    %v846 = vsel %vm220, %v839, 0
    %v848 = vsel %vm220, %v841, 0
    %850 = vmatprep.subr.mxu0 0.0
    %851 = vmatpush1.xpose.msra.mxu0 0.0
    %852 = vmatprep.subr.mxu0 0.0
    %853 = vmatpush1.xpose.msra.mxu0 0.0
    %854 = vmatprep.subr.mxu0 0.0
    %855 = vmatpush1.xpose.msra.mxu0 0.0
    %856 = vmatprep.subr.mxu0 0.0
    %857 = vmatpush1.xpose.msra.mxu0 0.0
    %858 = vmatprep.subr.mxu0 0.0
    %859 = vmatpush1.xpose.msra.mxu0 0.0
    %860 = vmatprep.subr.mxu0 0.0
    %861 = vmatpush1.xpose.msra.mxu0 0.0
    %862 = vmatprep.subr.mxu0 0.0
    %863 = vmatpush1.xpose.msra.mxu0 0.0
    %864 = vmatprep.subr.mxu0 0.0
    %865 = vmatpush1.xpose.msra.mxu0 0.0
    %866 = vmatprep.subr.mxu0 0.0
    %867 = vmatpush1.xpose.msra.mxu0 0.0
    %868 = vmatprep.subr.mxu0 0.0
    %869 = vmatpush1.xpose.msra.mxu0 0.0
    %870 = vmatprep.subr.mxu0 0.0
    %871 = vmatpush1.xpose.msra.mxu0 0.0
    %872 = vmatprep.subr.mxu0 0.0
    %873 = vmatpush1.xpose.msra.mxu0 0.0
    %874 = vmatprep.subr.mxu0 0.0
    %875 = vmatpush1.xpose.msra.mxu0 0.0
    %876 = vmatprep.subr.mxu0 0.0
    %877 = vmatpush1.xpose.msra.mxu0 0.0
    %878 = vmatprep.subr.mxu0 0.0
    %879 = vmatpush1.xpose.msra.mxu0 %v848
    %880 = vmatprep.subr.mxu0 0.0
    %881 = vmatpush1.xpose.msra.mxu0 %v846
    %882 = vmatprep.subr.mxu0 0.0
    %883 = vmatpush2.xpose.msra.mxu0 0.0
    %884 = vmatprep.subr.mxu0 0.0
    %885 = vmatpush2.xpose.msra.mxu0 0.0
    %886 = vmatprep.subr.mxu0 0.0
    %887 = vmatpush2.xpose.msra.mxu0 0.0
    %888 = vmatprep.subr.mxu0 0.0
    %889 = vmatpush2.xpose.msra.mxu0 0.0
    %890 = vmatprep.subr.mxu0 0.0
    %891 = vmatpush2.xpose.msra.mxu0 0.0
    %892 = vmatprep.subr.mxu0 0.0
    %893 = vmatpush2.xpose.msra.mxu0 0.0
    %894 = vmatprep.subr.mxu0 0.0
    %895 = vmatpush2.xpose.msra.mxu0 0.0
    %896 = vmatprep.subr.mxu0 0.0
    %897 = vmatpush2.xpose.msra.mxu0 0.0
    %898 = vmatprep.subr.mxu0 0.0
    %899 = vmatpush2.xpose.msra.mxu0 0.0
    %900 = vmatprep.subr.mxu0 0.0
    %901 = vmatpush2.xpose.msra.mxu0 0.0
    %902 = vmatprep.subr.mxu0 0.0
    %903 = vmatpush2.xpose.msra.mxu0 0.0
    %904 = vmatprep.subr.mxu0 0.0
    %905 = vmatpush2.xpose.msra.mxu0 0.0
    %906 = vmatprep.subr.mxu0 0.0
    %907 = vmatpush2.xpose.msra.mxu0 0.0
    %908 = vmatprep.subr.mxu0 0.0
    %909 = vmatpush2.xpose.msra.mxu0 0.0
    %910 = vmatprep.subr.mxu0 0.0
    %911 = vmatpush2.xpose.msra.mxu0 0.0
    %912 = vmatprep.subr.mxu0 0.0
    %913 = vmatpush2.xpose.msra.mxu0 0.0
    %914 = vmatprep.mubr.f32.mxu0 0.0
    %915 = vmatmul.mubr.f32.gmra.mxu0 %v842
    %v916 = vpop.f32.mrf.mxu0
    %v917 = vadd.f32 %v100, %v916
    %v918 = vpop.f32.mrf.mxu0
    %919 = vmatprep.mubr.f32.mxu0 0.0
    %920 = vmatmul.mubr.f32.gmra.mxu0 %v844
    %v921 = vpop.f32.mrf.mxu0
    %v922 = vadd.f32 %v101, %v921
    %v923 = vpop.f32.mrf.mxu0
    %924 = vdwg.mxu0
    %v925 = vsel %vm306, %v917, -inf
    %926 = vmax.xlane.f32.xlu0 %v925
    %v927 = vpop.xlane.xlu0 %926
    %v928 = vsel %vm306, %v922, -inf
    %929 = vmax.xlane.f32.xlu0 %v928
    %v930 = vpop.xlane.xlu0 %929
    %v931 = vsub.f32 %v917, %v927
    %v932 = vsub.f32 %v922, %v930
    %v933 = vmul.f32 %v931, 1.442695
    %v934 = vpow.pop %v933
    %v935 = vmul.f32 %v932, 1.442695
    %v936 = vpow.pop %v935
    %v937 = vsel %vm306, %v934, 0.0
    %938 = vadd.xlane.f32.xlu0 %v937
    %v939 = vpop.xlane.xlu0 %938
    %v940 = vsel %vm306, %v936, 0.0
    %941 = vadd.xlane.f32.xlu0 %v940
    %v942 = vpop.xlane.xlu0 %941
    %v943 = vrcp.pop %v939
    %v944 = vrcp.pop %v942
    %v945 = vmul.f32 %v939, %v943
    %v946 = vmul.f32 %v942, %v944
    %v947 = vsub.f32 2.0, %v945
    %v948 = vsub.f32 2.0, %v946
    %v949 = vmul.f32 %v943, %v947
    %v950 = vmul.f32 %v944, %v948
    %v951 = vmul.f32 %v934, %v949
    %v952 = vmul.f32 %v936, %v950
    %953 = vrot.lane.b32.xlu0 %v204, 40
    %v954 = vpop.permute.xlu0 %953
    %955 = vrot.lane.b32.xlu0 %v209, 40
    %v956 = vpop.permute.xlu0 %955
    %v960 = vsel %vm306, %v951, 0
    %v963 = vsel %vm306, %v952, 0
    %965 = vmatprep.subr.mxu0 0.0
    %966 = vmatpush1.msra.mxu0 0.0
    %967 = vmatprep.subr.mxu0 0.0
    %968 = vmatpush1.msra.mxu0 0.0
    %969 = vmatprep.subr.mxu0 0.0
    %970 = vmatpush1.msra.mxu0 0.0
    %971 = vmatprep.subr.mxu0 0.0
    %972 = vmatpush1.msra.mxu0 0.0
    %973 = vmatprep.subr.mxu0 0.0
    %974 = vmatpush1.msra.mxu0 0.0
    %975 = vmatprep.subr.mxu0 0.0
    %976 = vmatpush1.msra.mxu0 0.0
    %977 = vmatprep.subr.mxu0 0.0
    %978 = vmatpush1.msra.mxu0 0.0
    %979 = vmatprep.subr.mxu0 0.0
    %980 = vmatpush1.msra.mxu0 0.0
    %981 = vmatprep.subr.mxu0 0.0
    %982 = vmatpush1.msra.mxu0 0.0
    %983 = vmatprep.subr.mxu0 0.0
    %984 = vmatpush1.msra.mxu0 0.0
    %985 = vmatprep.subr.mxu0 0.0
    %986 = vmatpush1.msra.mxu0 0.0
    %987 = vmatprep.subr.mxu0 0.0
    %988 = vmatpush1.msra.mxu0 0.0
    %989 = vmatprep.subr.mxu0 0.0
    %990 = vmatpush1.msra.mxu0 0.0
    %991 = vmatprep.subr.mxu0 0.0
    %992 = vmatpush1.msra.mxu0 0.0
    %993 = vmatprep.subr.mxu0 0.0
    %994 = vmatpush1.msra.mxu0 %v956
    %995 = vmatprep.subr.mxu0 0.0
    %996 = vmatpush1.msra.mxu0 %v954
    %997 = vmatprep.subr.mxu0 0.0
    %998 = vmatpush2.msra.mxu0 0.0
    %999 = vmatprep.subr.mxu0 0.0
    %1000 = vmatpush2.msra.mxu0 0.0
    %1001 = vmatprep.subr.mxu0 0.0
    %1002 = vmatpush2.msra.mxu0 0.0
    %1003 = vmatprep.subr.mxu0 0.0
    %1004 = vmatpush2.msra.mxu0 0.0
    %1005 = vmatprep.subr.mxu0 0.0
    %1006 = vmatpush2.msra.mxu0 0.0
    %1007 = vmatprep.subr.mxu0 0.0
    %1008 = vmatpush2.msra.mxu0 0.0
    %1009 = vmatprep.subr.mxu0 0.0
    %1010 = vmatpush2.msra.mxu0 0.0
    %1011 = vmatprep.subr.mxu0 0.0
    %1012 = vmatpush2.msra.mxu0 0.0
    %1013 = vmatprep.subr.mxu0 0.0
    %1014 = vmatpush2.msra.mxu0 0.0
    %1015 = vmatprep.subr.mxu0 0.0
    %1016 = vmatpush2.msra.mxu0 0.0
    %1017 = vmatprep.subr.mxu0 0.0
    %1018 = vmatpush2.msra.mxu0 0.0
    %1019 = vmatprep.subr.mxu0 0.0
    %1020 = vmatpush2.msra.mxu0 0.0
    %1021 = vmatprep.subr.mxu0 0.0
    %1022 = vmatpush2.msra.mxu0 0.0
    %1023 = vmatprep.subr.mxu0 0.0
    %1024 = vmatpush2.msra.mxu0 0.0
    %1025 = vmatprep.subr.mxu0 0.0
    %1026 = vmatpush2.msra.mxu0 0.0
    %1027 = vmatprep.subr.mxu0 0.0
    %1028 = vmatpush2.msra.mxu0 0.0
    %1029 = vmatprep.mubr.f32.mxu0 0.0
    %1030 = vmatmul.mubr.f32.gmra.mxu0 %v960
    %v1031 = vpop.f32.mrf.mxu0
    %v1032 = vadd.f32 0.0, %v1031
    %v1033 = vpop.f32.mrf.mxu0
    %1034 = vmatprep.mubr.f32.mxu0 0.0
    %1035 = vmatmul.mubr.f32.gmra.mxu0 %v963
    %v1036 = vpop.f32.mrf.mxu0
    %v1037 = vadd.f32 0.0, %v1036
    %v1038 = vpop.f32.mrf.mxu0
    %1039 = vdwg.mxu0
    %1042 = vrot.lane.b32.xlu0 %v620, 8
    %v1043 = vpop.permute.xlu0 %1042
    %1044 = vrot.lane.b32.xlu0 %v625, 8
    %v1045 = vpop.permute.xlu0 %1044
    %1050 = vrot.lane.b32.xlu0 %v826, 16
    %v1051 = vpop.permute.xlu0 %1050
    %1052 = vrot.lane.b32.xlu0 %v831, 16
    %v1053 = vpop.permute.xlu0 %1052
    %1058 = vrot.lane.b32.xlu0 %v1032, 24
    %v1059 = vpop.permute.xlu0 %1058
    %1060 = vrot.lane.b32.xlu0 %v1037, 24
    %v1061 = vpop.permute.xlu0 %1060
    %v1064 = vsel %vm220, %v414, %v1043
    %v1065 = vsel %vm220, %v419, %v1045
    %v1066 = vsel %vm306, %v1064, %v1051
    %v1067 = vsel %vm306, %v1065, %v1053
    %vm1068 = vcmask 195584
    %v1069 = vsel %vm1068, %v1066, %v1059
    %v1070 = vsel %vm1068, %v1067, %v1061
    %v1071 = vlaneseq
    %v1072 = vshrl.u32 %v1071, 7
    %v1073 = vsub.s32 1, %v1072
    %v1074 = vrot.slane %v98, %v1073
    %v1076 = vsel %vm130, %v1069, 0
    %v1079 = vsel %vm130, %v1070, 0
    %1081 = vmatprep.subr.mxu0 0.0
    %1082 = vmatpush1.msra.mxu0 0.0
    %1083 = vmatprep.subr.mxu0 0.0
    %1084 = vmatpush1.msra.mxu0 0.0
    %1085 = vmatprep.subr.mxu0 0.0
    %1086 = vmatpush1.msra.mxu0 0.0
    %1087 = vmatprep.subr.mxu0 0.0
    %1088 = vmatpush1.msra.mxu0 0.0
    %1089 = vmatprep.subr.mxu0 0.0
    %1090 = vmatpush1.msra.mxu0 0.0
    %1091 = vmatprep.subr.mxu0 0.0
    %1092 = vmatpush1.msra.mxu0 0.0
    %1093 = vmatprep.subr.mxu0 0.0
    %1094 = vmatpush1.msra.mxu0 0.0
    %1095 = vmatprep.subr.mxu0 0.0
    %1096 = vmatpush1.msra.mxu0 0.0
    %1097 = vmatprep.subr.mxu0 0.0
    %1098 = vmatpush1.msra.mxu0 0.0
    %1099 = vmatprep.subr.mxu0 0.0
    %1100 = vmatpush1.msra.mxu0 0.0
    %1101 = vmatprep.subr.mxu0 0.0
    %1102 = vmatpush1.msra.mxu0 0.0
    %1103 = vmatprep.subr.mxu0 0.0
    %1104 = vmatpush1.msra.mxu0 0.0
    %1105 = vmatprep.subr.mxu0 0.0
    %1106 = vmatpush1.msra.mxu0 %v113
    %1107 = vmatprep.subr.mxu0 0.0
    %1108 = vmatpush1.msra.mxu0 %v112
    %1109 = vmatprep.subr.mxu0 0.0
    %1110 = vmatpush1.msra.mxu0 %v111
    %1111 = vmatprep.subr.mxu0 0.0
    %1112 = vmatpush1.msra.mxu0 %v110
    %1113 = vmatprep.subr.mxu0 0.0
    %1114 = vmatpush2.msra.mxu0 0.0
    %1115 = vmatprep.subr.mxu0 0.0
    %1116 = vmatpush2.msra.mxu0 0.0
    %1117 = vmatprep.subr.mxu0 0.0
    %1118 = vmatpush2.msra.mxu0 0.0
    %1119 = vmatprep.subr.mxu0 0.0
    %1120 = vmatpush2.msra.mxu0 0.0
    %1121 = vmatprep.subr.mxu0 0.0
    %1122 = vmatpush2.msra.mxu0 0.0
    %1123 = vmatprep.subr.mxu0 0.0
    %1124 = vmatpush2.msra.mxu0 0.0
    %1125 = vmatprep.subr.mxu0 0.0
    %1126 = vmatpush2.msra.mxu0 0.0
    %1127 = vmatprep.subr.mxu0 0.0
    %1128 = vmatpush2.msra.mxu0 0.0
    %1129 = vmatprep.subr.mxu0 0.0
    %1130 = vmatpush2.msra.mxu0 0.0
    %1131 = vmatprep.subr.mxu0 0.0
    %1132 = vmatpush2.msra.mxu0 0.0
    %1133 = vmatprep.subr.mxu0 0.0
    %1134 = vmatpush2.msra.mxu0 0.0
    %1135 = vmatprep.subr.mxu0 0.0
    %1136 = vmatpush2.msra.mxu0 0.0
    %1137 = vmatprep.subr.mxu0 0.0
    %1138 = vmatpush2.msra.mxu0 0.0
    %1139 = vmatprep.subr.mxu0 0.0
    %1140 = vmatpush2.msra.mxu0 0.0
    %1141 = vmatprep.subr.mxu0 0.0
    %1142 = vmatpush2.msra.mxu0 0.0
    %1143 = vmatprep.subr.mxu0 0.0
    %1144 = vmatpush2.msra.mxu0 0.0
    %1145 = vmatprep.mubr.f32.mxu0 0.0
    %1146 = vmatmul.mubr.f32.gmra.mxu0 %v1076
    %v1147 = vpop.f32.mrf.mxu0
    %v1148 = vadd.f32 %v1074, %v1147
    %v1149 = vpop.f32.mrf.mxu0
    %1150 = vmatprep.mubr.f32.mxu0 0.0
    %1151 = vmatmul.mubr.f32.gmra.mxu0 %v1079
    %v1152 = vpop.f32.mrf.mxu0
    %v1153 = vadd.f32 %v1074, %v1152
    %v1154 = vpop.f32.mrf.mxu0
    %1155 = vdwg.mxu0
    %v1156 = vadd.f32 %v104, %v1148
    %v1157 = vadd.f32 %v105, %v1153
    %v1158 = vsel %vm130, %v1156, 0.0
    %1159 = vadd.xlane.f32.xlu0 %v1158
    %v1160 = vpop.xlane.xlu0 %1159
    %v1161 = vsel %vm130, %v1157, 0.0
    %1162 = vadd.xlane.f32.xlu0 %v1161
    %v1163 = vpop.xlane.xlu0 %1162
    %v1164 = vrcp.pop 32.0
    %v1165 = vmul.f32 %v1160, %v1164
    %v1166 = vmul.f32 %v1163, %v1164
    %v1167 = vsub.f32 %v1156, %v1165
    %v1168 = vsub.f32 %v1157, %v1166
    %v1169 = vmul.f32 %v1167, %v1167
    %v1170 = vmul.f32 %v1168, %v1168
    %v1171 = vsel %vm130, %v1169, 0.0
    %1172 = vadd.xlane.f32.xlu0 %v1171
    %v1173 = vpop.xlane.xlu0 %1172
    %v1174 = vsel %vm130, %v1170, 0.0
    %1175 = vadd.xlane.f32.xlu0 %v1174
    %v1176 = vpop.xlane.xlu0 %1175
    %v1177 = vmul.f32 %v1173, %v1164
    %v1178 = vmul.f32 %v1176, %v1164
    %v1179 = vadd.f32 %v1177, 1e-05
    %v1180 = vadd.f32 %v1178, 1e-05
    %v1181 = vrsqrt.pop %v1179
    %v1182 = vrsqrt.pop %v1180
    %v1183 = vmul.f32 %v1167, %v1181
    %v1184 = vmul.f32 %v1168, %v1182
    %v1185 = vlaneseq
    %v1186 = vshrl.u32 %v1185, 7
    %v1187 = vsub.s32 2, %v1186
    %v1188 = vrot.slane %v98, %v1187
    %v1189 = vmul.f32 %v1183, %v1188
    %v1190 = vmul.f32 %v1184, %v1188
    %v1191 = vlaneseq
    %v1192 = vshrl.u32 %v1191, 7
    %v1193 = vsub.s32 3, %v1192
    %v1194 = vrot.slane %v98, %v1193
    %v1195 = vadd.f32 %v1189, %v1194
    %v1196 = vadd.f32 %v1190, %v1194
    %v1197 = vlaneseq
    %v1198 = vshrl.u32 %v1197, 7
    %v1199 = vsub.s32 4, %v1198
    %v1200 = vrot.slane %v98, %v1199
    %v1202 = vsel %vm130, %v1195, 0
    %v1205 = vsel %vm130, %v1196, 0
    %1207 = vmatprep.subr.mxu0 0.0
    %1208 = vmatpush1.msra.mxu0 0.0
    %1209 = vmatprep.subr.mxu0 0.0
    %1210 = vmatpush1.msra.mxu0 0.0
    %1211 = vmatprep.subr.mxu0 0.0
    %1212 = vmatpush1.msra.mxu0 0.0
    %1213 = vmatprep.subr.mxu0 0.0
    %1214 = vmatpush1.msra.mxu0 0.0
    %1215 = vmatprep.subr.mxu0 0.0
    %1216 = vmatpush1.msra.mxu0 0.0
    %1217 = vmatprep.subr.mxu0 0.0
    %1218 = vmatpush1.msra.mxu0 0.0
    %1219 = vmatprep.subr.mxu0 0.0
    %1220 = vmatpush1.msra.mxu0 0.0
    %1221 = vmatprep.subr.mxu0 0.0
    %1222 = vmatpush1.msra.mxu0 0.0
    %1223 = vmatprep.subr.mxu0 0.0
    %1224 = vmatpush1.msra.mxu0 0.0
    %1225 = vmatprep.subr.mxu0 0.0
    %1226 = vmatpush1.msra.mxu0 0.0
    %1227 = vmatprep.subr.mxu0 0.0
    %1228 = vmatpush1.msra.mxu0 0.0
    %1229 = vmatprep.subr.mxu0 0.0
    %1230 = vmatpush1.msra.mxu0 0.0
    %1231 = vmatprep.subr.mxu0 0.0
    %1232 = vmatpush1.msra.mxu0 %v117
    %1233 = vmatprep.subr.mxu0 0.0
    %1234 = vmatpush1.msra.mxu0 %v116
    %1235 = vmatprep.subr.mxu0 0.0
    %1236 = vmatpush1.msra.mxu0 %v115
    %1237 = vmatprep.subr.mxu0 0.0
    %1238 = vmatpush1.msra.mxu0 %v114
    %1239 = vmatprep.subr.mxu0 0.0
    %1240 = vmatpush2.msra.mxu0 0.0
    %1241 = vmatprep.subr.mxu0 0.0
    %1242 = vmatpush2.msra.mxu0 0.0
    %1243 = vmatprep.subr.mxu0 0.0
    %1244 = vmatpush2.msra.mxu0 0.0
    %1245 = vmatprep.subr.mxu0 0.0
    %1246 = vmatpush2.msra.mxu0 0.0
    %1247 = vmatprep.subr.mxu0 0.0
    %1248 = vmatpush2.msra.mxu0 0.0
    %1249 = vmatprep.subr.mxu0 0.0
    %1250 = vmatpush2.msra.mxu0 0.0
    %1251 = vmatprep.subr.mxu0 0.0
    %1252 = vmatpush2.msra.mxu0 0.0
    %1253 = vmatprep.subr.mxu0 0.0
    %1254 = vmatpush2.msra.mxu0 0.0
    %1255 = vmatprep.subr.mxu0 0.0
    %1256 = vmatpush2.msra.mxu0 0.0
    %1257 = vmatprep.subr.mxu0 0.0
    %1258 = vmatpush2.msra.mxu0 0.0
    %1259 = vmatprep.subr.mxu0 0.0
    %1260 = vmatpush2.msra.mxu0 0.0
    %1261 = vmatprep.subr.mxu0 0.0
    %1262 = vmatpush2.msra.mxu0 0.0
    %1263 = vmatprep.subr.mxu0 0.0
    %1264 = vmatpush2.msra.mxu0 0.0
    %1265 = vmatprep.subr.mxu0 0.0
    %1266 = vmatpush2.msra.mxu0 0.0
    %1267 = vmatprep.subr.mxu0 0.0
    %1268 = vmatpush2.msra.mxu0 0.0
    %1269 = vmatprep.subr.mxu0 0.0
    %1270 = vmatpush2.msra.mxu0 0.0
    %1271 = vmatprep.mubr.f32.mxu0 0.0
    %1272 = vmatmul.mubr.f32.gmra.mxu0 %v1202
    %v1273 = vpop.f32.mrf.mxu0
    %v1274 = vadd.f32 %v1200, %v1273
    %v1275 = vpop.f32.mrf.mxu0
    %1276 = vmatprep.mubr.f32.mxu0 0.0
    %1277 = vmatmul.mubr.f32.gmra.mxu0 %v1205
    %v1278 = vpop.f32.mrf.mxu0
    %v1279 = vadd.f32 %v1200, %v1278
    %v1280 = vpop.f32.mrf.mxu0
    %1281 = vdwg.mxu0
    %v1282 = vmax.f32 %v1274, 0.0
    %v1283 = vmax.f32 %v1279, 0.0
    %v1284 = vlaneseq
    %v1285 = vshrl.u32 %v1284, 7
    %v1286 = vsub.s32 5, %v1285
    %v1287 = vrot.slane %v98, %v1286
    %vm1288 = vcmask 523264
    %v1290 = vsel %vm1288, %v1282, 0
    %v1293 = vsel %vm1288, %v1283, 0
    %1295 = vmatprep.subr.mxu0 0.0
    %1296 = vmatpush1.msra.mxu0 0.0
    %1297 = vmatprep.subr.mxu0 0.0
    %1298 = vmatpush1.msra.mxu0 0.0
    %1299 = vmatprep.subr.mxu0 0.0
    %1300 = vmatpush1.msra.mxu0 0.0
    %1301 = vmatprep.subr.mxu0 0.0
    %1302 = vmatpush1.msra.mxu0 0.0
    %1303 = vmatprep.subr.mxu0 0.0
    %1304 = vmatpush1.msra.mxu0 0.0
    %1305 = vmatprep.subr.mxu0 0.0
    %1306 = vmatpush1.msra.mxu0 0.0
    %1307 = vmatprep.subr.mxu0 0.0
    %1308 = vmatpush1.msra.mxu0 0.0
    %1309 = vmatprep.subr.mxu0 0.0
    %1310 = vmatpush1.msra.mxu0 0.0
    %1311 = vmatprep.subr.mxu0 0.0
    %1312 = vmatpush1.msra.mxu0 %v125
    %1313 = vmatprep.subr.mxu0 0.0
    %1314 = vmatpush1.msra.mxu0 %v124
    %1315 = vmatprep.subr.mxu0 0.0
    %1316 = vmatpush1.msra.mxu0 %v123
    %1317 = vmatprep.subr.mxu0 0.0
    %1318 = vmatpush1.msra.mxu0 %v122
    %1319 = vmatprep.subr.mxu0 0.0
    %1320 = vmatpush1.msra.mxu0 %v121
    %1321 = vmatprep.subr.mxu0 0.0
    %1322 = vmatpush1.msra.mxu0 %v120
    %1323 = vmatprep.subr.mxu0 0.0
    %1324 = vmatpush1.msra.mxu0 %v119
    %1325 = vmatprep.subr.mxu0 0.0
    %1326 = vmatpush1.msra.mxu0 %v118
    %1327 = vmatprep.subr.mxu0 0.0
    %1328 = vmatpush2.msra.mxu0 0.0
    %1329 = vmatprep.subr.mxu0 0.0
    %1330 = vmatpush2.msra.mxu0 0.0
    %1331 = vmatprep.subr.mxu0 0.0
    %1332 = vmatpush2.msra.mxu0 0.0
    %1333 = vmatprep.subr.mxu0 0.0
    %1334 = vmatpush2.msra.mxu0 0.0
    %1335 = vmatprep.subr.mxu0 0.0
    %1336 = vmatpush2.msra.mxu0 0.0
    %1337 = vmatprep.subr.mxu0 0.0
    %1338 = vmatpush2.msra.mxu0 0.0
    %1339 = vmatprep.subr.mxu0 0.0
    %1340 = vmatpush2.msra.mxu0 0.0
    %1341 = vmatprep.subr.mxu0 0.0
    %1342 = vmatpush2.msra.mxu0 0.0
    %1343 = vmatprep.subr.mxu0 0.0
    %1344 = vmatpush2.msra.mxu0 0.0
    %1345 = vmatprep.subr.mxu0 0.0
    %1346 = vmatpush2.msra.mxu0 0.0
    %1347 = vmatprep.subr.mxu0 0.0
    %1348 = vmatpush2.msra.mxu0 0.0
    %1349 = vmatprep.subr.mxu0 0.0
    %1350 = vmatpush2.msra.mxu0 0.0
    %1351 = vmatprep.subr.mxu0 0.0
    %1352 = vmatpush2.msra.mxu0 0.0
    %1353 = vmatprep.subr.mxu0 0.0
    %1354 = vmatpush2.msra.mxu0 0.0
    %1355 = vmatprep.subr.mxu0 0.0
    %1356 = vmatpush2.msra.mxu0 0.0
    %1357 = vmatprep.subr.mxu0 0.0
    %1358 = vmatpush2.msra.mxu0 0.0
    %1359 = vmatprep.mubr.f32.mxu0 0.0
    %1360 = vmatmul.mubr.f32.gmra.mxu0 %v1290
    %v1361 = vpop.f32.mrf.mxu0
    %v1362 = vadd.f32 %v1287, %v1361
    %v1363 = vpop.f32.mrf.mxu0
    %1364 = vmatprep.mubr.f32.mxu0 0.0
    %1365 = vmatmul.mubr.f32.gmra.mxu0 %v1293
    %v1366 = vpop.f32.mrf.mxu0
    %v1367 = vadd.f32 %v1287, %v1366
    %v1368 = vpop.f32.mrf.mxu0
    %1369 = vdwg.mxu0
    %v1370 = vadd.f32 %v1195, %v1362
    %v1371 = vadd.f32 %v1196, %v1367
    %v1372 = vsel %vm130, %v1370, 0.0
    %1373 = vadd.xlane.f32.xlu0 %v1372
    %v1374 = vpop.xlane.xlu0 %1373
    %v1375 = vsel %vm130, %v1371, 0.0
    %1376 = vadd.xlane.f32.xlu0 %v1375
    %v1377 = vpop.xlane.xlu0 %1376
    %v1378 = vmul.f32 %v1374, %v1164
    %v1379 = vmul.f32 %v1377, %v1164
    %v1380 = vsub.f32 %v1370, %v1378
    %v1381 = vsub.f32 %v1371, %v1379
    %v1382 = vmul.f32 %v1380, %v1380
    %v1383 = vmul.f32 %v1381, %v1381
    %v1384 = vsel %vm130, %v1382, 0.0
    %1385 = vadd.xlane.f32.xlu0 %v1384
    %v1386 = vpop.xlane.xlu0 %1385
    %v1387 = vsel %vm130, %v1383, 0.0
    %1388 = vadd.xlane.f32.xlu0 %v1387
    %v1389 = vpop.xlane.xlu0 %1388
    %v1390 = vmul.f32 %v1386, %v1164
    %v1391 = vmul.f32 %v1389, %v1164
    %v1392 = vadd.f32 %v1390, 1e-05
    %v1393 = vadd.f32 %v1391, 1e-05
    %v1394 = vrsqrt.pop %v1392
    %v1395 = vrsqrt.pop %v1393
    %v1396 = vmul.f32 %v1380, %v1394
    %v1397 = vmul.f32 %v1381, %v1395
    %v1398 = vlaneseq
    %v1399 = vshrl.u32 %v1398, 7
    %v1400 = vsub.s32 6, %v1399
    %v1401 = vrot.slane %v98, %v1400
    %v1402 = vmul.f32 %v1396, %v1401
    %v1403 = vmul.f32 %v1397, %v1401
    %v1404 = vlaneseq
    %v1405 = vshrl.u32 %v1404, 7
    %v1406 = vsub.s32 7, %v1405
    %v1407 = vrot.slane %v98, %v1406
    %v1408 = vadd.f32 %v1402, %v1407
    %v1409 = vadd.f32 %v1403, %v1407
    %v1410 = vld [vmem:[%s5] sm:$0xff]
    %v1411 = vld [vmem:[%s5 + $0x8] sm:$0xff]
    %v1412 = vld [vmem:[%s5 + $0x10] sm:$0xff]
    %v1413 = vld [vmem:[%s5 + $0x18] sm:$0xff]
    %v1414 = vld [vmem:[%s6] sm:$0xff]
    %v1415 = vld [vmem:[%s6 + $0x8] sm:$0xff]
    %v1416 = vld [vmem:[%s6 + $0x10] sm:$0xff]
    %v1417 = vld [vmem:[%s6 + $0x18] sm:$0xff]
    %v1418 = vld [vmem:[#allocation5] sm:$0xff]
    %v1419 = vld [vmem:[#allocation5 + $0x8] sm:$0xff]
    %v1420 = vld [vmem:[#allocation5 + $0x10] sm:$0xff]
    %v1421 = vld [vmem:[#allocation5 + $0x18] sm:$0xff]
    %v1422 = vld [vmem:[%s8] sm:$0xff]
    %v1423 = vld [vmem:[%s8 + $0x8] sm:$0xff]
    %v1424 = vld [vmem:[%s8 + $0x10] sm:$0xff]
    %v1425 = vld [vmem:[%s8 + $0x18] sm:$0xff]
    %v1426 = vld [vmem:[%s8 + $0x20] sm:$0xff]
    %v1427 = vld [vmem:[%s8 + $0x28] sm:$0xff]
    %v1428 = vld [vmem:[%s8 + $0x30] sm:$0xff]
    %v1429 = vld [vmem:[%s8 + $0x38] sm:$0xff]
    %v1430 = vlaneseq
    %v1431 = vshrl.u32 %v1430, 7
    %v1432 = vsub.s32 0, %v1431
    %v1433 = vrot.slane %v99, %v1432
    %v1435 = vsel %vm130, %v1408, 0
    %v1438 = vsel %vm130, %v1409, 0
    %1440 = vmatprep.subr.mxu0 0.0
    %1441 = vmatpush1.msra.mxu0 0.0
    %1442 = vmatprep.subr.mxu0 0.0
    %1443 = vmatpush1.msra.mxu0 0.0
    %1444 = vmatprep.subr.mxu0 0.0
    %1445 = vmatpush1.msra.mxu0 0.0
    %1446 = vmatprep.subr.mxu0 0.0
    %1447 = vmatpush1.msra.mxu0 0.0
    %1448 = vmatprep.subr.mxu0 0.0
    %1449 = vmatpush1.msra.mxu0 0.0
    %1450 = vmatprep.subr.mxu0 0.0
    %1451 = vmatpush1.msra.mxu0 0.0
    %1452 = vmatprep.subr.mxu0 0.0
    %1453 = vmatpush1.msra.mxu0 0.0
    %1454 = vmatprep.subr.mxu0 0.0
    %1455 = vmatpush1.msra.mxu0 0.0
    %1456 = vmatprep.subr.mxu0 0.0
    %1457 = vmatpush1.msra.mxu0 0.0
    %1458 = vmatprep.subr.mxu0 0.0
    %1459 = vmatpush1.msra.mxu0 0.0
    %1460 = vmatprep.subr.mxu0 0.0
    %1461 = vmatpush1.msra.mxu0 0.0
    %1462 = vmatprep.subr.mxu0 0.0
    %1463 = vmatpush1.msra.mxu0 0.0
    %1464 = vmatprep.subr.mxu0 0.0
    %1465 = vmatpush1.msra.mxu0 %v1413
    %1466 = vmatprep.subr.mxu0 0.0
    %1467 = vmatpush1.msra.mxu0 %v1412
    %1468 = vmatprep.subr.mxu0 0.0
    %1469 = vmatpush1.msra.mxu0 %v1411
    %1470 = vmatprep.subr.mxu0 0.0
    %1471 = vmatpush1.msra.mxu0 %v1410
    %1472 = vmatprep.subr.mxu0 0.0
    %1473 = vmatpush2.msra.mxu0 0.0
    %1474 = vmatprep.subr.mxu0 0.0
    %1475 = vmatpush2.msra.mxu0 0.0
    %1476 = vmatprep.subr.mxu0 0.0
    %1477 = vmatpush2.msra.mxu0 0.0
    %1478 = vmatprep.subr.mxu0 0.0
    %1479 = vmatpush2.msra.mxu0 0.0
    %1480 = vmatprep.subr.mxu0 0.0
    %1481 = vmatpush2.msra.mxu0 0.0
    %1482 = vmatprep.subr.mxu0 0.0
    %1483 = vmatpush2.msra.mxu0 0.0
    %1484 = vmatprep.subr.mxu0 0.0
    %1485 = vmatpush2.msra.mxu0 0.0
    %1486 = vmatprep.subr.mxu0 0.0
    %1487 = vmatpush2.msra.mxu0 0.0
    %1488 = vmatprep.subr.mxu0 0.0
    %1489 = vmatpush2.msra.mxu0 0.0
    %1490 = vmatprep.subr.mxu0 0.0
    %1491 = vmatpush2.msra.mxu0 0.0
    %1492 = vmatprep.subr.mxu0 0.0
    %1493 = vmatpush2.msra.mxu0 0.0
    %1494 = vmatprep.subr.mxu0 0.0
    %1495 = vmatpush2.msra.mxu0 0.0
    %1496 = vmatprep.subr.mxu0 0.0
    %1497 = vmatpush2.msra.mxu0 0.0
    %1498 = vmatprep.subr.mxu0 0.0
    %1499 = vmatpush2.msra.mxu0 0.0
    %1500 = vmatprep.subr.mxu0 0.0
    %1501 = vmatpush2.msra.mxu0 0.0
    %1502 = vmatprep.subr.mxu0 0.0
    %1503 = vmatpush2.msra.mxu0 0.0
    %1504 = vmatprep.mubr.f32.mxu0 0.0
    %1505 = vmatmul.mubr.f32.gmra.mxu0 %v1435
    %v1506 = vpop.f32.mrf.mxu0
    %v1507 = vadd.f32 %v1433, %v1506
    %v1508 = vpop.f32.mrf.mxu0
    %1509 = vmatprep.mubr.f32.mxu0 0.0
    %1510 = vmatmul.mubr.f32.gmra.mxu0 %v1438
    %v1511 = vpop.f32.mrf.mxu0
    %v1512 = vadd.f32 %v1433, %v1511
    %v1513 = vpop.f32.mrf.mxu0
    %1514 = vdwg.mxu0
    %v1515 = vmul.f32 %v1507, 0.35355338
    %v1516 = vmul.f32 %v1512, 0.35355338
    %1519 = vrot.lane.b32.xlu0 %v1507, 96
    %v1520 = vpop.permute.xlu0 %1519
    %1521 = vrot.lane.b32.xlu0 %v1512, 96
    %v1522 = vpop.permute.xlu0 %1521
    %v1524 = vsel %vm220, %v1515, 0
    %v1527 = vsel %vm220, %v1516, 0
    %v1529 = vsel %vm220, %v1520, 0
    %v1531 = vsel %vm220, %v1522, 0
    %1533 = vmatprep.subr.mxu0 0.0
    %1534 = vmatpush1.xpose.msra.mxu0 0.0
    %1535 = vmatprep.subr.mxu0 0.0
    %1536 = vmatpush1.xpose.msra.mxu0 0.0
    %1537 = vmatprep.subr.mxu0 0.0
    %1538 = vmatpush1.xpose.msra.mxu0 0.0
    %1539 = vmatprep.subr.mxu0 0.0
    %1540 = vmatpush1.xpose.msra.mxu0 0.0
    %1541 = vmatprep.subr.mxu0 0.0
    %1542 = vmatpush1.xpose.msra.mxu0 0.0
    %1543 = vmatprep.subr.mxu0 0.0
    %1544 = vmatpush1.xpose.msra.mxu0 0.0
    %1545 = vmatprep.subr.mxu0 0.0
    %1546 = vmatpush1.xpose.msra.mxu0 0.0
    %1547 = vmatprep.subr.mxu0 0.0
    %1548 = vmatpush1.xpose.msra.mxu0 0.0
    %1549 = vmatprep.subr.mxu0 0.0
    %1550 = vmatpush1.xpose.msra.mxu0 0.0
    %1551 = vmatprep.subr.mxu0 0.0
    %1552 = vmatpush1.xpose.msra.mxu0 0.0
    %1553 = vmatprep.subr.mxu0 0.0
    %1554 = vmatpush1.xpose.msra.mxu0 0.0
    %1555 = vmatprep.subr.mxu0 0.0
    %1556 = vmatpush1.xpose.msra.mxu0 0.0
    %1557 = vmatprep.subr.mxu0 0.0
    %1558 = vmatpush1.xpose.msra.mxu0 0.0
    %1559 = vmatprep.subr.mxu0 0.0
    %1560 = vmatpush1.xpose.msra.mxu0 0.0
    %1561 = vmatprep.subr.mxu0 0.0
    %1562 = vmatpush1.xpose.msra.mxu0 %v1531
    %1563 = vmatprep.subr.mxu0 0.0
    %1564 = vmatpush1.xpose.msra.mxu0 %v1529
    %1565 = vmatprep.subr.mxu0 0.0
    %1566 = vmatpush2.xpose.msra.mxu0 0.0
    %1567 = vmatprep.subr.mxu0 0.0
    %1568 = vmatpush2.xpose.msra.mxu0 0.0
    %1569 = vmatprep.subr.mxu0 0.0
    %1570 = vmatpush2.xpose.msra.mxu0 0.0
    %1571 = vmatprep.subr.mxu0 0.0
    %1572 = vmatpush2.xpose.msra.mxu0 0.0
    %1573 = vmatprep.subr.mxu0 0.0
    %1574 = vmatpush2.xpose.msra.mxu0 0.0
    %1575 = vmatprep.subr.mxu0 0.0
    %1576 = vmatpush2.xpose.msra.mxu0 0.0
    %1577 = vmatprep.subr.mxu0 0.0
    %1578 = vmatpush2.xpose.msra.mxu0 0.0
    %1579 = vmatprep.subr.mxu0 0.0
    %1580 = vmatpush2.xpose.msra.mxu0 0.0
    %1581 = vmatprep.subr.mxu0 0.0
    %1582 = vmatpush2.xpose.msra.mxu0 0.0
    %1583 = vmatprep.subr.mxu0 0.0
    %1584 = vmatpush2.xpose.msra.mxu0 0.0
    %1585 = vmatprep.subr.mxu0 0.0
    %1586 = vmatpush2.xpose.msra.mxu0 0.0
    %1587 = vmatprep.subr.mxu0 0.0
    %1588 = vmatpush2.xpose.msra.mxu0 0.0
    %1589 = vmatprep.subr.mxu0 0.0
    %1590 = vmatpush2.xpose.msra.mxu0 0.0
    %1591 = vmatprep.subr.mxu0 0.0
    %1592 = vmatpush2.xpose.msra.mxu0 0.0
    %1593 = vmatprep.subr.mxu0 0.0
    %1594 = vmatpush2.xpose.msra.mxu0 0.0
    %1595 = vmatprep.subr.mxu0 0.0
    %1596 = vmatpush2.xpose.msra.mxu0 0.0
    %1597 = vmatprep.mubr.f32.mxu0 0.0
    %1598 = vmatmul.mubr.f32.gmra.mxu0 %v1524
    %v1599 = vpop.f32.mrf.mxu0
    %v1600 = vadd.f32 %v100, %v1599
    %v1601 = vpop.f32.mrf.mxu0
    %1602 = vmatprep.mubr.f32.mxu0 0.0
    %1603 = vmatmul.mubr.f32.gmra.mxu0 %v1527
    %v1604 = vpop.f32.mrf.mxu0
    %v1605 = vadd.f32 %v101, %v1604
    %v1606 = vpop.f32.mrf.mxu0
    %1607 = vdwg.mxu0
    %v1608 = vsel %vm306, %v1600, -inf
    %1609 = vmax.xlane.f32.xlu0 %v1608
    %v1610 = vpop.xlane.xlu0 %1609
    %v1611 = vsel %vm306, %v1605, -inf
    %1612 = vmax.xlane.f32.xlu0 %v1611
    %v1613 = vpop.xlane.xlu0 %1612
    %v1614 = vsub.f32 %v1600, %v1610
    %v1615 = vsub.f32 %v1605, %v1613
    %v1616 = vmul.f32 %v1614, 1.442695
    %v1617 = vpow.pop %v1616
    %v1618 = vmul.f32 %v1615, 1.442695
    %v1619 = vpow.pop %v1618
    %v1620 = vsel %vm306, %v1617, 0.0
    %1621 = vadd.xlane.f32.xlu0 %v1620
    %v1622 = vpop.xlane.xlu0 %1621
    %v1623 = vsel %vm306, %v1619, 0.0
    %1624 = vadd.xlane.f32.xlu0 %v1623
    %v1625 = vpop.xlane.xlu0 %1624
    %v1626 = vrcp.pop %v1622
    %v1627 = vrcp.pop %v1625
    %v1628 = vmul.f32 %v1622, %v1626
    %v1629 = vmul.f32 %v1625, %v1627
    %v1630 = vsub.f32 2.0, %v1628
    %v1631 = vsub.f32 2.0, %v1629
    %v1632 = vmul.f32 %v1626, %v1630
    %v1633 = vmul.f32 %v1627, %v1631
    %v1634 = vmul.f32 %v1617, %v1632
    %v1635 = vmul.f32 %v1619, %v1633
    %1636 = vrot.lane.b32.xlu0 %v1507, 64
    %v1637 = vpop.permute.xlu0 %1636
    %1638 = vrot.lane.b32.xlu0 %v1512, 64
    %v1639 = vpop.permute.xlu0 %1638
    %v1643 = vsel %vm306, %v1634, 0
    %v1646 = vsel %vm306, %v1635, 0
    %1648 = vmatprep.subr.mxu0 0.0
    %1649 = vmatpush1.msra.mxu0 0.0
    %1650 = vmatprep.subr.mxu0 0.0
    %1651 = vmatpush1.msra.mxu0 0.0
    %1652 = vmatprep.subr.mxu0 0.0
    %1653 = vmatpush1.msra.mxu0 0.0
    %1654 = vmatprep.subr.mxu0 0.0
    %1655 = vmatpush1.msra.mxu0 0.0
    %1656 = vmatprep.subr.mxu0 0.0
    %1657 = vmatpush1.msra.mxu0 0.0
    %1658 = vmatprep.subr.mxu0 0.0
    %1659 = vmatpush1.msra.mxu0 0.0
    %1660 = vmatprep.subr.mxu0 0.0
    %1661 = vmatpush1.msra.mxu0 0.0
    %1662 = vmatprep.subr.mxu0 0.0
    %1663 = vmatpush1.msra.mxu0 0.0
    %1664 = vmatprep.subr.mxu0 0.0
    %1665 = vmatpush1.msra.mxu0 0.0
    %1666 = vmatprep.subr.mxu0 0.0
    %1667 = vmatpush1.msra.mxu0 0.0
    %1668 = vmatprep.subr.mxu0 0.0
    %1669 = vmatpush1.msra.mxu0 0.0
    %1670 = vmatprep.subr.mxu0 0.0
    %1671 = vmatpush1.msra.mxu0 0.0
    %1672 = vmatprep.subr.mxu0 0.0
    %1673 = vmatpush1.msra.mxu0 0.0
    %1674 = vmatprep.subr.mxu0 0.0
    %1675 = vmatpush1.msra.mxu0 0.0
    %1676 = vmatprep.subr.mxu0 0.0
    %1677 = vmatpush1.msra.mxu0 %v1639
    %1678 = vmatprep.subr.mxu0 0.0
    %1679 = vmatpush1.msra.mxu0 %v1637
    %1680 = vmatprep.subr.mxu0 0.0
    %1681 = vmatpush2.msra.mxu0 0.0
    %1682 = vmatprep.subr.mxu0 0.0
    %1683 = vmatpush2.msra.mxu0 0.0
    %1684 = vmatprep.subr.mxu0 0.0
    %1685 = vmatpush2.msra.mxu0 0.0
    %1686 = vmatprep.subr.mxu0 0.0
    %1687 = vmatpush2.msra.mxu0 0.0
    %1688 = vmatprep.subr.mxu0 0.0
    %1689 = vmatpush2.msra.mxu0 0.0
    %1690 = vmatprep.subr.mxu0 0.0
    %1691 = vmatpush2.msra.mxu0 0.0
    %1692 = vmatprep.subr.mxu0 0.0
    %1693 = vmatpush2.msra.mxu0 0.0
    %1694 = vmatprep.subr.mxu0 0.0
    %1695 = vmatpush2.msra.mxu0 0.0
    %1696 = vmatprep.subr.mxu0 0.0
    %1697 = vmatpush2.msra.mxu0 0.0
    %1698 = vmatprep.subr.mxu0 0.0
    %1699 = vmatpush2.msra.mxu0 0.0
    %1700 = vmatprep.subr.mxu0 0.0
    %1701 = vmatpush2.msra.mxu0 0.0
    %1702 = vmatprep.subr.mxu0 0.0
    %1703 = vmatpush2.msra.mxu0 0.0
    %1704 = vmatprep.subr.mxu0 0.0
    %1705 = vmatpush2.msra.mxu0 0.0
    %1706 = vmatprep.subr.mxu0 0.0
    %1707 = vmatpush2.msra.mxu0 0.0
    %1708 = vmatprep.subr.mxu0 0.0
    %1709 = vmatpush2.msra.mxu0 0.0
    %1710 = vmatprep.subr.mxu0 0.0
    %1711 = vmatpush2.msra.mxu0 0.0
    %1712 = vmatprep.mubr.f32.mxu0 0.0
    %1713 = vmatmul.mubr.f32.gmra.mxu0 %v1643
    %v1714 = vpop.f32.mrf.mxu0
    %v1715 = vadd.f32 0.0, %v1714
    %v1716 = vpop.f32.mrf.mxu0
    %1717 = vmatprep.mubr.f32.mxu0 0.0
    %1718 = vmatmul.mubr.f32.gmra.mxu0 %v1646
    %v1719 = vpop.f32.mrf.mxu0
    %v1720 = vadd.f32 0.0, %v1719
    %v1721 = vpop.f32.mrf.mxu0
    %1722 = vdwg.mxu0
    %1723 = vrot.lane.b32.xlu0 %v1515, 120
    %v1724 = vpop.permute.xlu0 %1723
    %1725 = vrot.lane.b32.xlu0 %v1516, 120
    %v1726 = vpop.permute.xlu0 %1725
    %1727 = vrot.lane.b32.xlu0 %v1507, 88
    %v1728 = vpop.permute.xlu0 %1727
    %1729 = vrot.lane.b32.xlu0 %v1512, 88
    %v1730 = vpop.permute.xlu0 %1729
    %v1731 = vsel %vm220, %v1724, 0
    %v1733 = vsel %vm220, %v1726, 0
    %v1735 = vsel %vm220, %v1728, 0
    %v1737 = vsel %vm220, %v1730, 0
    %1739 = vmatprep.subr.mxu0 0.0
    %1740 = vmatpush1.xpose.msra.mxu0 0.0
    %1741 = vmatprep.subr.mxu0 0.0
    %1742 = vmatpush1.xpose.msra.mxu0 0.0
    %1743 = vmatprep.subr.mxu0 0.0
    %1744 = vmatpush1.xpose.msra.mxu0 0.0
    %1745 = vmatprep.subr.mxu0 0.0
    %1746 = vmatpush1.xpose.msra.mxu0 0.0
    %1747 = vmatprep.subr.mxu0 0.0
    %1748 = vmatpush1.xpose.msra.mxu0 0.0
    %1749 = vmatprep.subr.mxu0 0.0
    %1750 = vmatpush1.xpose.msra.mxu0 0.0
    %1751 = vmatprep.subr.mxu0 0.0
    %1752 = vmatpush1.xpose.msra.mxu0 0.0
    %1753 = vmatprep.subr.mxu0 0.0
    %1754 = vmatpush1.xpose.msra.mxu0 0.0
    %1755 = vmatprep.subr.mxu0 0.0
    %1756 = vmatpush1.xpose.msra.mxu0 0.0
    %1757 = vmatprep.subr.mxu0 0.0
    %1758 = vmatpush1.xpose.msra.mxu0 0.0
    %1759 = vmatprep.subr.mxu0 0.0
    %1760 = vmatpush1.xpose.msra.mxu0 0.0
    %1761 = vmatprep.subr.mxu0 0.0
    %1762 = vmatpush1.xpose.msra.mxu0 0.0
    %1763 = vmatprep.subr.mxu0 0.0
    %1764 = vmatpush1.xpose.msra.mxu0 0.0
    %1765 = vmatprep.subr.mxu0 0.0
    %1766 = vmatpush1.xpose.msra.mxu0 0.0
    %1767 = vmatprep.subr.mxu0 0.0
    %1768 = vmatpush1.xpose.msra.mxu0 %v1737
    %1769 = vmatprep.subr.mxu0 0.0
    %1770 = vmatpush1.xpose.msra.mxu0 %v1735
    %1771 = vmatprep.subr.mxu0 0.0
    %1772 = vmatpush2.xpose.msra.mxu0 0.0
    %1773 = vmatprep.subr.mxu0 0.0
    %1774 = vmatpush2.xpose.msra.mxu0 0.0
    %1775 = vmatprep.subr.mxu0 0.0
    %1776 = vmatpush2.xpose.msra.mxu0 0.0
    %1777 = vmatprep.subr.mxu0 0.0
    %1778 = vmatpush2.xpose.msra.mxu0 0.0
    %1779 = vmatprep.subr.mxu0 0.0
    %1780 = vmatpush2.xpose.msra.mxu0 0.0
    %1781 = vmatprep.subr.mxu0 0.0
    %1782 = vmatpush2.xpose.msra.mxu0 0.0
    %1783 = vmatprep.subr.mxu0 0.0
    %1784 = vmatpush2.xpose.msra.mxu0 0.0
    %1785 = vmatprep.subr.mxu0 0.0
    %1786 = vmatpush2.xpose.msra.mxu0 0.0
    %1787 = vmatprep.subr.mxu0 0.0
    %1788 = vmatpush2.xpose.msra.mxu0 0.0
    %1789 = vmatprep.subr.mxu0 0.0
    %1790 = vmatpush2.xpose.msra.mxu0 0.0
    %1791 = vmatprep.subr.mxu0 0.0
    %1792 = vmatpush2.xpose.msra.mxu0 0.0
    %1793 = vmatprep.subr.mxu0 0.0
    %1794 = vmatpush2.xpose.msra.mxu0 0.0
    %1795 = vmatprep.subr.mxu0 0.0
    %1796 = vmatpush2.xpose.msra.mxu0 0.0
    %1797 = vmatprep.subr.mxu0 0.0
    %1798 = vmatpush2.xpose.msra.mxu0 0.0
    %1799 = vmatprep.subr.mxu0 0.0
    %1800 = vmatpush2.xpose.msra.mxu0 0.0
    %1801 = vmatprep.subr.mxu0 0.0
    %1802 = vmatpush2.xpose.msra.mxu0 0.0
    %1803 = vmatprep.mubr.f32.mxu0 0.0
    %1804 = vmatmul.mubr.f32.gmra.mxu0 %v1731
    %v1805 = vpop.f32.mrf.mxu0
    %v1806 = vadd.f32 %v100, %v1805
    %v1807 = vpop.f32.mrf.mxu0
    %1808 = vmatprep.mubr.f32.mxu0 0.0
    %1809 = vmatmul.mubr.f32.gmra.mxu0 %v1733
    %v1810 = vpop.f32.mrf.mxu0
    %v1811 = vadd.f32 %v101, %v1810
    %v1812 = vpop.f32.mrf.mxu0
    %1813 = vdwg.mxu0
    %v1814 = vsel %vm306, %v1806, -inf
    %1815 = vmax.xlane.f32.xlu0 %v1814
    %v1816 = vpop.xlane.xlu0 %1815
    %v1817 = vsel %vm306, %v1811, -inf
    %1818 = vmax.xlane.f32.xlu0 %v1817
    %v1819 = vpop.xlane.xlu0 %1818
    %v1820 = vsub.f32 %v1806, %v1816
    %v1821 = vsub.f32 %v1811, %v1819
    %v1822 = vmul.f32 %v1820, 1.442695
    %v1823 = vpow.pop %v1822
    %v1824 = vmul.f32 %v1821, 1.442695
    %v1825 = vpow.pop %v1824
    %v1826 = vsel %vm306, %v1823, 0.0
    %1827 = vadd.xlane.f32.xlu0 %v1826
    %v1828 = vpop.xlane.xlu0 %1827
    %v1829 = vsel %vm306, %v1825, 0.0
    %1830 = vadd.xlane.f32.xlu0 %v1829
    %v1831 = vpop.xlane.xlu0 %1830
    %v1832 = vrcp.pop %v1828
    %v1833 = vrcp.pop %v1831
    %v1834 = vmul.f32 %v1828, %v1832
    %v1835 = vmul.f32 %v1831, %v1833
    %v1836 = vsub.f32 2.0, %v1834
    %v1837 = vsub.f32 2.0, %v1835
    %v1838 = vmul.f32 %v1832, %v1836
    %v1839 = vmul.f32 %v1833, %v1837
    %v1840 = vmul.f32 %v1823, %v1838
    %v1841 = vmul.f32 %v1825, %v1839
    %1842 = vrot.lane.b32.xlu0 %v1507, 56
    %v1843 = vpop.permute.xlu0 %1842
    %1844 = vrot.lane.b32.xlu0 %v1512, 56
    %v1845 = vpop.permute.xlu0 %1844
    %v1849 = vsel %vm306, %v1840, 0
    %v1852 = vsel %vm306, %v1841, 0
    %1854 = vmatprep.subr.mxu0 0.0
    %1855 = vmatpush1.msra.mxu0 0.0
    %1856 = vmatprep.subr.mxu0 0.0
    %1857 = vmatpush1.msra.mxu0 0.0
    %1858 = vmatprep.subr.mxu0 0.0
    %1859 = vmatpush1.msra.mxu0 0.0
    %1860 = vmatprep.subr.mxu0 0.0
    %1861 = vmatpush1.msra.mxu0 0.0
    %1862 = vmatprep.subr.mxu0 0.0
    %1863 = vmatpush1.msra.mxu0 0.0
    %1864 = vmatprep.subr.mxu0 0.0
    %1865 = vmatpush1.msra.mxu0 0.0
    %1866 = vmatprep.subr.mxu0 0.0
    %1867 = vmatpush1.msra.mxu0 0.0
    %1868 = vmatprep.subr.mxu0 0.0
    %1869 = vmatpush1.msra.mxu0 0.0
    %1870 = vmatprep.subr.mxu0 0.0
    %1871 = vmatpush1.msra.mxu0 0.0
    %1872 = vmatprep.subr.mxu0 0.0
    %1873 = vmatpush1.msra.mxu0 0.0
    %1874 = vmatprep.subr.mxu0 0.0
    %1875 = vmatpush1.msra.mxu0 0.0
    %1876 = vmatprep.subr.mxu0 0.0
    %1877 = vmatpush1.msra.mxu0 0.0
    %1878 = vmatprep.subr.mxu0 0.0
    %1879 = vmatpush1.msra.mxu0 0.0
    %1880 = vmatprep.subr.mxu0 0.0
    %1881 = vmatpush1.msra.mxu0 0.0
    %1882 = vmatprep.subr.mxu0 0.0
    %1883 = vmatpush1.msra.mxu0 %v1845
    %1884 = vmatprep.subr.mxu0 0.0
    %1885 = vmatpush1.msra.mxu0 %v1843
    %1886 = vmatprep.subr.mxu0 0.0
    %1887 = vmatpush2.msra.mxu0 0.0
    %1888 = vmatprep.subr.mxu0 0.0
    %1889 = vmatpush2.msra.mxu0 0.0
    %1890 = vmatprep.subr.mxu0 0.0
    %1891 = vmatpush2.msra.mxu0 0.0
    %1892 = vmatprep.subr.mxu0 0.0
    %1893 = vmatpush2.msra.mxu0 0.0
    %1894 = vmatprep.subr.mxu0 0.0
    %1895 = vmatpush2.msra.mxu0 0.0
    %1896 = vmatprep.subr.mxu0 0.0
    %1897 = vmatpush2.msra.mxu0 0.0
    %1898 = vmatprep.subr.mxu0 0.0
    %1899 = vmatpush2.msra.mxu0 0.0
    %1900 = vmatprep.subr.mxu0 0.0
    %1901 = vmatpush2.msra.mxu0 0.0
    %1902 = vmatprep.subr.mxu0 0.0
    %1903 = vmatpush2.msra.mxu0 0.0
    %1904 = vmatprep.subr.mxu0 0.0
    %1905 = vmatpush2.msra.mxu0 0.0
    %1906 = vmatprep.subr.mxu0 0.0
    %1907 = vmatpush2.msra.mxu0 0.0
    %1908 = vmatprep.subr.mxu0 0.0
    %1909 = vmatpush2.msra.mxu0 0.0
    %1910 = vmatprep.subr.mxu0 0.0
    %1911 = vmatpush2.msra.mxu0 0.0
    %1912 = vmatprep.subr.mxu0 0.0
    %1913 = vmatpush2.msra.mxu0 0.0
    %1914 = vmatprep.subr.mxu0 0.0
    %1915 = vmatpush2.msra.mxu0 0.0
    %1916 = vmatprep.subr.mxu0 0.0
    %1917 = vmatpush2.msra.mxu0 0.0
    %1918 = vmatprep.mubr.f32.mxu0 0.0
    %1919 = vmatmul.mubr.f32.gmra.mxu0 %v1849
    %v1920 = vpop.f32.mrf.mxu0
    %v1921 = vadd.f32 0.0, %v1920
    %v1922 = vpop.f32.mrf.mxu0
    %1923 = vmatprep.mubr.f32.mxu0 0.0
    %1924 = vmatmul.mubr.f32.gmra.mxu0 %v1852
    %v1925 = vpop.f32.mrf.mxu0
    %v1926 = vadd.f32 0.0, %v1925
    %v1927 = vpop.f32.mrf.mxu0
    %1928 = vdwg.mxu0
    %1929 = vrot.lane.b32.xlu0 %v1515, 112
    %v1930 = vpop.permute.xlu0 %1929
    %1931 = vrot.lane.b32.xlu0 %v1516, 112
    %v1932 = vpop.permute.xlu0 %1931
    %1933 = vrot.lane.b32.xlu0 %v1507, 80
    %v1934 = vpop.permute.xlu0 %1933
    %1935 = vrot.lane.b32.xlu0 %v1512, 80
    %v1936 = vpop.permute.xlu0 %1935
    %v1937 = vsel %vm220, %v1930, 0
    %v1939 = vsel %vm220, %v1932, 0
    %v1941 = vsel %vm220, %v1934, 0
    %v1943 = vsel %vm220, %v1936, 0
    %1945 = vmatprep.subr.mxu0 0.0
    %1946 = vmatpush1.xpose.msra.mxu0 0.0
    %1947 = vmatprep.subr.mxu0 0.0
    %1948 = vmatpush1.xpose.msra.mxu0 0.0
    %1949 = vmatprep.subr.mxu0 0.0
    %1950 = vmatpush1.xpose.msra.mxu0 0.0
    %1951 = vmatprep.subr.mxu0 0.0
    %1952 = vmatpush1.xpose.msra.mxu0 0.0
    %1953 = vmatprep.subr.mxu0 0.0
    %1954 = vmatpush1.xpose.msra.mxu0 0.0
    %1955 = vmatprep.subr.mxu0 0.0
    %1956 = vmatpush1.xpose.msra.mxu0 0.0
    %1957 = vmatprep.subr.mxu0 0.0
    %1958 = vmatpush1.xpose.msra.mxu0 0.0
    %1959 = vmatprep.subr.mxu0 0.0
    %1960 = vmatpush1.xpose.msra.mxu0 0.0
    %1961 = vmatprep.subr.mxu0 0.0
    %1962 = vmatpush1.xpose.msra.mxu0 0.0
    %1963 = vmatprep.subr.mxu0 0.0
    %1964 = vmatpush1.xpose.msra.mxu0 0.0
    %1965 = vmatprep.subr.mxu0 0.0
    %1966 = vmatpush1.xpose.msra.mxu0 0.0
    %1967 = vmatprep.subr.mxu0 0.0
    %1968 = vmatpush1.xpose.msra.mxu0 0.0
    %1969 = vmatprep.subr.mxu0 0.0
    %1970 = vmatpush1.xpose.msra.mxu0 0.0
    %1971 = vmatprep.subr.mxu0 0.0
    %1972 = vmatpush1.xpose.msra.mxu0 0.0
    %1973 = vmatprep.subr.mxu0 0.0
    %1974 = vmatpush1.xpose.msra.mxu0 %v1943
    %1975 = vmatprep.subr.mxu0 0.0
    %1976 = vmatpush1.xpose.msra.mxu0 %v1941
    %1977 = vmatprep.subr.mxu0 0.0
    %1978 = vmatpush2.xpose.msra.mxu0 0.0
    %1979 = vmatprep.subr.mxu0 0.0
    %1980 = vmatpush2.xpose.msra.mxu0 0.0
    %1981 = vmatprep.subr.mxu0 0.0
    %1982 = vmatpush2.xpose.msra.mxu0 0.0
    %1983 = vmatprep.subr.mxu0 0.0
    %1984 = vmatpush2.xpose.msra.mxu0 0.0
    %1985 = vmatprep.subr.mxu0 0.0
    %1986 = vmatpush2.xpose.msra.mxu0 0.0
    %1987 = vmatprep.subr.mxu0 0.0
    %1988 = vmatpush2.xpose.msra.mxu0 0.0
    %1989 = vmatprep.subr.mxu0 0.0
    %1990 = vmatpush2.xpose.msra.mxu0 0.0
    %1991 = vmatprep.subr.mxu0 0.0
    %1992 = vmatpush2.xpose.msra.mxu0 0.0
    %1993 = vmatprep.subr.mxu0 0.0
    %1994 = vmatpush2.xpose.msra.mxu0 0.0
    %1995 = vmatprep.subr.mxu0 0.0
    %1996 = vmatpush2.xpose.msra.mxu0 0.0
    %1997 = vmatprep.subr.mxu0 0.0
    %1998 = vmatpush2.xpose.msra.mxu0 0.0
    %1999 = vmatprep.subr.mxu0 0.0
    %2000 = vmatpush2.xpose.msra.mxu0 0.0
    %2001 = vmatprep.subr.mxu0 0.0
    %2002 = vmatpush2.xpose.msra.mxu0 0.0
    %2003 = vmatprep.subr.mxu0 0.0
    %2004 = vmatpush2.xpose.msra.mxu0 0.0
    %2005 = vmatprep.subr.mxu0 0.0
    %2006 = vmatpush2.xpose.msra.mxu0 0.0
    %2007 = vmatprep.subr.mxu0 0.0
    %2008 = vmatpush2.xpose.msra.mxu0 0.0
    %2009 = vmatprep.mubr.f32.mxu0 0.0
    %2010 = vmatmul.mubr.f32.gmra.mxu0 %v1937
    %v2011 = vpop.f32.mrf.mxu0
    %v2012 = vadd.f32 %v100, %v2011
    %v2013 = vpop.f32.mrf.mxu0
    %2014 = vmatprep.mubr.f32.mxu0 0.0
    %2015 = vmatmul.mubr.f32.gmra.mxu0 %v1939
    %v2016 = vpop.f32.mrf.mxu0
    %v2017 = vadd.f32 %v101, %v2016
    %v2018 = vpop.f32.mrf.mxu0
    %2019 = vdwg.mxu0
    %v2020 = vsel %vm306, %v2012, -inf
    %2021 = vmax.xlane.f32.xlu0 %v2020
    %v2022 = vpop.xlane.xlu0 %2021
    %v2023 = vsel %vm306, %v2017, -inf
    %2024 = vmax.xlane.f32.xlu0 %v2023
    %v2025 = vpop.xlane.xlu0 %2024
    %v2026 = vsub.f32 %v2012, %v2022
    %v2027 = vsub.f32 %v2017, %v2025
    %v2028 = vmul.f32 %v2026, 1.442695
    %v2029 = vpow.pop %v2028
    %v2030 = vmul.f32 %v2027, 1.442695
    %v2031 = vpow.pop %v2030
    %v2032 = vsel %vm306, %v2029, 0.0
    %2033 = vadd.xlane.f32.xlu0 %v2032
    %v2034 = vpop.xlane.xlu0 %2033
    %v2035 = vsel %vm306, %v2031, 0.0
    %2036 = vadd.xlane.f32.xlu0 %v2035
    %v2037 = vpop.xlane.xlu0 %2036
    %v2038 = vrcp.pop %v2034
    %v2039 = vrcp.pop %v2037
    %v2040 = vmul.f32 %v2034, %v2038
    %v2041 = vmul.f32 %v2037, %v2039
    %v2042 = vsub.f32 2.0, %v2040
    %v2043 = vsub.f32 2.0, %v2041
    %v2044 = vmul.f32 %v2038, %v2042
    %v2045 = vmul.f32 %v2039, %v2043
    %v2046 = vmul.f32 %v2029, %v2044
    %v2047 = vmul.f32 %v2031, %v2045
    %2048 = vrot.lane.b32.xlu0 %v1507, 48
    %v2049 = vpop.permute.xlu0 %2048
    %2050 = vrot.lane.b32.xlu0 %v1512, 48
    %v2051 = vpop.permute.xlu0 %2050
    %v2055 = vsel %vm306, %v2046, 0
    %v2058 = vsel %vm306, %v2047, 0
    %2060 = vmatprep.subr.mxu0 0.0
    %2061 = vmatpush1.msra.mxu0 0.0
    %2062 = vmatprep.subr.mxu0 0.0
    %2063 = vmatpush1.msra.mxu0 0.0
    %2064 = vmatprep.subr.mxu0 0.0
    %2065 = vmatpush1.msra.mxu0 0.0
    %2066 = vmatprep.subr.mxu0 0.0
    %2067 = vmatpush1.msra.mxu0 0.0
    %2068 = vmatprep.subr.mxu0 0.0
    %2069 = vmatpush1.msra.mxu0 0.0
    %2070 = vmatprep.subr.mxu0 0.0
    %2071 = vmatpush1.msra.mxu0 0.0
    %2072 = vmatprep.subr.mxu0 0.0
    %2073 = vmatpush1.msra.mxu0 0.0
    %2074 = vmatprep.subr.mxu0 0.0
    %2075 = vmatpush1.msra.mxu0 0.0
    %2076 = vmatprep.subr.mxu0 0.0
    %2077 = vmatpush1.msra.mxu0 0.0
    %2078 = vmatprep.subr.mxu0 0.0
    %2079 = vmatpush1.msra.mxu0 0.0
    %2080 = vmatprep.subr.mxu0 0.0
    %2081 = vmatpush1.msra.mxu0 0.0
    %2082 = vmatprep.subr.mxu0 0.0
    %2083 = vmatpush1.msra.mxu0 0.0
    %2084 = vmatprep.subr.mxu0 0.0
    %2085 = vmatpush1.msra.mxu0 0.0
    %2086 = vmatprep.subr.mxu0 0.0
    %2087 = vmatpush1.msra.mxu0 0.0
    %2088 = vmatprep.subr.mxu0 0.0
    %2089 = vmatpush1.msra.mxu0 %v2051
    %2090 = vmatprep.subr.mxu0 0.0
    %2091 = vmatpush1.msra.mxu0 %v2049
    %2092 = vmatprep.subr.mxu0 0.0
    %2093 = vmatpush2.msra.mxu0 0.0
    %2094 = vmatprep.subr.mxu0 0.0
    %2095 = vmatpush2.msra.mxu0 0.0
    %2096 = vmatprep.subr.mxu0 0.0
    %2097 = vmatpush2.msra.mxu0 0.0
    %2098 = vmatprep.subr.mxu0 0.0
    %2099 = vmatpush2.msra.mxu0 0.0
    %2100 = vmatprep.subr.mxu0 0.0
    %2101 = vmatpush2.msra.mxu0 0.0
    %2102 = vmatprep.subr.mxu0 0.0
    %2103 = vmatpush2.msra.mxu0 0.0
    %2104 = vmatprep.subr.mxu0 0.0
    %2105 = vmatpush2.msra.mxu0 0.0
    %2106 = vmatprep.subr.mxu0 0.0
    %2107 = vmatpush2.msra.mxu0 0.0
    %2108 = vmatprep.subr.mxu0 0.0
    %2109 = vmatpush2.msra.mxu0 0.0
    %2110 = vmatprep.subr.mxu0 0.0
    %2111 = vmatpush2.msra.mxu0 0.0
    %2112 = vmatprep.subr.mxu0 0.0
    %2113 = vmatpush2.msra.mxu0 0.0
    %2114 = vmatprep.subr.mxu0 0.0
    %2115 = vmatpush2.msra.mxu0 0.0
    %2116 = vmatprep.subr.mxu0 0.0
    %2117 = vmatpush2.msra.mxu0 0.0
    %2118 = vmatprep.subr.mxu0 0.0
    %2119 = vmatpush2.msra.mxu0 0.0
    %2120 = vmatprep.subr.mxu0 0.0
    %2121 = vmatpush2.msra.mxu0 0.0
    %2122 = vmatprep.subr.mxu0 0.0
    %2123 = vmatpush2.msra.mxu0 0.0
    %2124 = vmatprep.mubr.f32.mxu0 0.0
    %2125 = vmatmul.mubr.f32.gmra.mxu0 %v2055
    %v2126 = vpop.f32.mrf.mxu0
    %v2127 = vadd.f32 0.0, %v2126
    %v2128 = vpop.f32.mrf.mxu0
    %2129 = vmatprep.mubr.f32.mxu0 0.0
    %2130 = vmatmul.mubr.f32.gmra.mxu0 %v2058
    %v2131 = vpop.f32.mrf.mxu0
    %v2132 = vadd.f32 0.0, %v2131
    %v2133 = vpop.f32.mrf.mxu0
    %2134 = vdwg.mxu0
    %2135 = vrot.lane.b32.xlu0 %v1515, 104
    %v2136 = vpop.permute.xlu0 %2135
    %2137 = vrot.lane.b32.xlu0 %v1516, 104
    %v2138 = vpop.permute.xlu0 %2137
    %2139 = vrot.lane.b32.xlu0 %v1507, 72
    %v2140 = vpop.permute.xlu0 %2139
    %2141 = vrot.lane.b32.xlu0 %v1512, 72
    %v2142 = vpop.permute.xlu0 %2141
    %v2143 = vsel %vm220, %v2136, 0
    %v2145 = vsel %vm220, %v2138, 0
    %v2147 = vsel %vm220, %v2140, 0
    %v2149 = vsel %vm220, %v2142, 0
    %2151 = vmatprep.subr.mxu0 0.0
    %2152 = vmatpush1.xpose.msra.mxu0 0.0
    %2153 = vmatprep.subr.mxu0 0.0
    %2154 = vmatpush1.xpose.msra.mxu0 0.0
    %2155 = vmatprep.subr.mxu0 0.0
    %2156 = vmatpush1.xpose.msra.mxu0 0.0
    %2157 = vmatprep.subr.mxu0 0.0
    %2158 = vmatpush1.xpose.msra.mxu0 0.0
    %2159 = vmatprep.subr.mxu0 0.0
    %2160 = vmatpush1.xpose.msra.mxu0 0.0
    %2161 = vmatprep.subr.mxu0 0.0
    %2162 = vmatpush1.xpose.msra.mxu0 0.0
    %2163 = vmatprep.subr.mxu0 0.0
    %2164 = vmatpush1.xpose.msra.mxu0 0.0
    %2165 = vmatprep.subr.mxu0 0.0
    %2166 = vmatpush1.xpose.msra.mxu0 0.0
    %2167 = vmatprep.subr.mxu0 0.0
    %2168 = vmatpush1.xpose.msra.mxu0 0.0
    %2169 = vmatprep.subr.mxu0 0.0
    %2170 = vmatpush1.xpose.msra.mxu0 0.0
    %2171 = vmatprep.subr.mxu0 0.0
    %2172 = vmatpush1.xpose.msra.mxu0 0.0
    %2173 = vmatprep.subr.mxu0 0.0
    %2174 = vmatpush1.xpose.msra.mxu0 0.0
    %2175 = vmatprep.subr.mxu0 0.0
    %2176 = vmatpush1.xpose.msra.mxu0 0.0
    %2177 = vmatprep.subr.mxu0 0.0
    %2178 = vmatpush1.xpose.msra.mxu0 0.0
    %2179 = vmatprep.subr.mxu0 0.0
    %2180 = vmatpush1.xpose.msra.mxu0 %v2149
    %2181 = vmatprep.subr.mxu0 0.0
    %2182 = vmatpush1.xpose.msra.mxu0 %v2147
    %2183 = vmatprep.subr.mxu0 0.0
    %2184 = vmatpush2.xpose.msra.mxu0 0.0
    %2185 = vmatprep.subr.mxu0 0.0
    %2186 = vmatpush2.xpose.msra.mxu0 0.0
    %2187 = vmatprep.subr.mxu0 0.0
    %2188 = vmatpush2.xpose.msra.mxu0 0.0
    %2189 = vmatprep.subr.mxu0 0.0
    %2190 = vmatpush2.xpose.msra.mxu0 0.0
    %2191 = vmatprep.subr.mxu0 0.0
    %2192 = vmatpush2.xpose.msra.mxu0 0.0
    %2193 = vmatprep.subr.mxu0 0.0
    %2194 = vmatpush2.xpose.msra.mxu0 0.0
    %2195 = vmatprep.subr.mxu0 0.0
    %2196 = vmatpush2.xpose.msra.mxu0 0.0
    %2197 = vmatprep.subr.mxu0 0.0
    %2198 = vmatpush2.xpose.msra.mxu0 0.0
    %2199 = vmatprep.subr.mxu0 0.0
    %2200 = vmatpush2.xpose.msra.mxu0 0.0
    %2201 = vmatprep.subr.mxu0 0.0
    %2202 = vmatpush2.xpose.msra.mxu0 0.0
    %2203 = vmatprep.subr.mxu0 0.0
    %2204 = vmatpush2.xpose.msra.mxu0 0.0
    %2205 = vmatprep.subr.mxu0 0.0
    %2206 = vmatpush2.xpose.msra.mxu0 0.0
    %2207 = vmatprep.subr.mxu0 0.0
    %2208 = vmatpush2.xpose.msra.mxu0 0.0
    %2209 = vmatprep.subr.mxu0 0.0
    %2210 = vmatpush2.xpose.msra.mxu0 0.0
    %2211 = vmatprep.subr.mxu0 0.0
    %2212 = vmatpush2.xpose.msra.mxu0 0.0
    %2213 = vmatprep.subr.mxu0 0.0
    %2214 = vmatpush2.xpose.msra.mxu0 0.0
    %2215 = vmatprep.mubr.f32.mxu0 0.0
    %2216 = vmatmul.mubr.f32.gmra.mxu0 %v2143
    %v2217 = vpop.f32.mrf.mxu0
    %v2218 = vadd.f32 %v100, %v2217
    %v2219 = vpop.f32.mrf.mxu0
    %2220 = vmatprep.mubr.f32.mxu0 0.0
    %2221 = vmatmul.mubr.f32.gmra.mxu0 %v2145
    %v2222 = vpop.f32.mrf.mxu0
    %v2223 = vadd.f32 %v101, %v2222
    %v2224 = vpop.f32.mrf.mxu0
    %2225 = vdwg.mxu0
    %v2226 = vsel %vm306, %v2218, -inf
    %2227 = vmax.xlane.f32.xlu0 %v2226
    %v2228 = vpop.xlane.xlu0 %2227
    %v2229 = vsel %vm306, %v2223, -inf
    %2230 = vmax.xlane.f32.xlu0 %v2229
    %v2231 = vpop.xlane.xlu0 %2230
    %v2232 = vsub.f32 %v2218, %v2228
    %v2233 = vsub.f32 %v2223, %v2231
    %v2234 = vmul.f32 %v2232, 1.442695
    %v2235 = vpow.pop %v2234
    %v2236 = vmul.f32 %v2233, 1.442695
    %v2237 = vpow.pop %v2236
    %v2238 = vsel %vm306, %v2235, 0.0
    %2239 = vadd.xlane.f32.xlu0 %v2238
    %v2240 = vpop.xlane.xlu0 %2239
    %v2241 = vsel %vm306, %v2237, 0.0
    %2242 = vadd.xlane.f32.xlu0 %v2241
    %v2243 = vpop.xlane.xlu0 %2242
    %v2244 = vrcp.pop %v2240
    %v2245 = vrcp.pop %v2243
    %v2246 = vmul.f32 %v2240, %v2244
    %v2247 = vmul.f32 %v2243, %v2245
    %v2248 = vsub.f32 2.0, %v2246
    %v2249 = vsub.f32 2.0, %v2247
    %v2250 = vmul.f32 %v2244, %v2248
    %v2251 = vmul.f32 %v2245, %v2249
    %v2252 = vmul.f32 %v2235, %v2250
    %v2253 = vmul.f32 %v2237, %v2251
    %2254 = vrot.lane.b32.xlu0 %v1507, 40
    %v2255 = vpop.permute.xlu0 %2254
    %2256 = vrot.lane.b32.xlu0 %v1512, 40
    %v2257 = vpop.permute.xlu0 %2256
    %v2261 = vsel %vm306, %v2252, 0
    %v2264 = vsel %vm306, %v2253, 0
    %2266 = vmatprep.subr.mxu0 0.0
    %2267 = vmatpush1.msra.mxu0 0.0
    %2268 = vmatprep.subr.mxu0 0.0
    %2269 = vmatpush1.msra.mxu0 0.0
    %2270 = vmatprep.subr.mxu0 0.0
    %2271 = vmatpush1.msra.mxu0 0.0
    %2272 = vmatprep.subr.mxu0 0.0
    %2273 = vmatpush1.msra.mxu0 0.0
    %2274 = vmatprep.subr.mxu0 0.0
    %2275 = vmatpush1.msra.mxu0 0.0
    %2276 = vmatprep.subr.mxu0 0.0
    %2277 = vmatpush1.msra.mxu0 0.0
    %2278 = vmatprep.subr.mxu0 0.0
    %2279 = vmatpush1.msra.mxu0 0.0
    %2280 = vmatprep.subr.mxu0 0.0
    %2281 = vmatpush1.msra.mxu0 0.0
    %2282 = vmatprep.subr.mxu0 0.0
    %2283 = vmatpush1.msra.mxu0 0.0
    %2284 = vmatprep.subr.mxu0 0.0
    %2285 = vmatpush1.msra.mxu0 0.0
    %2286 = vmatprep.subr.mxu0 0.0
    %2287 = vmatpush1.msra.mxu0 0.0
    %2288 = vmatprep.subr.mxu0 0.0
    %2289 = vmatpush1.msra.mxu0 0.0
    %2290 = vmatprep.subr.mxu0 0.0
    %2291 = vmatpush1.msra.mxu0 0.0
    %2292 = vmatprep.subr.mxu0 0.0
    %2293 = vmatpush1.msra.mxu0 0.0
    %2294 = vmatprep.subr.mxu0 0.0
    %2295 = vmatpush1.msra.mxu0 %v2257
    %2296 = vmatprep.subr.mxu0 0.0
    %2297 = vmatpush1.msra.mxu0 %v2255
    %2298 = vmatprep.subr.mxu0 0.0
    %2299 = vmatpush2.msra.mxu0 0.0
    %2300 = vmatprep.subr.mxu0 0.0
    %2301 = vmatpush2.msra.mxu0 0.0
    %2302 = vmatprep.subr.mxu0 0.0
    %2303 = vmatpush2.msra.mxu0 0.0
    %2304 = vmatprep.subr.mxu0 0.0
    %2305 = vmatpush2.msra.mxu0 0.0
    %2306 = vmatprep.subr.mxu0 0.0
    %2307 = vmatpush2.msra.mxu0 0.0
    %2308 = vmatprep.subr.mxu0 0.0
    %2309 = vmatpush2.msra.mxu0 0.0
    %2310 = vmatprep.subr.mxu0 0.0
    %2311 = vmatpush2.msra.mxu0 0.0
    %2312 = vmatprep.subr.mxu0 0.0
    %2313 = vmatpush2.msra.mxu0 0.0
    %2314 = vmatprep.subr.mxu0 0.0
    %2315 = vmatpush2.msra.mxu0 0.0
    %2316 = vmatprep.subr.mxu0 0.0
    %2317 = vmatpush2.msra.mxu0 0.0
    %2318 = vmatprep.subr.mxu0 0.0
    %2319 = vmatpush2.msra.mxu0 0.0
    %2320 = vmatprep.subr.mxu0 0.0
    %2321 = vmatpush2.msra.mxu0 0.0
    %2322 = vmatprep.subr.mxu0 0.0
    %2323 = vmatpush2.msra.mxu0 0.0
    %2324 = vmatprep.subr.mxu0 0.0
    %2325 = vmatpush2.msra.mxu0 0.0
    %2326 = vmatprep.subr.mxu0 0.0
    %2327 = vmatpush2.msra.mxu0 0.0
    %2328 = vmatprep.subr.mxu0 0.0
    %2329 = vmatpush2.msra.mxu0 0.0
    %2330 = vmatprep.mubr.f32.mxu0 0.0
    %2331 = vmatmul.mubr.f32.gmra.mxu0 %v2261
    %v2332 = vpop.f32.mrf.mxu0
    %v2333 = vadd.f32 0.0, %v2332
    %v2334 = vpop.f32.mrf.mxu0
    %2335 = vmatprep.mubr.f32.mxu0 0.0
    %2336 = vmatmul.mubr.f32.gmra.mxu0 %v2264
    %v2337 = vpop.f32.mrf.mxu0
    %v2338 = vadd.f32 0.0, %v2337
    %v2339 = vpop.f32.mrf.mxu0
    %2340 = vdwg.mxu0
    %2343 = vrot.lane.b32.xlu0 %v1921, 8
    %v2344 = vpop.permute.xlu0 %2343
    %2345 = vrot.lane.b32.xlu0 %v1926, 8
    %v2346 = vpop.permute.xlu0 %2345
    %2351 = vrot.lane.b32.xlu0 %v2127, 16
    %v2352 = vpop.permute.xlu0 %2351
    %2353 = vrot.lane.b32.xlu0 %v2132, 16
    %v2354 = vpop.permute.xlu0 %2353
    %2359 = vrot.lane.b32.xlu0 %v2333, 24
    %v2360 = vpop.permute.xlu0 %2359
    %2361 = vrot.lane.b32.xlu0 %v2338, 24
    %v2362 = vpop.permute.xlu0 %2361
    %v2365 = vsel %vm220, %v1715, %v2344
    %v2366 = vsel %vm220, %v1720, %v2346
    %v2367 = vsel %vm306, %v2365, %v2352
    %v2368 = vsel %vm306, %v2366, %v2354
    %v2369 = vsel %vm1068, %v2367, %v2360
    %v2370 = vsel %vm1068, %v2368, %v2362
    %v2371 = vlaneseq
    %v2372 = vshrl.u32 %v2371, 7
    %v2373 = vsub.s32 1, %v2372
    %v2374 = vrot.slane %v99, %v2373
    %v2376 = vsel %vm130, %v2369, 0
    %v2379 = vsel %vm130, %v2370, 0
    %2381 = vmatprep.subr.mxu0 0.0
    %2382 = vmatpush1.msra.mxu0 0.0
    %2383 = vmatprep.subr.mxu0 0.0
    %2384 = vmatpush1.msra.mxu0 0.0
    %2385 = vmatprep.subr.mxu0 0.0
    %2386 = vmatpush1.msra.mxu0 0.0
    %2387 = vmatprep.subr.mxu0 0.0
    %2388 = vmatpush1.msra.mxu0 0.0
    %2389 = vmatprep.subr.mxu0 0.0
    %2390 = vmatpush1.msra.mxu0 0.0
    %2391 = vmatprep.subr.mxu0 0.0
    %2392 = vmatpush1.msra.mxu0 0.0
    %2393 = vmatprep.subr.mxu0 0.0
    %2394 = vmatpush1.msra.mxu0 0.0
    %2395 = vmatprep.subr.mxu0 0.0
    %2396 = vmatpush1.msra.mxu0 0.0
    %2397 = vmatprep.subr.mxu0 0.0
    %2398 = vmatpush1.msra.mxu0 0.0
    %2399 = vmatprep.subr.mxu0 0.0
    %2400 = vmatpush1.msra.mxu0 0.0
    %2401 = vmatprep.subr.mxu0 0.0
    %2402 = vmatpush1.msra.mxu0 0.0
    %2403 = vmatprep.subr.mxu0 0.0
    %2404 = vmatpush1.msra.mxu0 0.0
    %2405 = vmatprep.subr.mxu0 0.0
    %2406 = vmatpush1.msra.mxu0 %v1417
    %2407 = vmatprep.subr.mxu0 0.0
    %2408 = vmatpush1.msra.mxu0 %v1416
    %2409 = vmatprep.subr.mxu0 0.0
    %2410 = vmatpush1.msra.mxu0 %v1415
    %2411 = vmatprep.subr.mxu0 0.0
    %2412 = vmatpush1.msra.mxu0 %v1414
    %2413 = vmatprep.subr.mxu0 0.0
    %2414 = vmatpush2.msra.mxu0 0.0
    %2415 = vmatprep.subr.mxu0 0.0
    %2416 = vmatpush2.msra.mxu0 0.0
    %2417 = vmatprep.subr.mxu0 0.0
    %2418 = vmatpush2.msra.mxu0 0.0
    %2419 = vmatprep.subr.mxu0 0.0
    %2420 = vmatpush2.msra.mxu0 0.0
    %2421 = vmatprep.subr.mxu0 0.0
    %2422 = vmatpush2.msra.mxu0 0.0
    %2423 = vmatprep.subr.mxu0 0.0
    %2424 = vmatpush2.msra.mxu0 0.0
    %2425 = vmatprep.subr.mxu0 0.0
    %2426 = vmatpush2.msra.mxu0 0.0
    %2427 = vmatprep.subr.mxu0 0.0
    %2428 = vmatpush2.msra.mxu0 0.0
    %2429 = vmatprep.subr.mxu0 0.0
    %2430 = vmatpush2.msra.mxu0 0.0
    %2431 = vmatprep.subr.mxu0 0.0
    %2432 = vmatpush2.msra.mxu0 0.0
    %2433 = vmatprep.subr.mxu0 0.0
    %2434 = vmatpush2.msra.mxu0 0.0
    %2435 = vmatprep.subr.mxu0 0.0
    %2436 = vmatpush2.msra.mxu0 0.0
    %2437 = vmatprep.subr.mxu0 0.0
    %2438 = vmatpush2.msra.mxu0 0.0
    %2439 = vmatprep.subr.mxu0 0.0
    %2440 = vmatpush2.msra.mxu0 0.0
    %2441 = vmatprep.subr.mxu0 0.0
    %2442 = vmatpush2.msra.mxu0 0.0
    %2443 = vmatprep.subr.mxu0 0.0
    %2444 = vmatpush2.msra.mxu0 0.0
    %2445 = vmatprep.mubr.f32.mxu0 0.0
    %2446 = vmatmul.mubr.f32.gmra.mxu0 %v2376
    %v2447 = vpop.f32.mrf.mxu0
    %v2448 = vadd.f32 %v2374, %v2447
    %v2449 = vpop.f32.mrf.mxu0
    %2450 = vmatprep.mubr.f32.mxu0 0.0
    %2451 = vmatmul.mubr.f32.gmra.mxu0 %v2379
    %v2452 = vpop.f32.mrf.mxu0
    %v2453 = vadd.f32 %v2374, %v2452
    %v2454 = vpop.f32.mrf.mxu0
    %2455 = vdwg.mxu0
    %v2456 = vadd.f32 %v1408, %v2448
    %v2457 = vadd.f32 %v1409, %v2453
    %v2458 = vsel %vm130, %v2456, 0.0
    %2459 = vadd.xlane.f32.xlu0 %v2458
    %v2460 = vpop.xlane.xlu0 %2459
    %v2461 = vsel %vm130, %v2457, 0.0
    %2462 = vadd.xlane.f32.xlu0 %v2461
    %v2463 = vpop.xlane.xlu0 %2462
    %v2464 = vmul.f32 %v2460, %v1164
    %v2465 = vmul.f32 %v2463, %v1164
    %v2466 = vsub.f32 %v2456, %v2464
    %v2467 = vsub.f32 %v2457, %v2465
    %v2468 = vmul.f32 %v2466, %v2466
    %v2469 = vmul.f32 %v2467, %v2467
    %v2470 = vsel %vm130, %v2468, 0.0
    %2471 = vadd.xlane.f32.xlu0 %v2470
    %v2472 = vpop.xlane.xlu0 %2471
    %v2473 = vsel %vm130, %v2469, 0.0
    %2474 = vadd.xlane.f32.xlu0 %v2473
    %v2475 = vpop.xlane.xlu0 %2474
    %v2476 = vmul.f32 %v2472, %v1164
    %v2477 = vmul.f32 %v2475, %v1164
    %v2478 = vadd.f32 %v2476, 1e-05
    %v2479 = vadd.f32 %v2477, 1e-05
    %v2480 = vrsqrt.pop %v2478
    %v2481 = vrsqrt.pop %v2479
    %v2482 = vmul.f32 %v2466, %v2480
    %v2483 = vmul.f32 %v2467, %v2481
    %v2484 = vlaneseq
    %v2485 = vshrl.u32 %v2484, 7
    %v2486 = vsub.s32 2, %v2485
    %v2487 = vrot.slane %v99, %v2486
    %v2488 = vmul.f32 %v2482, %v2487
    %v2489 = vmul.f32 %v2483, %v2487
    %v2490 = vlaneseq
    %v2491 = vshrl.u32 %v2490, 7
    %v2492 = vsub.s32 3, %v2491
    %v2493 = vrot.slane %v99, %v2492
    %v2494 = vadd.f32 %v2488, %v2493
    %v2495 = vadd.f32 %v2489, %v2493
    %v2496 = vlaneseq
    %v2497 = vshrl.u32 %v2496, 7
    %v2498 = vsub.s32 4, %v2497
    %v2499 = vrot.slane %v99, %v2498
    %v2501 = vsel %vm130, %v2494, 0
    %v2504 = vsel %vm130, %v2495, 0
    %2506 = vmatprep.subr.mxu0 0.0
    %2507 = vmatpush1.msra.mxu0 0.0
    %2508 = vmatprep.subr.mxu0 0.0
    %2509 = vmatpush1.msra.mxu0 0.0
    %2510 = vmatprep.subr.mxu0 0.0
    %2511 = vmatpush1.msra.mxu0 0.0
    %2512 = vmatprep.subr.mxu0 0.0
    %2513 = vmatpush1.msra.mxu0 0.0
    %2514 = vmatprep.subr.mxu0 0.0
    %2515 = vmatpush1.msra.mxu0 0.0
    %2516 = vmatprep.subr.mxu0 0.0
    %2517 = vmatpush1.msra.mxu0 0.0
    %2518 = vmatprep.subr.mxu0 0.0
    %2519 = vmatpush1.msra.mxu0 0.0
    %2520 = vmatprep.subr.mxu0 0.0
    %2521 = vmatpush1.msra.mxu0 0.0
    %2522 = vmatprep.subr.mxu0 0.0
    %2523 = vmatpush1.msra.mxu0 0.0
    %2524 = vmatprep.subr.mxu0 0.0
    %2525 = vmatpush1.msra.mxu0 0.0
    %2526 = vmatprep.subr.mxu0 0.0
    %2527 = vmatpush1.msra.mxu0 0.0
    %2528 = vmatprep.subr.mxu0 0.0
    %2529 = vmatpush1.msra.mxu0 0.0
    %2530 = vmatprep.subr.mxu0 0.0
    %2531 = vmatpush1.msra.mxu0 %v1421
    %2532 = vmatprep.subr.mxu0 0.0
    %2533 = vmatpush1.msra.mxu0 %v1420
    %2534 = vmatprep.subr.mxu0 0.0
    %2535 = vmatpush1.msra.mxu0 %v1419
    %2536 = vmatprep.subr.mxu0 0.0
    %2537 = vmatpush1.msra.mxu0 %v1418
    %2538 = vmatprep.subr.mxu0 0.0
    %2539 = vmatpush2.msra.mxu0 0.0
    %2540 = vmatprep.subr.mxu0 0.0
    %2541 = vmatpush2.msra.mxu0 0.0
    %2542 = vmatprep.subr.mxu0 0.0
    %2543 = vmatpush2.msra.mxu0 0.0
    %2544 = vmatprep.subr.mxu0 0.0
    %2545 = vmatpush2.msra.mxu0 0.0
    %2546 = vmatprep.subr.mxu0 0.0
    %2547 = vmatpush2.msra.mxu0 0.0
    %2548 = vmatprep.subr.mxu0 0.0
    %2549 = vmatpush2.msra.mxu0 0.0
    %2550 = vmatprep.subr.mxu0 0.0
    %2551 = vmatpush2.msra.mxu0 0.0
    %2552 = vmatprep.subr.mxu0 0.0
    %2553 = vmatpush2.msra.mxu0 0.0
    %2554 = vmatprep.subr.mxu0 0.0
    %2555 = vmatpush2.msra.mxu0 0.0
    %2556 = vmatprep.subr.mxu0 0.0
    %2557 = vmatpush2.msra.mxu0 0.0
    %2558 = vmatprep.subr.mxu0 0.0
    %2559 = vmatpush2.msra.mxu0 0.0
    %2560 = vmatprep.subr.mxu0 0.0
    %2561 = vmatpush2.msra.mxu0 0.0
    %2562 = vmatprep.subr.mxu0 0.0
    %2563 = vmatpush2.msra.mxu0 0.0
    %2564 = vmatprep.subr.mxu0 0.0
    %2565 = vmatpush2.msra.mxu0 0.0
    %2566 = vmatprep.subr.mxu0 0.0
    %2567 = vmatpush2.msra.mxu0 0.0
    %2568 = vmatprep.subr.mxu0 0.0
    %2569 = vmatpush2.msra.mxu0 0.0
    %2570 = vmatprep.mubr.f32.mxu0 0.0
    %2571 = vmatmul.mubr.f32.gmra.mxu0 %v2501
    %v2572 = vpop.f32.mrf.mxu0
    %v2573 = vadd.f32 %v2499, %v2572
    %v2574 = vpop.f32.mrf.mxu0
    %2575 = vmatprep.mubr.f32.mxu0 0.0
    %2576 = vmatmul.mubr.f32.gmra.mxu0 %v2504
    %v2577 = vpop.f32.mrf.mxu0
    %v2578 = vadd.f32 %v2499, %v2577
    %v2579 = vpop.f32.mrf.mxu0
    %2580 = vdwg.mxu0
    %v2581 = vmax.f32 %v2573, 0.0
    %v2582 = vmax.f32 %v2578, 0.0
    %v2583 = vlaneseq
    %v2584 = vshrl.u32 %v2583, 7
    %v2585 = vsub.s32 5, %v2584
    %v2586 = vrot.slane %v99, %v2585
    %v2588 = vsel %vm1288, %v2581, 0
    %v2591 = vsel %vm1288, %v2582, 0
    %2593 = vmatprep.subr.mxu0 0.0
    %2594 = vmatpush1.msra.mxu0 0.0
    %2595 = vmatprep.subr.mxu0 0.0
    %2596 = vmatpush1.msra.mxu0 0.0
    %2597 = vmatprep.subr.mxu0 0.0
    %2598 = vmatpush1.msra.mxu0 0.0
    %2599 = vmatprep.subr.mxu0 0.0
    %2600 = vmatpush1.msra.mxu0 0.0
    %2601 = vmatprep.subr.mxu0 0.0
    %2602 = vmatpush1.msra.mxu0 0.0
    %2603 = vmatprep.subr.mxu0 0.0
    %2604 = vmatpush1.msra.mxu0 0.0
    %2605 = vmatprep.subr.mxu0 0.0
    %2606 = vmatpush1.msra.mxu0 0.0
    %2607 = vmatprep.subr.mxu0 0.0
    %2608 = vmatpush1.msra.mxu0 0.0
    %2609 = vmatprep.subr.mxu0 0.0
    %2610 = vmatpush1.msra.mxu0 %v1429
    %2611 = vmatprep.subr.mxu0 0.0
    %2612 = vmatpush1.msra.mxu0 %v1428
    %2613 = vmatprep.subr.mxu0 0.0
    %2614 = vmatpush1.msra.mxu0 %v1427
    %2615 = vmatprep.subr.mxu0 0.0
    %2616 = vmatpush1.msra.mxu0 %v1426
    %2617 = vmatprep.subr.mxu0 0.0
    %2618 = vmatpush1.msra.mxu0 %v1425
    %2619 = vmatprep.subr.mxu0 0.0
    %2620 = vmatpush1.msra.mxu0 %v1424
    %2621 = vmatprep.subr.mxu0 0.0
    %2622 = vmatpush1.msra.mxu0 %v1423
    %2623 = vmatprep.subr.mxu0 0.0
    %2624 = vmatpush1.msra.mxu0 %v1422
    %2625 = vmatprep.subr.mxu0 0.0
    %2626 = vmatpush2.msra.mxu0 0.0
    %2627 = vmatprep.subr.mxu0 0.0
    %2628 = vmatpush2.msra.mxu0 0.0
    %2629 = vmatprep.subr.mxu0 0.0
    %2630 = vmatpush2.msra.mxu0 0.0
    %2631 = vmatprep.subr.mxu0 0.0
    %2632 = vmatpush2.msra.mxu0 0.0
    %2633 = vmatprep.subr.mxu0 0.0
    %2634 = vmatpush2.msra.mxu0 0.0
    %2635 = vmatprep.subr.mxu0 0.0
    %2636 = vmatpush2.msra.mxu0 0.0
    %2637 = vmatprep.subr.mxu0 0.0
    %2638 = vmatpush2.msra.mxu0 0.0
    %2639 = vmatprep.subr.mxu0 0.0
    %2640 = vmatpush2.msra.mxu0 0.0
    %2641 = vmatprep.subr.mxu0 0.0
    %2642 = vmatpush2.msra.mxu0 0.0
    %2643 = vmatprep.subr.mxu0 0.0
    %2644 = vmatpush2.msra.mxu0 0.0
    %2645 = vmatprep.subr.mxu0 0.0
    %2646 = vmatpush2.msra.mxu0 0.0
    %2647 = vmatprep.subr.mxu0 0.0
    %2648 = vmatpush2.msra.mxu0 0.0
    %2649 = vmatprep.subr.mxu0 0.0
    %2650 = vmatpush2.msra.mxu0 0.0
    %2651 = vmatprep.subr.mxu0 0.0
    %2652 = vmatpush2.msra.mxu0 0.0
    %2653 = vmatprep.subr.mxu0 0.0
    %2654 = vmatpush2.msra.mxu0 0.0
    %2655 = vmatprep.subr.mxu0 0.0
    %2656 = vmatpush2.msra.mxu0 0.0
    %2657 = vmatprep.mubr.f32.mxu0 0.0
    %2658 = vmatmul.mubr.f32.gmra.mxu0 %v2588
    %v2659 = vpop.f32.mrf.mxu0
    %v2660 = vadd.f32 %v2586, %v2659
    %v2661 = vpop.f32.mrf.mxu0
    %2662 = vmatprep.mubr.f32.mxu0 0.0
    %2663 = vmatmul.mubr.f32.gmra.mxu0 %v2591
    %v2664 = vpop.f32.mrf.mxu0
    %v2665 = vadd.f32 %v2586, %v2664
    %v2666 = vpop.f32.mrf.mxu0
    %2667 = vdwg.mxu0
    %v2668 = vadd.f32 %v2494, %v2660
    %v2669 = vadd.f32 %v2495, %v2665
    %v2670 = vsel %vm130, %v2668, 0.0
    %2671 = vadd.xlane.f32.xlu0 %v2670
    %v2672 = vpop.xlane.xlu0 %2671
    %v2673 = vsel %vm130, %v2669, 0.0
    %2674 = vadd.xlane.f32.xlu0 %v2673
    %v2675 = vpop.xlane.xlu0 %2674
    %v2676 = vmul.f32 %v2672, %v1164
    %v2677 = vmul.f32 %v2675, %v1164
    %v2678 = vsub.f32 %v2668, %v2676
    %v2679 = vsub.f32 %v2669, %v2677
    %v2680 = vmul.f32 %v2678, %v2678
    %v2681 = vmul.f32 %v2679, %v2679
    %v2682 = vsel %vm130, %v2680, 0.0
    %2683 = vadd.xlane.f32.xlu0 %v2682
    %v2684 = vpop.xlane.xlu0 %2683
    %v2685 = vsel %vm130, %v2681, 0.0
    %2686 = vadd.xlane.f32.xlu0 %v2685
    %v2687 = vpop.xlane.xlu0 %2686
    %v2688 = vmul.f32 %v2684, %v1164
    %v2689 = vmul.f32 %v2687, %v1164
    %v2690 = vadd.f32 %v2688, 1e-05
    %v2691 = vadd.f32 %v2689, 1e-05
    %v2692 = vrsqrt.pop %v2690
    %v2693 = vrsqrt.pop %v2691
    %v2694 = vmul.f32 %v2678, %v2692
    %v2695 = vmul.f32 %v2679, %v2693
    %v2696 = vlaneseq
    %v2697 = vshrl.u32 %v2696, 7
    %v2698 = vsub.s32 6, %v2697
    %v2699 = vrot.slane %v99, %v2698
    %v2700 = vmul.f32 %v2694, %v2699
    %v2701 = vmul.f32 %v2695, %v2699
    %v2702 = vlaneseq
    %v2703 = vshrl.u32 %v2702, 7
    %v2704 = vsub.s32 7, %v2703
    %v2705 = vrot.slane %v99, %v2704
    %v2706 = vadd.f32 %v2700, %v2705
    %v2707 = vadd.f32 %v2701, %v2705
    %v2708 = vld [vmem:[#allocation7] sm:$0xff]
    %v2709 = vld [vmem:[%s10] sm:$0xff]
    %2711 = vset.pattern.permute.xlu0 0
    %2712 = vperm.xlu0 %2711, %v2709
    %v2713 = vpop.permute.xlu0 %2712
    %v2716 = vsel %vm130, %v2708, 0
    %v2719 = vsel %vm130, %v2706, 0
    %v2722 = vsel %vm130, %v2707, 0
    %2724 = vmatprep.subr.mxu0 0.0
    %2725 = vmatpush1.xpose.msra.mxu0 0.0
    %2726 = vmatprep.subr.mxu0 0.0
    %2727 = vmatpush1.xpose.msra.mxu0 0.0
    %2728 = vmatprep.subr.mxu0 0.0
    %2729 = vmatpush1.xpose.msra.mxu0 0.0
    %2730 = vmatprep.subr.mxu0 0.0
    %2731 = vmatpush1.xpose.msra.mxu0 0.0
    %2732 = vmatprep.subr.mxu0 0.0
    %2733 = vmatpush1.xpose.msra.mxu0 0.0
    %2734 = vmatprep.subr.mxu0 0.0
    %2735 = vmatpush1.xpose.msra.mxu0 0.0
    %2736 = vmatprep.subr.mxu0 0.0
    %2737 = vmatpush1.xpose.msra.mxu0 0.0
    %2738 = vmatprep.subr.mxu0 0.0
    %2739 = vmatpush1.xpose.msra.mxu0 0.0
    %2740 = vmatprep.subr.mxu0 0.0
    %2741 = vmatpush1.xpose.msra.mxu0 0.0
    %2742 = vmatprep.subr.mxu0 0.0
    %2743 = vmatpush1.xpose.msra.mxu0 0.0
    %2744 = vmatprep.subr.mxu0 0.0
    %2745 = vmatpush1.xpose.msra.mxu0 0.0
    %2746 = vmatprep.subr.mxu0 0.0
    %2747 = vmatpush1.xpose.msra.mxu0 0.0
    %2748 = vmatprep.subr.mxu0 0.0
    %2749 = vmatpush1.xpose.msra.mxu0 0.0
    %2750 = vmatprep.subr.mxu0 0.0
    %2751 = vmatpush1.xpose.msra.mxu0 0.0
    %2752 = vmatprep.subr.mxu0 0.0
    %2753 = vmatpush1.xpose.msra.mxu0 %v2722
    %2754 = vmatprep.subr.mxu0 0.0
    %2755 = vmatpush1.xpose.msra.mxu0 %v2719
    %2756 = vmatprep.subr.mxu0 0.0
    %2757 = vmatpush2.xpose.msra.mxu0 0.0
    %2758 = vmatprep.subr.mxu0 0.0
    %2759 = vmatpush2.xpose.msra.mxu0 0.0
    %2760 = vmatprep.subr.mxu0 0.0
    %2761 = vmatpush2.xpose.msra.mxu0 0.0
    %2762 = vmatprep.subr.mxu0 0.0
    %2763 = vmatpush2.xpose.msra.mxu0 0.0
    %2764 = vmatprep.subr.mxu0 0.0
    %2765 = vmatpush2.xpose.msra.mxu0 0.0
    %2766 = vmatprep.subr.mxu0 0.0
    %2767 = vmatpush2.xpose.msra.mxu0 0.0
    %2768 = vmatprep.subr.mxu0 0.0
    %2769 = vmatpush2.xpose.msra.mxu0 0.0
    %2770 = vmatprep.subr.mxu0 0.0
    %2771 = vmatpush2.xpose.msra.mxu0 0.0
    %2772 = vmatprep.subr.mxu0 0.0
    %2773 = vmatpush2.xpose.msra.mxu0 0.0
    %2774 = vmatprep.subr.mxu0 0.0
    %2775 = vmatpush2.xpose.msra.mxu0 0.0
    %2776 = vmatprep.subr.mxu0 0.0
    %2777 = vmatpush2.xpose.msra.mxu0 0.0
    %2778 = vmatprep.subr.mxu0 0.0
    %2779 = vmatpush2.xpose.msra.mxu0 0.0
    %2780 = vmatprep.subr.mxu0 0.0
    %2781 = vmatpush2.xpose.msra.mxu0 0.0
    %2782 = vmatprep.subr.mxu0 0.0
    %2783 = vmatpush2.xpose.msra.mxu0 0.0
    %2784 = vmatprep.subr.mxu0 0.0
    %2785 = vmatpush2.xpose.msra.mxu0 0.0
    %2786 = vmatprep.subr.mxu0 0.0
    %2787 = vmatpush2.xpose.msra.mxu0 0.0
    %2788 = vmatprep.mubr.f32.mxu0 0.0
    %2789 = vmatmul.mubr.f32.gmra.mxu0 %v2716
    %v2790 = vpop.f32.mrf.mxu0
    %v2791 = vadd.f32 %v2713, %v2790
    %v2792 = vpop.f32.mrf.mxu0
    %2793 = vdwg.mxu0
    %2794 = vst.msk [vmem:[#allocation10] sm:$0xff] %vm306, %v2791
    // Predicated region
    $region70: #{tpu_custom_call.1} parent=1 // pred_check
      _
    $region71: #{tpu_custom_call.1} parent=1 // pred_check_branch
      %2796 = sbr.rel (0) target = $region73
    $region72: #{tpu_custom_call.1} parent=1 // pred_region
      %s2798 = ssub.s32 128, 128
      %2799 = vsyncadd [#allocation4], %s2798
      %s2801 = sshll.u32 [#allocation10], 4
      %s2802 = int_to_ptr.vmem [resolvable:$true] %s2801
      %2804 = dma.vmem_to_hbm [thread:$0]  %s2802, 128, %s13, [#allocation4]
    $region73: #{tpu_custom_call.1} parent=1 // pred_fallthru
      _
    // Predicated region
    $region74: #{tpu_custom_call.1} parent=1 // pred_check
      _
    $region75: #{tpu_custom_call.1} parent=1 // pred_check_branch
      %2806 = sbr.rel (0) target = $region77
    $region76: #{tpu_custom_call.1} parent=1 // pred_region
      %2807 = dma.done [#allocation4], 128
    $region77: #{tpu_custom_call.1} parent=1 // pred_fallthru
      _
    %2808 = vsyncpa [#allocation3], 1
    %2809 = vsyncpa [#allocation6], 1
    %2810 = vsyncpa [#allocation9], 1
    %2811 = vsyncpa [#allocation4], 1

</llo_original>
